<compile_context>
chip_gen: v7x
topology: tpu7x:2x2x1
jax: 0.10.0
libtpu: 0.0.40
codegen_flags: <defaults>
</compile_context>

<pallas_src>
import functools

import jax
import jax.numpy as jnp
import numpy as np
from jax import lax
from jax.experimental import pallas as pl
from jax.experimental.pallas import tpu as pltpu


# ----------------------------------------------------------------------------- kernel
def encoder_kernel(xlen_ref,                       # scalar prefetch (SMEM): (B,) int32
                   x_ref, g_ref, eps_ref,          # per-batch inputs (bf16, bf16, f32)
                   pre_w_ref, pre_b_ref,
                   cond_w_ref, cond_b_ref,         # cond_b already has in_b folded in
                   in_w_ref,
                   rs_w_ref, rs_b_ref,
                   proj_w_ref, proj_b_ref,
                   out_ref,                        # packed output (1, 3*O, T): [z; m; logs]
                   hpad_ref,                       # bf16 VMEM scratch (H, T + 2*pad_left)
                   xstack_ref,                     # bf16 VMEM scratch (K*H, T)
                   *, hidden, out_channels, kernel_size, dilation_rate, n_layers,
                   pad_left, halo, act_dtype):
    H, O, K = hidden, out_channels, kernel_size
    b = pl.program_id(0)
    T = x_ref.shape[-1]

    # sequence mask, broadcasts hoisted once (JAX does not CSE broadcast_in_dim)
    length = xlen_ref[b]
    mask = (lax.broadcasted_iota(jnp.int32, (1, T), 1) < length).astype(jnp.float32)
    mask_h = jnp.broadcast_to(mask, (H, T))
    mask_2o = jnp.broadcast_to(mask, (2 * O, T))
    mask_o = jnp.broadcast_to(mask, (O, T))

    # Only the halo-wide strips next to the center are ever read by the shifted tap slices;
    # keep just those zero. Re-done per grid step (cheap) so the scheme is megacore-safe.
    if halo > 0:
        hpad_ref[:, pad_left - halo:pad_left] = jnp.zeros((H, halo), hpad_ref.dtype)
        hpad_ref[:, pad_left + T:pad_left + T + halo] = jnp.zeros((H, halo), hpad_ref.dtype)

    # pre: Conv1d(in_channels, H, k=1)  -- bf16 operands, f32 accumulate
    h = jnp.dot(pre_w_ref[...], x_ref[0], preferred_element_type=jnp.float32) + pre_b_ref[...]
    h = h * mask_h

    # hoisted conditioning for all layers: Conv1d(gin, 2H*L, k=1) as one MXU dot
    gc_all = (jnp.dot(cond_w_ref[...], g_ref[0], preferred_element_type=jnp.float32)
              + cond_b_ref[...])

    out_acc = jnp.zeros((H, T), jnp.float32)

    for i in range(n_layers):
        d = dilation_rate ** i
        pad = ((K - 1) * d) // 2

        # write h once into the zero-bordered bf16 scratch (lane-aligned center store), then
        # scatter the K shifted taps into the stack scratch and fuse them into a single MXU dot
        # with contraction K*H.
        hpad_ref[:, pad_left:pad_left + T] = h.astype(hpad_ref.dtype)
        for j in range(K):
            off = pad_left - pad + j * d
            xstack_ref[j * H:(j + 1) * H, :] = hpad_ref[:, off:off + T]

        x_in = (jnp.dot(in_w_ref[i], xstack_ref[...], preferred_element_type=jnp.float32)
                + gc_all[2 * H * i:2 * H * (i + 1)])

        # fused_add_tanh_sigmoid_multiply (both halves on the EUP via tanh-form sigmoid);
        # bf16 on v6e/v7x, f32 on v5e.
        xa = x_in[:H].astype(act_dtype)
        xb = x_in[H:].astype(act_dtype)
        acts = jnp.tanh(xa) * (0.5 * (jnp.tanh(0.5 * xb) + 1.0))

        # res/skip conv1d(k=1)
        rs = (jnp.dot(rs_w_ref[i], acts.astype(jnp.bfloat16),
                      preferred_element_type=jnp.float32) + rs_b_ref[i])
        if i < n_layers - 1:               # last WN layer has no residual branch
            h = (h + rs[:H]) * mask_h
        out_acc = out_acc + rs[H:]

    enc_out = out_acc * mask_h

    # proj: Conv1d(H, 2*O, k=1)
    stats = (jnp.dot(proj_w_ref[...], enc_out.astype(jnp.bfloat16),
                     preferred_element_type=jnp.float32) + proj_b_ref[...])
    stats = stats * mask_2o
    m = stats[:O]
    logs = stats[O:]
    z = (m + eps_ref[0] * jnp.exp(logs)) * mask_o

    # three direct lane-dense slab stores (no concat copy)
    out_ref[0, 0:O, :] = z
    out_ref[0, O:2 * O, :] = m
    out_ref[0, 2 * O:3 * O, :] = logs


# ----------------------------------------------------------------------------- helpers
def _vmem_limit_bytes():
    try:
        cap = int(pltpu.get_tpu_info().vmem_capacity_bytes)
    except Exception:
        cap = 128 * 1024 * 1024
    # <= 48 MiB on v7x (64 MiB physical), 64 MiB on v5e/v6e (128 MiB physical)
    return int(min(64 * 1024 * 1024, (cap * 3) // 4))


def _bf16_act_supported():
    try:
        dk = jax.devices()[0].device_kind.lower()
    except Exception:
        return False
    return ("v6" in dk) or ("v7" in dk) or ("7x" in dk)


# ----------------------------------------------------------------------------- wrapper
def encoder_forward(x, x_lengths, g, eps, params, cfg):
    B, C_in, T = x.shape
    H, O, K = cfg["hidden"], cfg["out_channels"], cfg["kernel_size"]
    D, L = cfg["dilation_rate"], cfg["n_layers"]
    G = g.shape[1]

    halo = ((K - 1) * (D ** (L - 1))) // 2
    T_pad = max(128, ((T + 127) // 128) * 128)          # lane-dense time axis
    pad_left = max(128, ((halo + 127) // 128) * 128)    # aligned center store in the conv scratch

    def pad_t(a, dtype):
        return jnp.pad(a, ((0, 0), (0, 0), (0, T_pad - T))).astype(dtype)

    x_p = pad_t(x, jnp.bfloat16)
    g_p = pad_t(g, jnp.bfloat16)
    eps_p = pad_t(eps, jnp.float32)

    # host-side weight repack: bf16 matmul operands, tap axis folded into the contraction dim,
    # in_b folded into cond_b.
    wdt = jnp.bfloat16
    pre_w = params["pre_w"].astype(wdt)
    pre_b = params["pre_b"].astype(jnp.float32)
    cond_w = params["cond_w"].astype(wdt)                                      # (L*2H, G)
    cond_b = (params["cond_b"].reshape(L, 2 * H, 1)
              + params["in_b"]).reshape(L * 2 * H, 1).astype(jnp.float32)      # in_b folded
    in_w = params["in_w"].transpose(0, 2, 1, 3).reshape(L, 2 * H, K * H).astype(wdt)
    rs_w = params["rs_w"].astype(wdt)
    rs_b = params["rs_b"].astype(jnp.float32)
    proj_w = params["proj_w"].astype(wdt)
    proj_b = params["proj_b"].astype(jnp.float32)

    act_dtype = jnp.bfloat16 if _bf16_act_supported() else jnp.float32

    kern = functools.partial(encoder_kernel, hidden=H, out_channels=O, kernel_size=K,
                             dilation_rate=D, n_layers=L, pad_left=pad_left, halo=halo,
                             act_dtype=act_dtype)

    def batch_spec(c):
        return pl.BlockSpec((1, c, T_pad), lambda b, xlen: (b, 0, 0))

    def full_spec(shape):
        n = len(shape)
        return pl.BlockSpec(shape, lambda b, xlen, n=n: (0,) * n)

    in_specs = [
        batch_spec(C_in),                   # x
        batch_spec(G),                      # g
        batch_spec(O),                      # eps
        full_spec(pre_w.shape), full_spec(pre_b.shape),
        full_spec(cond_w.shape), full_spec(cond_b.shape),
        full_spec(in_w.shape),
        full_spec(rs_w.shape), full_spec(rs_b.shape),
        full_spec(proj_w.shape), full_spec(proj_b.shape),
    ]
    out_spec = pl.BlockSpec((1, 3 * O, T_pad), lambda b, xlen: (b, 0, 0))
    out_shape = jax.ShapeDtypeStruct((B, 3 * O, T_pad), jnp.float32)

    fn = pl.pallas_call(
        kern,
        out_shape=out_shape,
        grid_spec=pltpu.PrefetchScalarGridSpec(
            num_scalar_prefetch=1,
            grid=(B,),
            in_specs=in_specs,
            out_specs=out_spec,
            scratch_shapes=[pltpu.VMEM((H, T_pad + 2 * pad_left), jnp.bfloat16),
                            pltpu.VMEM((K * H, T_pad), jnp.bfloat16)]),
        compiler_params=pltpu.CompilerParams(
            dimension_semantics=("parallel",),
            vmem_limit_bytes=_vmem_limit_bytes()),
    )
    packed = fn(x_lengths.astype(jnp.int32), x_p, g_p, eps_p,
                pre_w, pre_b, cond_w, cond_b, in_w, rs_w, rs_b, proj_w, proj_b)

    packed = packed[:, :, :T]
    z, m, logs = packed[:, :O], packed[:, O:2 * O], packed[:, 2 * O:]
    x_mask = (jnp.arange(T)[None, :] < x_lengths[:, None]).astype(x.dtype)[:, None, :]
    return z, m, logs, x_mask


# ----------------------------------------------------------------------------- pure-JAX reference
def encoder_reference(x, x_lengths, g, eps, p, cfg):
    # matmul operands in bf16 (f32 accumulate) to mirror the kernel's MXU numerics
    H, O, K = cfg["hidden"], cfg["out_channels"], cfg["kernel_size"]
    D, L = cfg["dilation_rate"], cfg["n_layers"]
    B, _, T = x.shape
    bf = jnp.bfloat16

    def conv1x1(w, a):
        return jnp.einsum("oc,bct->bot", w.astype(bf), a.astype(bf),
                          preferred_element_type=jnp.float32)

    mask = (jnp.arange(T)[None, :] < x_lengths[:, None]).astype(jnp.float32)[:, None, :]
    h = (conv1x1(p["pre_w"], x) + p["pre_b"][None]) * mask
    gc = conv1x1(p["cond_w"], g) + p["cond_b"][None]
    out = jnp.zeros((B, H, T), jnp.float32)
    for i in range(L):
        d = D ** i
        pad = (K - 1) * d // 2
        hp = jnp.pad(h, ((0, 0), (0, 0), (pad, pad)))
        xin = sum(conv1x1(p["in_w"][i, j], hp[:, :, j * d:j * d + T]) for j in range(K))
        xin = xin + p["in_b"][i][None] + gc[:, 2 * H * i:2 * H * (i + 1)]
        acts = jnp.tanh(xin[:, :H]) * jax.nn.sigmoid(xin[:, H:])
        rs = conv1x1(p["rs_w"][i], acts) + p["rs_b"][i][None]
        if i < L - 1:
            h = (h + rs[:, :H]) * mask
        out = out + rs[:, H:]
    out = out * mask
    stats = (conv1x1(p["proj_w"], out) + p["proj_b"][None]) * mask
    m, logs = stats[:, :O], stats[:, O:]
    z = (m + eps * jnp.exp(logs)) * mask
    return z, m, logs, mask


# ----------------------------------------------------------------------------- main
if __name__ == "__main__":
    cfg = dict(in_channels=8, out_channels=8, hidden=32,
               kernel_size=5, dilation_rate=2, n_layers=4, gin_channels=16)
    B, T = 2, 24
    H, O, K, L, G = cfg["hidden"], cfg["out_channels"], cfg["kernel_size"], cfg["n_layers"], cfg["gin_channels"]

    key = jax.random.PRNGKey(0)
    ks = jax.random.split(key, 16)

    # deterministic synthetic weights (weight_norm is a reparametrization -> plain weights here)
    params = {
        "pre_w":  0.1 * jax.random.normal(ks[0], (H, cfg["in_channels"]), jnp.float32),
        "pre_b":  0.1 * jax.random.normal(ks[1], (H, 1), jnp.float32),
        "cond_w": 0.1 * jax.random.normal(ks[2], (2 * H * L, G), jnp.float32),
        "cond_b": 0.1 * jax.random.normal(ks[3], (2 * H * L, 1), jnp.float32),
        "in_w":   0.1 * jax.random.normal(ks[4], (L, K, 2 * H, H), jnp.float32),
        "in_b":   0.1 * jax.random.normal(ks[5], (L, 2 * H, 1), jnp.float32),
        "rs_w":   0.1 * jax.random.normal(ks[6], (L, 2 * H, H), jnp.float32),
        "rs_b":   0.1 * jax.random.normal(ks[7], (L, 2 * H, 1), jnp.float32),
        "proj_w": 0.1 * jax.random.normal(ks[8], (2 * O, H), jnp.float32),
        "proj_b": 0.1 * jax.random.normal(ks[9], (2 * O, 1), jnp.float32),
    }
    # NOTE: the last WN layer is skip-only (Conv1d(H, H, 1)); its weights live in rs_w[L-1, H:]
    # and the unused res-half rs_w[L-1, :H] is ignored by both kernel and reference.

    # inputs
    x = jax.random.normal(ks[10], (B, cfg["in_channels"], T), jnp.float32)
    g = jax.random.normal(ks[11], (B, G, T), jnp.float32)
    x_lengths = jnp.array([T, 17], dtype=jnp.int32)
    # reparameterization noise (stands in for torch.randn_like(m))
    eps = jax.random.normal(ks[12], (B, O, T), jnp.float32)

    z, m, logs, x_mask = encoder_forward(x, x_lengths, g, eps, params, cfg)
    jax.block_until_ready((z, m, logs, x_mask))

    z_r, m_r, logs_r, mask_r = encoder_reference(x, x_lengths, g, eps, params, cfg)
    np.testing.assert_allclose(np.asarray(x_mask), np.asarray(mask_r), atol=1e-6)
    np.testing.assert_allclose(np.asarray(m), np.asarray(m_r), atol=2e-2, rtol=2e-2)
    np.testing.assert_allclose(np.asarray(logs), np.asarray(logs_r), atol=2e-2, rtol=2e-2)
    np.testing.assert_allclose(np.asarray(z), np.asarray(z_r), atol=2e-2, rtol=2e-2)

    print("KERNEL_OK")
</pallas_src>

<mosaic_0001>
module attributes {stable_mosaic.version = 11 : i64} {
  func.func @encoder_kernel(%arg0: i32, %arg1: memref<2xi32, #tpu.memory_space<smem>>, %arg2: memref<1x8x128xbf16, #tpu.memory_space<vmem>>, %arg3: memref<1x16x128xbf16, #tpu.memory_space<vmem>>, %arg4: memref<1x8x128xf32, #tpu.memory_space<vmem>>, %arg5: memref<32x8xbf16, #tpu.memory_space<vmem>>, %arg6: memref<32x1xf32, #tpu.memory_space<vmem>>, %arg7: memref<256x16xbf16, #tpu.memory_space<vmem>>, %arg8: memref<256x1xf32, #tpu.memory_space<vmem>>, %arg9: memref<4x64x160xbf16, #tpu.memory_space<vmem>>, %arg10: memref<4x64x32xbf16, #tpu.memory_space<vmem>>, %arg11: memref<4x64x1xf32, #tpu.memory_space<vmem>>, %arg12: memref<16x32xbf16, #tpu.memory_space<vmem>>, %arg13: memref<16x1xf32, #tpu.memory_space<vmem>>, %arg14: memref<1x24x128xf32, #tpu.memory_space<vmem>>, %arg15: memref<32x384xbf16, #tpu.memory_space<vmem>>, %arg16: memref<160x128xbf16, #tpu.memory_space<vmem>>) attributes {dimension_semantics = [#tpu.dimension_semantics<parallel>], iteration_bounds = array<i64: 2>, scalar_prefetch = 1 : i64, scratch_operands = 2 : i64, tpu.core_type = #tpu.core_type<tc>, window_params = [{transform_indices = @transform_0, window_bounds = array<i64: 1, 8, 128>}, {transform_indices = @transform_1, window_bounds = array<i64: 1, 16, 128>}, {transform_indices = @transform_2, window_bounds = array<i64: 1, 8, 128>}, {pipeline_mode = #tpu.pipeline_mode<synchronous>, transform_indices = @transform_3, window_bounds = array<i64: 32, 8>}, {pipeline_mode = #tpu.pipeline_mode<synchronous>, transform_indices = @transform_4, window_bounds = array<i64: 32, 1>}, {pipeline_mode = #tpu.pipeline_mode<synchronous>, transform_indices = @transform_5, window_bounds = array<i64: 256, 16>}, {pipeline_mode = #tpu.pipeline_mode<synchronous>, transform_indices = @transform_6, window_bounds = array<i64: 256, 1>}, {pipeline_mode = #tpu.pipeline_mode<synchronous>, transform_indices = @transform_7, window_bounds = array<i64: 4, 64, 160>}, {pipeline_mode = #tpu.pipeline_mode<synchronous>, transform_indices = @transform_8, window_bounds = array<i64: 4, 64, 32>}, {pipeline_mode = #tpu.pipeline_mode<synchronous>, transform_indices = @transform_9, window_bounds = array<i64: 4, 64, 1>}, {pipeline_mode = #tpu.pipeline_mode<synchronous>, transform_indices = @transform_10, window_bounds = array<i64: 16, 32>}, {pipeline_mode = #tpu.pipeline_mode<synchronous>, transform_indices = @transform_11, window_bounds = array<i64: 16, 1>}, {transform_indices = @transform_12, window_bounds = array<i64: 1, 24, 128>}]} {
    %0 = arith.index_cast %arg0 : i32 to index
    %1 = memref.load %arg1[%0] : memref<2xi32, #tpu.memory_space<smem>>
    %2 = tpu.iota {dimensions = array<i32: 1>} : vector<1x128xi32>
    %3 = vector.broadcast %1 : i32 to vector<1x128xi32>
    %4 = arith.cmpi slt, %2, %3 : vector<1x128xi32>
    %5 = arith.extui %4 : vector<1x128xi1> to vector<1x128xi32>
    %6 = arith.sitofp %5 : vector<1x128xi32> to vector<1x128xf32>
    %7 = vector.shape_cast %6 : vector<1x128xf32> to vector<1x128xf32>
    %8 = vector.broadcast %7 : vector<1x128xf32> to vector<32x128xf32>
    %9 = vector.shape_cast %6 : vector<1x128xf32> to vector<1x128xf32>
    %10 = vector.broadcast %9 : vector<1x128xf32> to vector<16x128xf32>
    %11 = vector.shape_cast %6 : vector<1x128xf32> to vector<1x128xf32>
    %12 = vector.broadcast %11 : vector<1x128xf32> to vector<8x128xf32>
    %cst = arith.constant 0.000000e+00 : bf16
    %13 = vector.broadcast %cst : bf16 to vector<32x16xbf16>
    %c0 = arith.constant 0 : index
    %c112 = arith.constant 112 : index
    %14 = vector.load %arg15[%c0, %c112] : memref<32x384xbf16, #tpu.memory_space<vmem>>, vector<32x16xbf16>
    tpu.vector_store %arg15[%c0, %c112], %13 {strides = array<i32>} : memref<32x384xbf16, #tpu.memory_space<vmem>>, vector<32x16xbf16>,
    %cst_0 = arith.constant 0.000000e+00 : bf16
    %15 = vector.broadcast %cst_0 : bf16 to vector<32x16xbf16>
    %c0_1 = arith.constant 0 : index
    %c256 = arith.constant 256 : index
    %16 = vector.load %arg15[%c0_1, %c256] : memref<32x384xbf16, #tpu.memory_space<vmem>>, vector<32x16xbf16>
    tpu.vector_store %arg15[%c0_1, %c256], %15 {strides = array<i32>} : memref<32x384xbf16, #tpu.memory_space<vmem>>, vector<32x16xbf16>,
    %c0_2 = arith.constant 0 : index
    %c0_3 = arith.constant 0 : index
    %17 = vector.load %arg5[%c0_2, %c0_3] : memref<32x8xbf16, #tpu.memory_space<vmem>>, vector<32x8xbf16>
    %c0_4 = arith.constant 0 : index
    %c0_5 = arith.constant 0 : index
    %c0_6 = arith.constant 0 : index
    %18 = vector.load %arg2[%c0_4, %c0_5, %c0_6] : memref<1x8x128xbf16, #tpu.memory_space<vmem>>, vector<1x8x128xbf16>
    %19 = vector.shape_cast %18 : vector<1x8x128xbf16> to vector<8x128xbf16>
    %cst_7 = arith.constant dense<0.000000e+00> : vector<32x128xf32>
    %20 = tpu.matmul %17, %19, %cst_7 {dimension_numbers = #tpu.dot_dimension_numbers<[1], [0], [0], [1], [0, 0, 1, 1], [], []>} : vector<32x8xbf16>, vector<8x128xbf16>, vector<32x128xf32> -> vector<32x128xf32>
    %c0_8 = arith.constant 0 : index
    %c0_9 = arith.constant 0 : index
    %21 = vector.load %arg6[%c0_8, %c0_9] : memref<32x1xf32, #tpu.memory_space<vmem>>, vector<32x1xf32>
    %22 = vector.broadcast %21 : vector<32x1xf32> to vector<32x128xf32>
    %23 = arith.addf %20, %22 : vector<32x128xf32>
    %24 = arith.mulf %23, %8 : vector<32x128xf32>
    %c0_10 = arith.constant 0 : index
    %c0_11 = arith.constant 0 : index
    %25 = vector.load %arg7[%c0_10, %c0_11] : memref<256x16xbf16, #tpu.memory_space<vmem>>, vector<256x16xbf16>
    %c0_12 = arith.constant 0 : index
    %c0_13 = arith.constant 0 : index
    %c0_14 = arith.constant 0 : index
    %26 = vector.load %arg3[%c0_12, %c0_13, %c0_14] : memref<1x16x128xbf16, #tpu.memory_space<vmem>>, vector<1x16x128xbf16>
    %27 = vector.shape_cast %26 : vector<1x16x128xbf16> to vector<16x128xbf16>
    %cst_15 = arith.constant dense<0.000000e+00> : vector<256x128xf32>
    %28 = tpu.matmul %25, %27, %cst_15 {dimension_numbers = #tpu.dot_dimension_numbers<[1], [0], [0], [1], [0, 0, 1, 1], [], []>} : vector<256x16xbf16>, vector<16x128xbf16>, vector<256x128xf32> -> vector<256x128xf32>
    %c0_16 = arith.constant 0 : index
    %c0_17 = arith.constant 0 : index
    %29 = vector.load %arg8[%c0_16, %c0_17] : memref<256x1xf32, #tpu.memory_space<vmem>>, vector<256x1xf32>
    %30 = vector.broadcast %29 : vector<256x1xf32> to vector<256x128xf32>
    %31 = arith.addf %28, %30 : vector<256x128xf32>
    %cst_18 = arith.constant 0.000000e+00 : f32
    %32 = vector.broadcast %cst_18 : f32 to vector<32x128xf32>
    %33 = arith.truncf %24 : vector<32x128xf32> to vector<32x128xbf16>
    %c0_19 = arith.constant 0 : index
    %c128 = arith.constant 128 : index
    %34 = vector.load %arg15[%c0_19, %c128] : memref<32x384xbf16, #tpu.memory_space<vmem>>, vector<32x128xbf16>
    tpu.vector_store %arg15[%c0_19, %c128], %33 {strides = array<i32>} : memref<32x384xbf16, #tpu.memory_space<vmem>>, vector<32x128xbf16>,
    %c0_20 = arith.constant 0 : index
    %c126 = arith.constant 126 : index
    %35 = vector.load %arg15[%c0_20, %c126] : memref<32x384xbf16, #tpu.memory_space<vmem>>, vector<32x128xbf16>
    %c0_21 = arith.constant 0 : index
    %c0_22 = arith.constant 0 : index
    %36 = vector.load %arg16[%c0_21, %c0_22] : memref<160x128xbf16, #tpu.memory_space<vmem>>, vector<32x128xbf16>
    tpu.vector_store %arg16[%c0_21, %c0_22], %35 {strides = array<i32>} : memref<160x128xbf16, #tpu.memory_space<vmem>>, vector<32x128xbf16>,
    %c0_23 = arith.constant 0 : index
    %c127 = arith.constant 127 : index
    %37 = vector.load %arg15[%c0_23, %c127] : memref<32x384xbf16, #tpu.memory_space<vmem>>, vector<32x128xbf16>
    %c32 = arith.constant 32 : index
    %c0_24 = arith.constant 0 : index
    %38 = vector.load %arg16[%c32, %c0_24] : memref<160x128xbf16, #tpu.memory_space<vmem>>, vector<32x128xbf16>
    tpu.vector_store %arg16[%c32, %c0_24], %37 {strides = array<i32>} : memref<160x128xbf16, #tpu.memory_space<vmem>>, vector<32x128xbf16>,
    %c0_25 = arith.constant 0 : index
    %c128_26 = arith.constant 128 : index
    %39 = vector.load %arg15[%c0_25, %c128_26] : memref<32x384xbf16, #tpu.memory_space<vmem>>, vector<32x128xbf16>
    %c64 = arith.constant 64 : index
    %c0_27 = arith.constant 0 : index
    %40 = vector.load %arg16[%c64, %c0_27] : memref<160x128xbf16, #tpu.memory_space<vmem>>, vector<32x128xbf16>
    tpu.vector_store %arg16[%c64, %c0_27], %39 {strides = array<i32>} : memref<160x128xbf16, #tpu.memory_space<vmem>>, vector<32x128xbf16>,
    %c0_28 = arith.constant 0 : index
    %c129 = arith.constant 129 : index
    %41 = vector.load %arg15[%c0_28, %c129] : memref<32x384xbf16, #tpu.memory_space<vmem>>, vector<32x128xbf16>
    %c96 = arith.constant 96 : index
    %c0_29 = arith.constant 0 : index
    %42 = vector.load %arg16[%c96, %c0_29] : memref<160x128xbf16, #tpu.memory_space<vmem>>, vector<32x128xbf16>
    tpu.vector_store %arg16[%c96, %c0_29], %41 {strides = array<i32>} : memref<160x128xbf16, #tpu.memory_space<vmem>>, vector<32x128xbf16>,
    %c0_30 = arith.constant 0 : index
    %c130 = arith.constant 130 : index
    %43 = vector.load %arg15[%c0_30, %c130] : memref<32x384xbf16, #tpu.memory_space<vmem>>, vector<32x128xbf16>
    %c128_31 = arith.constant 128 : index
    %c0_32 = arith.constant 0 : index
    %44 = vector.load %arg16[%c128_31, %c0_32] : memref<160x128xbf16, #tpu.memory_space<vmem>>, vector<32x128xbf16>
    tpu.vector_store %arg16[%c128_31, %c0_32], %43 {strides = array<i32>} : memref<160x128xbf16, #tpu.memory_space<vmem>>, vector<32x128xbf16>,
    %c0_33 = arith.constant 0 : index
    %c0_34 = arith.constant 0 : index
    %c0_35 = arith.constant 0 : index
    %45 = vector.load %arg9[%c0_33, %c0_34, %c0_35] : memref<4x64x160xbf16, #tpu.memory_space<vmem>>, vector<1x64x160xbf16>
    %46 = vector.shape_cast %45 : vector<1x64x160xbf16> to vector<64x160xbf16>
    %c0_36 = arith.constant 0 : index
    %c0_37 = arith.constant 0 : index
    %47 = vector.load %arg16[%c0_36, %c0_37] : memref<160x128xbf16, #tpu.memory_space<vmem>>, vector<160x128xbf16>
    %cst_38 = arith.constant dense<0.000000e+00> : vector<64x128xf32>
    %48 = tpu.matmul %46, %47, %cst_38 {dimension_numbers = #tpu.dot_dimension_numbers<[1], [0], [0], [1], [0, 0, 1, 1], [], []>} : vector<64x160xbf16>, vector<160x128xbf16>, vector<64x128xf32> -> vector<64x128xf32>
    %49 = vector.extract_strided_slice %31 {offsets = [0, 0], sizes = [64, 128], strides = [1, 1]} : vector<256x128xf32> to vector<64x128xf32>
    %50 = arith.addf %48, %49 : vector<64x128xf32>
    %51 = vector.extract_strided_slice %50 {offsets = [0, 0], sizes = [32, 128], strides = [1, 1]} : vector<64x128xf32> to vector<32x128xf32>
    %52 = vector.extract_strided_slice %50 {offsets = [32, 0], sizes = [32, 128], strides = [1, 1]} : vector<64x128xf32> to vector<32x128xf32>
    %53 = math.tanh %51 : vector<32x128xf32>
    %cst_39 = arith.constant 5.000000e-01 : f32
    %54 = vector.broadcast %cst_39 : f32 to vector<32x128xf32>
    %55 = arith.mulf %54, %52 : vector<32x128xf32>
    %56 = math.tanh %55 : vector<32x128xf32>
    %cst_40 = arith.constant 1.000000e+00 : f32
    %57 = vector.broadcast %cst_40 : f32 to vector<32x128xf32>
    %58 = arith.addf %56, %57 : vector<32x128xf32>
    %cst_41 = arith.constant 5.000000e-01 : f32
    %59 = vector.broadcast %cst_41 : f32 to vector<32x128xf32>
    %60 = arith.mulf %59, %58 : vector<32x128xf32>
    %61 = arith.mulf %53, %60 : vector<32x128xf32>
    %c0_42 = arith.constant 0 : index
    %c0_43 = arith.constant 0 : index
    %c0_44 = arith.constant 0 : index
    %62 = vector.load %arg10[%c0_42, %c0_43, %c0_44] : memref<4x64x32xbf16, #tpu.memory_space<vmem>>, vector<1x64x32xbf16>
    %63 = vector.shape_cast %62 : vector<1x64x32xbf16> to vector<64x32xbf16>
    %64 = arith.truncf %61 : vector<32x128xf32> to vector<32x128xbf16>
    %cst_45 = arith.constant dense<0.000000e+00> : vector<64x128xf32>
    %65 = tpu.matmul %63, %64, %cst_45 {dimension_numbers = #tpu.dot_dimension_numbers<[1], [0], [0], [1], [0, 0, 1, 1], [], []>} : vector<64x32xbf16>, vector<32x128xbf16>, vector<64x128xf32> -> vector<64x128xf32>
    %c0_46 = arith.constant 0 : index
    %c0_47 = arith.constant 0 : index
    %c0_48 = arith.constant 0 : index
    %66 = vector.load %arg11[%c0_46, %c0_47, %c0_48] : memref<4x64x1xf32, #tpu.memory_space<vmem>>, vector<1x64x1xf32>
    %67 = vector.shape_cast %66 : vector<1x64x1xf32> to vector<64x1xf32>
    %68 = vector.broadcast %67 : vector<64x1xf32> to vector<64x128xf32>
    %69 = arith.addf %65, %68 : vector<64x128xf32>
    %70 = vector.extract_strided_slice %69 {offsets = [0, 0], sizes = [32, 128], strides = [1, 1]} : vector<64x128xf32> to vector<32x128xf32>
    %71 = arith.addf %24, %70 : vector<32x128xf32>
    %72 = arith.mulf %71, %8 : vector<32x128xf32>
    %73 = vector.extract_strided_slice %69 {offsets = [32, 0], sizes = [32, 128], strides = [1, 1]} : vector<64x128xf32> to vector<32x128xf32>
    %74 = arith.addf %32, %73 : vector<32x128xf32>
    %75 = arith.truncf %72 : vector<32x128xf32> to vector<32x128xbf16>
    %c0_49 = arith.constant 0 : index
    %c128_50 = arith.constant 128 : index
    %76 = vector.load %arg15[%c0_49, %c128_50] : memref<32x384xbf16, #tpu.memory_space<vmem>>, vector<32x128xbf16>
    tpu.vector_store %arg15[%c0_49, %c128_50], %75 {strides = array<i32>} : memref<32x384xbf16, #tpu.memory_space<vmem>>, vector<32x128xbf16>,
    %c0_51 = arith.constant 0 : index
    %c124 = arith.constant 124 : index
    %77 = vector.load %arg15[%c0_51, %c124] : memref<32x384xbf16, #tpu.memory_space<vmem>>, vector<32x128xbf16>
    %c0_52 = arith.constant 0 : index
    %c0_53 = arith.constant 0 : index
    %78 = vector.load %arg16[%c0_52, %c0_53] : memref<160x128xbf16, #tpu.memory_space<vmem>>, vector<32x128xbf16>
    tpu.vector_store %arg16[%c0_52, %c0_53], %77 {strides = array<i32>} : memref<160x128xbf16, #tpu.memory_space<vmem>>, vector<32x128xbf16>,
    %c0_54 = arith.constant 0 : index
    %c126_55 = arith.constant 126 : index
    %79 = vector.load %arg15[%c0_54, %c126_55] : memref<32x384xbf16, #tpu.memory_space<vmem>>, vector<32x128xbf16>
    %c32_56 = arith.constant 32 : index
    %c0_57 = arith.constant 0 : index
    %80 = vector.load %arg16[%c32_56, %c0_57] : memref<160x128xbf16, #tpu.memory_space<vmem>>, vector<32x128xbf16>
    tpu.vector_store %arg16[%c32_56, %c0_57], %79 {strides = array<i32>} : memref<160x128xbf16, #tpu.memory_space<vmem>>, vector<32x128xbf16>,
    %c0_58 = arith.constant 0 : index
    %c128_59 = arith.constant 128 : index
    %81 = vector.load %arg15[%c0_58, %c128_59] : memref<32x384xbf16, #tpu.memory_space<vmem>>, vector<32x128xbf16>
    %c64_60 = arith.constant 64 : index
    %c0_61 = arith.constant 0 : index
    %82 = vector.load %arg16[%c64_60, %c0_61] : memref<160x128xbf16, #tpu.memory_space<vmem>>, vector<32x128xbf16>
    tpu.vector_store %arg16[%c64_60, %c0_61], %81 {strides = array<i32>} : memref<160x128xbf16, #tpu.memory_space<vmem>>, vector<32x128xbf16>,
    %c0_62 = arith.constant 0 : index
    %c130_63 = arith.constant 130 : index
    %83 = vector.load %arg15[%c0_62, %c130_63] : memref<32x384xbf16, #tpu.memory_space<vmem>>, vector<32x128xbf16>
    %c96_64 = arith.constant 96 : index
    %c0_65 = arith.constant 0 : index
    %84 = vector.load %arg16[%c96_64, %c0_65] : memref<160x128xbf16, #tpu.memory_space<vmem>>, vector<32x128xbf16>
    tpu.vector_store %arg16[%c96_64, %c0_65], %83 {strides = array<i32>} : memref<160x128xbf16, #tpu.memory_space<vmem>>, vector<32x128xbf16>,
    %c0_66 = arith.constant 0 : index
    %c132 = arith.constant 132 : index
    %85 = vector.load %arg15[%c0_66, %c132] : memref<32x384xbf16, #tpu.memory_space<vmem>>, vector<32x128xbf16>
    %c128_67 = arith.constant 128 : index
    %c0_68 = arith.constant 0 : index
    %86 = vector.load %arg16[%c128_67, %c0_68] : memref<160x128xbf16, #tpu.memory_space<vmem>>, vector<32x128xbf16>
    tpu.vector_store %arg16[%c128_67, %c0_68], %85 {strides = array<i32>} : memref<160x128xbf16, #tpu.memory_space<vmem>>, vector<32x128xbf16>,
    %c1 = arith.constant 1 : index
    %c0_69 = arith.constant 0 : index
    %c0_70 = arith.constant 0 : index
    %87 = vector.load %arg9[%c1, %c0_69, %c0_70] : memref<4x64x160xbf16, #tpu.memory_space<vmem>>, vector<1x64x160xbf16>
    %88 = vector.shape_cast %87 : vector<1x64x160xbf16> to vector<64x160xbf16>
    %c0_71 = arith.constant 0 : index
    %c0_72 = arith.constant 0 : index
    %89 = vector.load %arg16[%c0_71, %c0_72] : memref<160x128xbf16, #tpu.memory_space<vmem>>, vector<160x128xbf16>
    %cst_73 = arith.constant dense<0.000000e+00> : vector<64x128xf32>
    %90 = tpu.matmul %88, %89, %cst_73 {dimension_numbers = #tpu.dot_dimension_numbers<[1], [0], [0], [1], [0, 0, 1, 1], [], []>} : vector<64x160xbf16>, vector<160x128xbf16>, vector<64x128xf32> -> vector<64x128xf32>
    %91 = vector.extract_strided_slice %31 {offsets = [64, 0], sizes = [64, 128], strides = [1, 1]} : vector<256x128xf32> to vector<64x128xf32>
    %92 = arith.addf %90, %91 : vector<64x128xf32>
    %93 = vector.extract_strided_slice %92 {offsets = [0, 0], sizes = [32, 128], strides = [1, 1]} : vector<64x128xf32> to vector<32x128xf32>
    %94 = vector.extract_strided_slice %92 {offsets = [32, 0], sizes = [32, 128], strides = [1, 1]} : vector<64x128xf32> to vector<32x128xf32>
    %95 = math.tanh %93 : vector<32x128xf32>
    %cst_74 = arith.constant 5.000000e-01 : f32
    %96 = vector.broadcast %cst_74 : f32 to vector<32x128xf32>
    %97 = arith.mulf %96, %94 : vector<32x128xf32>
    %98 = math.tanh %97 : vector<32x128xf32>
    %cst_75 = arith.constant 1.000000e+00 : f32
    %99 = vector.broadcast %cst_75 : f32 to vector<32x128xf32>
    %100 = arith.addf %98, %99 : vector<32x128xf32>
    %cst_76 = arith.constant 5.000000e-01 : f32
    %101 = vector.broadcast %cst_76 : f32 to vector<32x128xf32>
    %102 = arith.mulf %101, %100 : vector<32x128xf32>
    %103 = arith.mulf %95, %102 : vector<32x128xf32>
    %c1_77 = arith.constant 1 : index
    %c0_78 = arith.constant 0 : index
    %c0_79 = arith.constant 0 : index
    %104 = vector.load %arg10[%c1_77, %c0_78, %c0_79] : memref<4x64x32xbf16, #tpu.memory_space<vmem>>, vector<1x64x32xbf16>
    %105 = vector.shape_cast %104 : vector<1x64x32xbf16> to vector<64x32xbf16>
    %106 = arith.truncf %103 : vector<32x128xf32> to vector<32x128xbf16>
    %cst_80 = arith.constant dense<0.000000e+00> : vector<64x128xf32>
    %107 = tpu.matmul %105, %106, %cst_80 {dimension_numbers = #tpu.dot_dimension_numbers<[1], [0], [0], [1], [0, 0, 1, 1], [], []>} : vector<64x32xbf16>, vector<32x128xbf16>, vector<64x128xf32> -> vector<64x128xf32>
    %c1_81 = arith.constant 1 : index
    %c0_82 = arith.constant 0 : index
    %c0_83 = arith.constant 0 : index
    %108 = vector.load %arg11[%c1_81, %c0_82, %c0_83] : memref<4x64x1xf32, #tpu.memory_space<vmem>>, vector<1x64x1xf32>
    %109 = vector.shape_cast %108 : vector<1x64x1xf32> to vector<64x1xf32>
    %110 = vector.broadcast %109 : vector<64x1xf32> to vector<64x128xf32>
    %111 = arith.addf %107, %110 : vector<64x128xf32>
    %112 = vector.extract_strided_slice %111 {offsets = [0, 0], sizes = [32, 128], strides = [1, 1]} : vector<64x128xf32> to vector<32x128xf32>
    %113 = arith.addf %72, %112 : vector<32x128xf32>
    %114 = arith.mulf %113, %8 : vector<32x128xf32>
    %115 = vector.extract_strided_slice %111 {offsets = [32, 0], sizes = [32, 128], strides = [1, 1]} : vector<64x128xf32> to vector<32x128xf32>
    %116 = arith.addf %74, %115 : vector<32x128xf32>
    %117 = arith.truncf %114 : vector<32x128xf32> to vector<32x128xbf16>
    %c0_84 = arith.constant 0 : index
    %c128_85 = arith.constant 128 : index
    %118 = vector.load %arg15[%c0_84, %c128_85] : memref<32x384xbf16, #tpu.memory_space<vmem>>, vector<32x128xbf16>
    tpu.vector_store %arg15[%c0_84, %c128_85], %117 {strides = array<i32>} : memref<32x384xbf16, #tpu.memory_space<vmem>>, vector<32x128xbf16>,
    %c0_86 = arith.constant 0 : index
    %c120 = arith.constant 120 : index
    %119 = vector.load %arg15[%c0_86, %c120] : memref<32x384xbf16, #tpu.memory_space<vmem>>, vector<32x128xbf16>
    %c0_87 = arith.constant 0 : index
    %c0_88 = arith.constant 0 : index
    %120 = vector.load %arg16[%c0_87, %c0_88] : memref<160x128xbf16, #tpu.memory_space<vmem>>, vector<32x128xbf16>
    tpu.vector_store %arg16[%c0_87, %c0_88], %119 {strides = array<i32>} : memref<160x128xbf16, #tpu.memory_space<vmem>>, vector<32x128xbf16>,
    %c0_89 = arith.constant 0 : index
    %c124_90 = arith.constant 124 : index
    %121 = vector.load %arg15[%c0_89, %c124_90] : memref<32x384xbf16, #tpu.memory_space<vmem>>, vector<32x128xbf16>
    %c32_91 = arith.constant 32 : index
    %c0_92 = arith.constant 0 : index
    %122 = vector.load %arg16[%c32_91, %c0_92] : memref<160x128xbf16, #tpu.memory_space<vmem>>, vector<32x128xbf16>
    tpu.vector_store %arg16[%c32_91, %c0_92], %121 {strides = array<i32>} : memref<160x128xbf16, #tpu.memory_space<vmem>>, vector<32x128xbf16>,
    %c0_93 = arith.constant 0 : index
    %c128_94 = arith.constant 128 : index
    %123 = vector.load %arg15[%c0_93, %c128_94] : memref<32x384xbf16, #tpu.memory_space<vmem>>, vector<32x128xbf16>
    %c64_95 = arith.constant 64 : index
    %c0_96 = arith.constant 0 : index
    %124 = vector.load %arg16[%c64_95, %c0_96] : memref<160x128xbf16, #tpu.memory_space<vmem>>, vector<32x128xbf16>
    tpu.vector_store %arg16[%c64_95, %c0_96], %123 {strides = array<i32>} : memref<160x128xbf16, #tpu.memory_space<vmem>>, vector<32x128xbf16>,
    %c0_97 = arith.constant 0 : index
    %c132_98 = arith.constant 132 : index
    %125 = vector.load %arg15[%c0_97, %c132_98] : memref<32x384xbf16, #tpu.memory_space<vmem>>, vector<32x128xbf16>
    %c96_99 = arith.constant 96 : index
    %c0_100 = arith.constant 0 : index
    %126 = vector.load %arg16[%c96_99, %c0_100] : memref<160x128xbf16, #tpu.memory_space<vmem>>, vector<32x128xbf16>
    tpu.vector_store %arg16[%c96_99, %c0_100], %125 {strides = array<i32>} : memref<160x128xbf16, #tpu.memory_space<vmem>>, vector<32x128xbf16>,
    %c0_101 = arith.constant 0 : index
    %c136 = arith.constant 136 : index
    %127 = vector.load %arg15[%c0_101, %c136] : memref<32x384xbf16, #tpu.memory_space<vmem>>, vector<32x128xbf16>
    %c128_102 = arith.constant 128 : index
    %c0_103 = arith.constant 0 : index
    %128 = vector.load %arg16[%c128_102, %c0_103] : memref<160x128xbf16, #tpu.memory_space<vmem>>, vector<32x128xbf16>
    tpu.vector_store %arg16[%c128_102, %c0_103], %127 {strides = array<i32>} : memref<160x128xbf16, #tpu.memory_space<vmem>>, vector<32x128xbf16>,
    %c2 = arith.constant 2 : index
    %c0_104 = arith.constant 0 : index
    %c0_105 = arith.constant 0 : index
    %129 = vector.load %arg9[%c2, %c0_104, %c0_105] : memref<4x64x160xbf16, #tpu.memory_space<vmem>>, vector<1x64x160xbf16>
    %130 = vector.shape_cast %129 : vector<1x64x160xbf16> to vector<64x160xbf16>
    %c0_106 = arith.constant 0 : index
    %c0_107 = arith.constant 0 : index
    %131 = vector.load %arg16[%c0_106, %c0_107] : memref<160x128xbf16, #tpu.memory_space<vmem>>, vector<160x128xbf16>
    %cst_108 = arith.constant dense<0.000000e+00> : vector<64x128xf32>
    %132 = tpu.matmul %130, %131, %cst_108 {dimension_numbers = #tpu.dot_dimension_numbers<[1], [0], [0], [1], [0, 0, 1, 1], [], []>} : vector<64x160xbf16>, vector<160x128xbf16>, vector<64x128xf32> -> vector<64x128xf32>
    %133 = vector.extract_strided_slice %31 {offsets = [128, 0], sizes = [64, 128], strides = [1, 1]} : vector<256x128xf32> to vector<64x128xf32>
    %134 = arith.addf %132, %133 : vector<64x128xf32>
    %135 = vector.extract_strided_slice %134 {offsets = [0, 0], sizes = [32, 128], strides = [1, 1]} : vector<64x128xf32> to vector<32x128xf32>
    %136 = vector.extract_strided_slice %134 {offsets = [32, 0], sizes = [32, 128], strides = [1, 1]} : vector<64x128xf32> to vector<32x128xf32>
    %137 = math.tanh %135 : vector<32x128xf32>
    %cst_109 = arith.constant 5.000000e-01 : f32
    %138 = vector.broadcast %cst_109 : f32 to vector<32x128xf32>
    %139 = arith.mulf %138, %136 : vector<32x128xf32>
    %140 = math.tanh %139 : vector<32x128xf32>
    %cst_110 = arith.constant 1.000000e+00 : f32
    %141 = vector.broadcast %cst_110 : f32 to vector<32x128xf32>
    %142 = arith.addf %140, %141 : vector<32x128xf32>
    %cst_111 = arith.constant 5.000000e-01 : f32
    %143 = vector.broadcast %cst_111 : f32 to vector<32x128xf32>
    %144 = arith.mulf %143, %142 : vector<32x128xf32>
    %145 = arith.mulf %137, %144 : vector<32x128xf32>
    %c2_112 = arith.constant 2 : index
    %c0_113 = arith.constant 0 : index
    %c0_114 = arith.constant 0 : index
    %146 = vector.load %arg10[%c2_112, %c0_113, %c0_114] : memref<4x64x32xbf16, #tpu.memory_space<vmem>>, vector<1x64x32xbf16>
    %147 = vector.shape_cast %146 : vector<1x64x32xbf16> to vector<64x32xbf16>
    %148 = arith.truncf %145 : vector<32x128xf32> to vector<32x128xbf16>
    %cst_115 = arith.constant dense<0.000000e+00> : vector<64x128xf32>
    %149 = tpu.matmul %147, %148, %cst_115 {dimension_numbers = #tpu.dot_dimension_numbers<[1], [0], [0], [1], [0, 0, 1, 1], [], []>} : vector<64x32xbf16>, vector<32x128xbf16>, vector<64x128xf32> -> vector<64x128xf32>
    %c2_116 = arith.constant 2 : index
    %c0_117 = arith.constant 0 : index
    %c0_118 = arith.constant 0 : index
    %150 = vector.load %arg11[%c2_116, %c0_117, %c0_118] : memref<4x64x1xf32, #tpu.memory_space<vmem>>, vector<1x64x1xf32>
    %151 = vector.shape_cast %150 : vector<1x64x1xf32> to vector<64x1xf32>
    %152 = vector.broadcast %151 : vector<64x1xf32> to vector<64x128xf32>
    %153 = arith.addf %149, %152 : vector<64x128xf32>
    %154 = vector.extract_strided_slice %153 {offsets = [0, 0], sizes = [32, 128], strides = [1, 1]} : vector<64x128xf32> to vector<32x128xf32>
    %155 = arith.addf %114, %154 : vector<32x128xf32>
    %156 = arith.mulf %155, %8 : vector<32x128xf32>
    %157 = vector.extract_strided_slice %153 {offsets = [32, 0], sizes = [32, 128], strides = [1, 1]} : vector<64x128xf32> to vector<32x128xf32>
    %158 = arith.addf %116, %157 : vector<32x128xf32>
    %159 = arith.truncf %156 : vector<32x128xf32> to vector<32x128xbf16>
    %c0_119 = arith.constant 0 : index
    %c128_120 = arith.constant 128 : index
    %160 = vector.load %arg15[%c0_119, %c128_120] : memref<32x384xbf16, #tpu.memory_space<vmem>>, vector<32x128xbf16>
    tpu.vector_store %arg15[%c0_119, %c128_120], %159 {strides = array<i32>} : memref<32x384xbf16, #tpu.memory_space<vmem>>, vector<32x128xbf16>,
    %c0_121 = arith.constant 0 : index
    %c112_122 = arith.constant 112 : index
    %161 = vector.load %arg15[%c0_121, %c112_122] : memref<32x384xbf16, #tpu.memory_space<vmem>>, vector<32x128xbf16>
    %c0_123 = arith.constant 0 : index
    %c0_124 = arith.constant 0 : index
    %162 = vector.load %arg16[%c0_123, %c0_124] : memref<160x128xbf16, #tpu.memory_space<vmem>>, vector<32x128xbf16>
    tpu.vector_store %arg16[%c0_123, %c0_124], %161 {strides = array<i32>} : memref<160x128xbf16, #tpu.memory_space<vmem>>, vector<32x128xbf16>,
    %c0_125 = arith.constant 0 : index
    %c120_126 = arith.constant 120 : index
    %163 = vector.load %arg15[%c0_125, %c120_126] : memref<32x384xbf16, #tpu.memory_space<vmem>>, vector<32x128xbf16>
    %c32_127 = arith.constant 32 : index
    %c0_128 = arith.constant 0 : index
    %164 = vector.load %arg16[%c32_127, %c0_128] : memref<160x128xbf16, #tpu.memory_space<vmem>>, vector<32x128xbf16>
    tpu.vector_store %arg16[%c32_127, %c0_128], %163 {strides = array<i32>} : memref<160x128xbf16, #tpu.memory_space<vmem>>, vector<32x128xbf16>,
    %c0_129 = arith.constant 0 : index
    %c128_130 = arith.constant 128 : index
    %165 = vector.load %arg15[%c0_129, %c128_130] : memref<32x384xbf16, #tpu.memory_space<vmem>>, vector<32x128xbf16>
    %c64_131 = arith.constant 64 : index
    %c0_132 = arith.constant 0 : index
    %166 = vector.load %arg16[%c64_131, %c0_132] : memref<160x128xbf16, #tpu.memory_space<vmem>>, vector<32x128xbf16>
    tpu.vector_store %arg16[%c64_131, %c0_132], %165 {strides = array<i32>} : memref<160x128xbf16, #tpu.memory_space<vmem>>, vector<32x128xbf16>,
    %c0_133 = arith.constant 0 : index
    %c136_134 = arith.constant 136 : index
    %167 = vector.load %arg15[%c0_133, %c136_134] : memref<32x384xbf16, #tpu.memory_space<vmem>>, vector<32x128xbf16>
    %c96_135 = arith.constant 96 : index
    %c0_136 = arith.constant 0 : index
    %168 = vector.load %arg16[%c96_135, %c0_136] : memref<160x128xbf16, #tpu.memory_space<vmem>>, vector<32x128xbf16>
    tpu.vector_store %arg16[%c96_135, %c0_136], %167 {strides = array<i32>} : memref<160x128xbf16, #tpu.memory_space<vmem>>, vector<32x128xbf16>,
    %c0_137 = arith.constant 0 : index
    %c144 = arith.constant 144 : index
    %169 = vector.load %arg15[%c0_137, %c144] : memref<32x384xbf16, #tpu.memory_space<vmem>>, vector<32x128xbf16>
    %c128_138 = arith.constant 128 : index
    %c0_139 = arith.constant 0 : index
    %170 = vector.load %arg16[%c128_138, %c0_139] : memref<160x128xbf16, #tpu.memory_space<vmem>>, vector<32x128xbf16>
    tpu.vector_store %arg16[%c128_138, %c0_139], %169 {strides = array<i32>} : memref<160x128xbf16, #tpu.memory_space<vmem>>, vector<32x128xbf16>,
    %c3 = arith.constant 3 : index
    %c0_140 = arith.constant 0 : index
    %c0_141 = arith.constant 0 : index
    %171 = vector.load %arg9[%c3, %c0_140, %c0_141] : memref<4x64x160xbf16, #tpu.memory_space<vmem>>, vector<1x64x160xbf16>
    %172 = vector.shape_cast %171 : vector<1x64x160xbf16> to vector<64x160xbf16>
    %c0_142 = arith.constant 0 : index
    %c0_143 = arith.constant 0 : index
    %173 = vector.load %arg16[%c0_142, %c0_143] : memref<160x128xbf16, #tpu.memory_space<vmem>>, vector<160x128xbf16>
    %cst_144 = arith.constant dense<0.000000e+00> : vector<64x128xf32>
    %174 = tpu.matmul %172, %173, %cst_144 {dimension_numbers = #tpu.dot_dimension_numbers<[1], [0], [0], [1], [0, 0, 1, 1], [], []>} : vector<64x160xbf16>, vector<160x128xbf16>, vector<64x128xf32> -> vector<64x128xf32>
    %175 = vector.extract_strided_slice %31 {offsets = [192, 0], sizes = [64, 128], strides = [1, 1]} : vector<256x128xf32> to vector<64x128xf32>
    %176 = arith.addf %174, %175 : vector<64x128xf32>
    %177 = vector.extract_strided_slice %176 {offsets = [0, 0], sizes = [32, 128], strides = [1, 1]} : vector<64x128xf32> to vector<32x128xf32>
    %178 = vector.extract_strided_slice %176 {offsets = [32, 0], sizes = [32, 128], strides = [1, 1]} : vector<64x128xf32> to vector<32x128xf32>
    %179 = math.tanh %177 : vector<32x128xf32>
    %cst_145 = arith.constant 5.000000e-01 : f32
    %180 = vector.broadcast %cst_145 : f32 to vector<32x128xf32>
    %181 = arith.mulf %180, %178 : vector<32x128xf32>
    %182 = math.tanh %181 : vector<32x128xf32>
    %cst_146 = arith.constant 1.000000e+00 : f32
    %183 = vector.broadcast %cst_146 : f32 to vector<32x128xf32>
    %184 = arith.addf %182, %183 : vector<32x128xf32>
    %cst_147 = arith.constant 5.000000e-01 : f32
    %185 = vector.broadcast %cst_147 : f32 to vector<32x128xf32>
    %186 = arith.mulf %185, %184 : vector<32x128xf32>
    %187 = arith.mulf %179, %186 : vector<32x128xf32>
    %c3_148 = arith.constant 3 : index
    %c0_149 = arith.constant 0 : index
    %c0_150 = arith.constant 0 : index
    %188 = vector.load %arg10[%c3_148, %c0_149, %c0_150] : memref<4x64x32xbf16, #tpu.memory_space<vmem>>, vector<1x64x32xbf16>
    %189 = vector.shape_cast %188 : vector<1x64x32xbf16> to vector<64x32xbf16>
    %190 = arith.truncf %187 : vector<32x128xf32> to vector<32x128xbf16>
    %cst_151 = arith.constant dense<0.000000e+00> : vector<64x128xf32>
    %191 = tpu.matmul %189, %190, %cst_151 {dimension_numbers = #tpu.dot_dimension_numbers<[1], [0], [0], [1], [0, 0, 1, 1], [], []>} : vector<64x32xbf16>, vector<32x128xbf16>, vector<64x128xf32> -> vector<64x128xf32>
    %c3_152 = arith.constant 3 : index
    %c0_153 = arith.constant 0 : index
    %c0_154 = arith.constant 0 : index
    %192 = vector.load %arg11[%c3_152, %c0_153, %c0_154] : memref<4x64x1xf32, #tpu.memory_space<vmem>>, vector<1x64x1xf32>
    %193 = vector.shape_cast %192 : vector<1x64x1xf32> to vector<64x1xf32>
    %194 = vector.broadcast %193 : vector<64x1xf32> to vector<64x128xf32>
    %195 = arith.addf %191, %194 : vector<64x128xf32>
    %196 = vector.extract_strided_slice %195 {offsets = [32, 0], sizes = [32, 128], strides = [1, 1]} : vector<64x128xf32> to vector<32x128xf32>
    %197 = arith.addf %158, %196 : vector<32x128xf32>
    %198 = arith.mulf %197, %8 : vector<32x128xf32>
    %c0_155 = arith.constant 0 : index
    %c0_156 = arith.constant 0 : index
    %199 = vector.load %arg12[%c0_155, %c0_156] : memref<16x32xbf16, #tpu.memory_space<vmem>>, vector<16x32xbf16>
    %200 = arith.truncf %198 : vector<32x128xf32> to vector<32x128xbf16>
    %cst_157 = arith.constant dense<0.000000e+00> : vector<16x128xf32>
    %201 = tpu.matmul %199, %200, %cst_157 {dimension_numbers = #tpu.dot_dimension_numbers<[1], [0], [0], [1], [0, 0, 1, 1], [], []>} : vector<16x32xbf16>, vector<32x128xbf16>, vector<16x128xf32> -> vector<16x128xf32>
    %c0_158 = arith.constant 0 : index
    %c0_159 = arith.constant 0 : index
    %202 = vector.load %arg13[%c0_158, %c0_159] : memref<16x1xf32, #tpu.memory_space<vmem>>, vector<16x1xf32>
    %203 = vector.broadcast %202 : vector<16x1xf32> to vector<16x128xf32>
    %204 = arith.addf %201, %203 : vector<16x128xf32>
    %205 = arith.mulf %204, %10 : vector<16x128xf32>
    %206 = vector.extract_strided_slice %205 {offsets = [0, 0], sizes = [8, 128], strides = [1, 1]} : vector<16x128xf32> to vector<8x128xf32>
    %207 = vector.extract_strided_slice %205 {offsets = [8, 0], sizes = [8, 128], strides = [1, 1]} : vector<16x128xf32> to vector<8x128xf32>
    %c0_160 = arith.constant 0 : index
    %c0_161 = arith.constant 0 : index
    %c0_162 = arith.constant 0 : index
    %208 = vector.load %arg4[%c0_160, %c0_161, %c0_162] : memref<1x8x128xf32, #tpu.memory_space<vmem>>, vector<1x8x128xf32>
    %209 = vector.shape_cast %208 : vector<1x8x128xf32> to vector<8x128xf32>
    %210 = math.exp %207 : vector<8x128xf32>
    %211 = arith.mulf %209, %210 : vector<8x128xf32>
    %212 = arith.addf %206, %211 : vector<8x128xf32>
    %213 = arith.mulf %212, %12 : vector<8x128xf32>
    %c0_163 = arith.constant 0 : index
    %c0_164 = arith.constant 0 : index
    %c0_165 = arith.constant 0 : index
    %214 = vector.load %arg14[%c0_163, %c0_164, %c0_165] : memref<1x24x128xf32, #tpu.memory_space<vmem>>, vector<1x8x128xf32>
    %215 = vector.shape_cast %214 : vector<1x8x128xf32> to vector<8x128xf32>
    %216 = vector.shape_cast %213 : vector<8x128xf32> to vector<1x8x128xf32>
    tpu.vector_store %arg14[%c0_163, %c0_164, %c0_165], %216 {strides = array<i32>} : memref<1x24x128xf32, #tpu.memory_space<vmem>>, vector<1x8x128xf32>,
    %c0_166 = arith.constant 0 : index
    %c8 = arith.constant 8 : index
    %c0_167 = arith.constant 0 : index
    %217 = vector.load %arg14[%c0_166, %c8, %c0_167] : memref<1x24x128xf32, #tpu.memory_space<vmem>>, vector<1x8x128xf32>
    %218 = vector.shape_cast %217 : vector<1x8x128xf32> to vector<8x128xf32>
    %219 = vector.shape_cast %206 : vector<8x128xf32> to vector<1x8x128xf32>
    tpu.vector_store %arg14[%c0_166, %c8, %c0_167], %219 {strides = array<i32>} : memref<1x24x128xf32, #tpu.memory_space<vmem>>, vector<1x8x128xf32>,
    %c0_168 = arith.constant 0 : index
    %c16 = arith.constant 16 : index
    %c0_169 = arith.constant 0 : index
    %220 = vector.load %arg14[%c0_168, %c16, %c0_169] : memref<1x24x128xf32, #tpu.memory_space<vmem>>, vector<1x8x128xf32>
    %221 = vector.shape_cast %220 : vector<1x8x128xf32> to vector<8x128xf32>
    %222 = vector.shape_cast %207 : vector<8x128xf32> to vector<1x8x128xf32>
    tpu.vector_store %arg14[%c0_168, %c16, %c0_169], %222 {strides = array<i32>} : memref<1x24x128xf32, #tpu.memory_space<vmem>>, vector<1x8x128xf32>,
    return
  }
  func.func @transform_0(%arg0: i32, %arg1: memref<2xi32, #tpu.memory_space<smem>>) -> (i32, i32, i32) {
    %c0_i32 = arith.constant 0 : i32
    %c0_i32_0 = arith.constant 0 : i32
    %c0_i32_1 = arith.constant 0 : i32
    return %arg0, %c0_i32, %c0_i32_0 : i32, i32, i32
  }
  func.func @transform_1(%arg0: i32, %arg1: memref<2xi32, #tpu.memory_space<smem>>) -> (i32, i32, i32) {
    %c0_i32 = arith.constant 0 : i32
    %c0_i32_0 = arith.constant 0 : i32
    %c0_i32_1 = arith.constant 0 : i32
    return %arg0, %c0_i32, %c0_i32_0 : i32, i32, i32
  }
  func.func @transform_2(%arg0: i32, %arg1: memref<2xi32, #tpu.memory_space<smem>>) -> (i32, i32, i32) {
    %c0_i32 = arith.constant 0 : i32
    %c0_i32_0 = arith.constant 0 : i32
    %c0_i32_1 = arith.constant 0 : i32
    return %arg0, %c0_i32, %c0_i32_0 : i32, i32, i32
  }
  func.func @transform_3(%arg0: i32, %arg1: memref<2xi32, #tpu.memory_space<smem>>) -> (i32, i32) {
    %c0_i32 = arith.constant 0 : i32
    %c0_i32_0 = arith.constant 0 : i32
    %c0_i32_1 = arith.constant 0 : i32
    return %c0_i32, %c0_i32_0 : i32, i32
  }
  func.func @transform_4(%arg0: i32, %arg1: memref<2xi32, #tpu.memory_space<smem>>) -> (i32, i32) {
    %c0_i32 = arith.constant 0 : i32
    %c0_i32_0 = arith.constant 0 : i32
    %c0_i32_1 = arith.constant 0 : i32
    return %c0_i32, %c0_i32_0 : i32, i32
  }
  func.func @transform_5(%arg0: i32, %arg1: memref<2xi32, #tpu.memory_space<smem>>) -> (i32, i32) {
    %c0_i32 = arith.constant 0 : i32
    %c0_i32_0 = arith.constant 0 : i32
    %c0_i32_1 = arith.constant 0 : i32
    return %c0_i32, %c0_i32_0 : i32, i32
  }
  func.func @transform_6(%arg0: i32, %arg1: memref<2xi32, #tpu.memory_space<smem>>) -> (i32, i32) {
    %c0_i32 = arith.constant 0 : i32
    %c0_i32_0 = arith.constant 0 : i32
    %c0_i32_1 = arith.constant 0 : i32
    return %c0_i32, %c0_i32_0 : i32, i32
  }
  func.func @transform_7(%arg0: i32, %arg1: memref<2xi32, #tpu.memory_space<smem>>) -> (i32, i32, i32) {
    %c0_i32 = arith.constant 0 : i32
    %c0_i32_0 = arith.constant 0 : i32
    %c0_i32_1 = arith.constant 0 : i32
    %c0_i32_2 = arith.constant 0 : i32
    return %c0_i32, %c0_i32_0, %c0_i32_1 : i32, i32, i32
  }
  func.func @transform_8(%arg0: i32, %arg1: memref<2xi32, #tpu.memory_space<smem>>) -> (i32, i32, i32) {
    %c0_i32 = arith.constant 0 : i32
    %c0_i32_0 = arith.constant 0 : i32
    %c0_i32_1 = arith.constant 0 : i32
    %c0_i32_2 = arith.constant 0 : i32
    return %c0_i32, %c0_i32_0, %c0_i32_1 : i32, i32, i32
  }
  func.func @transform_9(%arg0: i32, %arg1: memref<2xi32, #tpu.memory_space<smem>>) -> (i32, i32, i32) {
    %c0_i32 = arith.constant 0 : i32
    %c0_i32_0 = arith.constant 0 : i32
    %c0_i32_1 = arith.constant 0 : i32
    %c0_i32_2 = arith.constant 0 : i32
    return %c0_i32, %c0_i32_0, %c0_i32_1 : i32, i32, i32
  }
  func.func @transform_10(%arg0: i32, %arg1: memref<2xi32, #tpu.memory_space<smem>>) -> (i32, i32) {
    %c0_i32 = arith.constant 0 : i32
    %c0_i32_0 = arith.constant 0 : i32
    %c0_i32_1 = arith.constant 0 : i32
    return %c0_i32, %c0_i32_0 : i32, i32
  }
  func.func @transform_11(%arg0: i32, %arg1: memref<2xi32, #tpu.memory_space<smem>>) -> (i32, i32) {
    %c0_i32 = arith.constant 0 : i32
    %c0_i32_0 = arith.constant 0 : i32
    %c0_i32_1 = arith.constant 0 : i32
    return %c0_i32, %c0_i32_0 : i32, i32
  }
  func.func @transform_12(%arg0: i32, %arg1: memref<2xi32, #tpu.memory_space<smem>>) -> (i32, i32, i32) {
    %c0_i32 = arith.constant 0 : i32
    %c0_i32_0 = arith.constant 0 : i32
    %c0_i32_1 = arith.constant 0 : i32
    return %arg0, %c0_i32, %c0_i32_0 : i32, i32, i32
  }
}

</mosaic_0001>

<llo_original>
// kernel: tpu_custom_call.1
$region0: #{tpu_custom_call.1}
  #allocation0 [shape = 'u32[]', space=smem, size = 0x4, offset = 0x4, fixed_abs, tag = 'smem constant byte address 0x4 - core index']
  #allocation1 [shape = 'u32[144,128]{1,0:T(1,128)}', space=vmem, size = 0x12000, scoped, tag = 'internal scratch']
  #allocation2 [shape = 'bf16[32,384]{1,0:T(16,128)(2,1)}', space=vmem, size = 0x6000, scoped, tag = 'scratch operand']
  #allocation3 [shape = 'bf16[160,128]{1,0:T(16,128)(2,1)}', space=vmem, size = 0xa000, scoped, tag = 'scratch operand']
  #allocation4 [shape = 's32[1]{0}', space=sflag, size = 0x4, scoped, tag = 'scoped memory for tpu_custom_call.1']
  #allocation5 [shape = 'u8[512]{0}', space=smem, size = 0x200, scoped, tag = 'prefetched SMEM operand 0']
  %s0 = inlined_call_operand.hbm [shape: s32[2], index: 0, kind: input, shape index: {}]
  %s1 = inlined_call_operand.hbm [shape: bf16[2,8,128], index: 1, kind: input, shape index: {}]
  %s2 = inlined_call_operand.hbm [shape: bf16[2,16,128], index: 2, kind: input, shape index: {}]
  %s3 = inlined_call_operand.hbm [shape: f32[2,8,128], index: 3, kind: input, shape index: {}]
  %s4 = inlined_call_operand.hbm [shape: bf16[32,8], index: 4, kind: input, shape index: {}]
  %s5 = inlined_call_operand.hbm [shape: f32[32,1], index: 5, kind: input, shape index: {}]
  %s6 = inlined_call_operand.hbm [shape: bf16[256,16], index: 6, kind: input, shape index: {}]
  %s7 = inlined_call_operand.hbm [shape: f32[256,1], index: 7, kind: input, shape index: {}]
  %s8 = inlined_call_operand.hbm [shape: bf16[4,64,160], index: 8, kind: input, shape index: {}]
  %s9 = inlined_call_operand.hbm [shape: bf16[4,64,32], index: 9, kind: input, shape index: {}]
  %s10 = inlined_call_operand.hbm [shape: f32[4,64,1], index: 10, kind: input, shape index: {}]
  %s11 = inlined_call_operand.hbm [shape: bf16[16,32], index: 11, kind: input, shape index: {}]
  %s12 = inlined_call_operand.hbm [shape: f32[16,1], index: 12, kind: input, shape index: {}]
  %s13 = inlined_call_operand.hbm [shape: f32[2,24,128], index: 13, kind: output, shape index: {}]
  %s14 = sld [smem:[#allocation0]]
  $region129: #{tpu_custom_call.1} parent=0
    _
  %s16 = ssub.s32 1, %s14
  %s17 = scalar_select 0, %s16, %s14
  %19 = dma.hbm_to_smem %s0, 16, [#allocation5], [#allocation4]
  %20 = dma.done [#allocation4], 16
  %21 = sfence
  $region1: #{tpu_custom_call.1} parent=0
    #allocation6 [shape = 'u8[4096]{0}', space=vmem, size = 0x1000, scoped, tag = 'input window, operand 1']
    #allocation7 [shape = 's32[2]{0}', space=sflag, size = 0x8, scoped, tag = 'scoped memory for tpu_custom_call.1']
    #allocation8 [shape = 's32[2]{0}', space=sflag, size = 0x8, scoped, tag = 'scoped memory for tpu_custom_call.1']
    #allocation9 [shape = 'u8[8192]{0}', space=vmem, size = 0x2000, scoped, tag = 'input window, operand 2']
    #allocation10 [shape = 's32[2]{0}', space=sflag, size = 0x8, scoped, tag = 'scoped memory for tpu_custom_call.1']
    #allocation11 [shape = 'u8[8192]{0}', space=vmem, size = 0x2000, scoped, tag = 'input window, operand 3']
    #allocation12 [shape = 'u8[8192]{0}', space=vmem, size = 0x2000, scoped, tag = 'input window, operand 4, single buffered']
    #allocation13 [shape = 's32[1]{0}', space=sflag, size = 0x4, scoped, tag = 'scoped memory for tpu_custom_call.1']
    #allocation14 [shape = 'u8[16384]{0}', space=vmem, size = 0x4000, scoped, tag = 'input window, operand 5, single buffered']
    #allocation15 [shape = 'u8[65536]{0}', space=vmem, size = 0x10000, scoped, tag = 'input window, operand 6, single buffered']
    #allocation16 [shape = 's32[1]{0}', space=sflag, size = 0x4, scoped, tag = 'scoped memory for tpu_custom_call.1']
    #allocation17 [shape = 'u8[131072]{0}', space=vmem, size = 0x20000, scoped, tag = 'input window, operand 7, single buffered']
    #allocation18 [shape = 'u8[131072]{0}', space=vmem, size = 0x20000, scoped, tag = 'input window, operand 8, single buffered']
    #allocation19 [shape = 's32[1]{0}', space=sflag, size = 0x4, scoped, tag = 'scoped memory for tpu_custom_call.1']
    #allocation20 [shape = 'u8[65536]{0}', space=vmem, size = 0x10000, scoped, tag = 'input window, operand 9, single buffered']
    #allocation21 [shape = 'u8[131072]{0}', space=vmem, size = 0x20000, scoped, tag = 'input window, operand 10, single buffered']
    #allocation22 [shape = 's32[1]{0}', space=sflag, size = 0x4, scoped, tag = 'scoped memory for tpu_custom_call.1']
    #allocation23 [shape = 'u8[4096]{0}', space=vmem, size = 0x1000, scoped, tag = 'input window, operand 11, single buffered']
    #allocation24 [shape = 'u8[8192]{0}', space=vmem, size = 0x2000, scoped, tag = 'input window, operand 12, single buffered']
    #allocation25 [shape = 's32[1]{0}', space=sflag, size = 0x4, scoped, tag = 'scoped memory for tpu_custom_call.1']
    #allocation26 [shape = 'u8[24576]{0}', space=vmem, size = 0x6000, scoped, tag = 'output window, operand 0']
    %22 = vsyncpa [#allocation7], 0
    %s23 = scalar_lea.sflag [#allocation7], 1
    %24 = vsyncpa %s23, 0
    %25 = vsyncpa [#allocation10], 0
    %s26 = scalar_lea.sflag [#allocation10], 1
    %27 = vsyncpa %s26, 0
    %28 = vsyncpa [#allocation13], 0
    %29 = vsyncpa [#allocation16], 0
    %30 = vsyncpa [#allocation19], 0
    %31 = vsyncpa [#allocation22], 0
    %32 = vsyncpa [#allocation25], 0
    %33 = vsyncpa [#allocation8], 0
    %s34 = scalar_lea.sflag [#allocation8], 1
    %35 = vsyncpa %s34, 0
    loop: start=0, step=1, limit=4
    $region2: #{tpu_custom_call.1} parent=1 // loop_pre_header
      _
    $region3: #{tpu_custom_call.1} parent=1 // loop_header
      %s37 = sphi 0, %s41
      %p38 = scmp.ge.s32.totalorder %s37, 4
      %s47 = sphi 0, %s49
      %s50 = sphi 0, %s47
      %s51 = sphi 0, %s50
      %s67 = sphi 0, %s51
      %s73 = sphi 0, %s75
      %s76 = sphi 0, %s73
      %s77 = sphi 0, %s76
      %s93 = sphi 0, %s77
      %s99 = sphi 0, %s101
      %s102 = sphi 0, %s99
      %s103 = sphi 0, %s102
      %s119 = sphi 0, %s103
      %s123 = sphi 0, %s123
      %s125 = sphi 0, %s123
      %s126 = sphi 0, %s125
      %s140 = sphi 0, %s126
      %s144 = sphi 0, %s144
      %s146 = sphi 0, %s144
      %s147 = sphi 0, %s146
      %s161 = sphi 0, %s147
      %s165 = sphi 0, %s165
      %s167 = sphi 0, %s165
      %s168 = sphi 0, %s167
      %s182 = sphi 0, %s168
      %s186 = sphi 0, %s186
      %s188 = sphi 0, %s186
      %s189 = sphi 0, %s188
      %s203 = sphi 0, %s189
      %s207 = sphi 0, %s207
      %s209 = sphi 0, %s207
      %s210 = sphi 0, %s209
      %s224 = sphi 0, %s210
      %s228 = sphi 0, %s228
      %s230 = sphi 0, %s228
      %s231 = sphi 0, %s230
      %s245 = sphi 0, %s231
      %s249 = sphi 0, %s249
      %s251 = sphi 0, %s249
      %s252 = sphi 0, %s251
      %s266 = sphi 0, %s252
      %s270 = sphi 0, %s270
      %s272 = sphi 0, %s270
      %s273 = sphi 0, %s272
      %s287 = sphi 0, %s273
      %s291 = sphi 0, %s291
      %s293 = sphi 0, %s291
      %s294 = sphi 0, %s293
      %s308 = sphi 0, %s294
      %s314 = sphi 0, %s316
      %s317 = sphi 0, %s314
      %s318 = sphi 0, %s317
      %s334 = sphi 0, %s318
    $region4: #{tpu_custom_call.1} parent=1 // loop_header_branch
      %40 = sbr.rel (%p38) target = $region8
    $region5: #{tpu_custom_call.1} parent=1 // loop_body
      %s42 = ssub.s32 %s37, 1
      %s43 = ssub.s32 %s37, 2
      %s44 = sadd.s32 %s37, 1
      %s45 = ssub.s32 %s37, %s44
      %p46 = scmp.eq.s32.totalorder %s45, 0
      %s48 = sadd.s32 %s47, 1
      %s49 = scalar_select %p46, %s47, %s48
      %p52 = pneg %p46
      %p53 = scmp.eq.s32.totalorder %s37, 1
      %p54 = por %p52, %p53
      %p55 = scmp.ne.s32.totalorder %s47, %s50
      %p56 = scmp.eq.s32.totalorder %s37, 0
      %p57 = por %p55, %p56
      %p58 = scmp.ne.s32.totalorder %s47, %s50
      %p59 = scmp.eq.s32.totalorder %s42, 1
      %p60 = por %p58, %p59
      %p61 = scmp.ne.s32.totalorder %s50, %s51
      %p62 = scmp.eq.s32.totalorder %s42, 0
      %p63 = por %p61, %p62
      %p64 = scmp.ne.s32.totalorder %s50, %s51
      %p65 = scmp.eq.s32.totalorder %s43, 1
      %p66 = por %p64, %p65
      %p68 = scmp.ne.s32.totalorder %s51, %s67
      %p69 = scmp.eq.s32.totalorder %s43, 0
      %p70 = por %p68, %p69
      %s71 = ssub.s32 %s37, %s44
      %p72 = scmp.eq.s32.totalorder %s71, 0
      %s74 = sadd.s32 %s73, 1
      %s75 = scalar_select %p72, %s73, %s74
      %p78 = pneg %p72
      %p79 = scmp.eq.s32.totalorder %s37, 1
      %p80 = por %p78, %p79
      %p81 = scmp.ne.s32.totalorder %s73, %s76
      %p82 = scmp.eq.s32.totalorder %s37, 0
      %p83 = por %p81, %p82
      %p84 = scmp.ne.s32.totalorder %s73, %s76
      %p85 = scmp.eq.s32.totalorder %s42, 1
      %p86 = por %p84, %p85
      %p87 = scmp.ne.s32.totalorder %s76, %s77
      %p88 = scmp.eq.s32.totalorder %s42, 0
      %p89 = por %p87, %p88
      %p90 = scmp.ne.s32.totalorder %s76, %s77
      %p91 = scmp.eq.s32.totalorder %s43, 1
      %p92 = por %p90, %p91
      %p94 = scmp.ne.s32.totalorder %s77, %s93
      %p95 = scmp.eq.s32.totalorder %s43, 0
      %p96 = por %p94, %p95
      %s97 = ssub.s32 %s37, %s44
      %p98 = scmp.eq.s32.totalorder %s97, 0
      %s100 = sadd.s32 %s99, 1
      %s101 = scalar_select %p98, %s99, %s100
      %p104 = pneg %p98
      %p105 = scmp.eq.s32.totalorder %s37, 1
      %p106 = por %p104, %p105
      %p107 = scmp.ne.s32.totalorder %s99, %s102
      %p108 = scmp.eq.s32.totalorder %s37, 0
      %p109 = por %p107, %p108
      %p110 = scmp.ne.s32.totalorder %s99, %s102
      %p111 = scmp.eq.s32.totalorder %s42, 1
      %p112 = por %p110, %p111
      %p113 = scmp.ne.s32.totalorder %s102, %s103
      %p114 = scmp.eq.s32.totalorder %s42, 0
      %p115 = por %p113, %p114
      %p116 = scmp.ne.s32.totalorder %s102, %s103
      %p117 = scmp.eq.s32.totalorder %s43, 1
      %p118 = por %p116, %p117
      %p120 = scmp.ne.s32.totalorder %s103, %s119
      %p121 = scmp.eq.s32.totalorder %s43, 0
      %p122 = por %p120, %p121
      %s124 = sadd.s32 %s123, 1
      %p127 = scmp.eq.s32.totalorder %s37, 1
      %p128 = scmp.ne.s32.totalorder %s123, %s125
      %p129 = scmp.eq.s32.totalorder %s37, 0
      %p130 = por %p128, %p129
      %p131 = scmp.ne.s32.totalorder %s123, %s125
      %p132 = scmp.eq.s32.totalorder %s42, 1
      %p133 = por %p131, %p132
      %p134 = scmp.ne.s32.totalorder %s125, %s126
      %p135 = scmp.eq.s32.totalorder %s42, 0
      %p136 = por %p134, %p135
      %p137 = scmp.ne.s32.totalorder %s125, %s126
      %p138 = scmp.eq.s32.totalorder %s43, 1
      %p139 = por %p137, %p138
      %p141 = scmp.ne.s32.totalorder %s126, %s140
      %p142 = scmp.eq.s32.totalorder %s43, 0
      %p143 = por %p141, %p142
      %s145 = sadd.s32 %s144, 1
      %p148 = scmp.eq.s32.totalorder %s37, 1
      %p149 = scmp.ne.s32.totalorder %s144, %s146
      %p150 = scmp.eq.s32.totalorder %s37, 0
      %p151 = por %p149, %p150
      %p152 = scmp.ne.s32.totalorder %s144, %s146
      %p153 = scmp.eq.s32.totalorder %s42, 1
      %p154 = por %p152, %p153
      %p155 = scmp.ne.s32.totalorder %s146, %s147
      %p156 = scmp.eq.s32.totalorder %s42, 0
      %p157 = por %p155, %p156
      %p158 = scmp.ne.s32.totalorder %s146, %s147
      %p159 = scmp.eq.s32.totalorder %s43, 1
      %p160 = por %p158, %p159
      %p162 = scmp.ne.s32.totalorder %s147, %s161
      %p163 = scmp.eq.s32.totalorder %s43, 0
      %p164 = por %p162, %p163
      %s166 = sadd.s32 %s165, 1
      %p169 = scmp.eq.s32.totalorder %s37, 1
      %p170 = scmp.ne.s32.totalorder %s165, %s167
      %p171 = scmp.eq.s32.totalorder %s37, 0
      %p172 = por %p170, %p171
      %p173 = scmp.ne.s32.totalorder %s165, %s167
      %p174 = scmp.eq.s32.totalorder %s42, 1
      %p175 = por %p173, %p174
      %p176 = scmp.ne.s32.totalorder %s167, %s168
      %p177 = scmp.eq.s32.totalorder %s42, 0
      %p178 = por %p176, %p177
      %p179 = scmp.ne.s32.totalorder %s167, %s168
      %p180 = scmp.eq.s32.totalorder %s43, 1
      %p181 = por %p179, %p180
      %p183 = scmp.ne.s32.totalorder %s168, %s182
      %p184 = scmp.eq.s32.totalorder %s43, 0
      %p185 = por %p183, %p184
      %s187 = sadd.s32 %s186, 1
      %p190 = scmp.eq.s32.totalorder %s37, 1
      %p191 = scmp.ne.s32.totalorder %s186, %s188
      %p192 = scmp.eq.s32.totalorder %s37, 0
      %p193 = por %p191, %p192
      %p194 = scmp.ne.s32.totalorder %s186, %s188
      %p195 = scmp.eq.s32.totalorder %s42, 1
      %p196 = por %p194, %p195
      %p197 = scmp.ne.s32.totalorder %s188, %s189
      %p198 = scmp.eq.s32.totalorder %s42, 0
      %p199 = por %p197, %p198
      %p200 = scmp.ne.s32.totalorder %s188, %s189
      %p201 = scmp.eq.s32.totalorder %s43, 1
      %p202 = por %p200, %p201
      %p204 = scmp.ne.s32.totalorder %s189, %s203
      %p205 = scmp.eq.s32.totalorder %s43, 0
      %p206 = por %p204, %p205
      %s208 = sadd.s32 %s207, 1
      %p211 = scmp.eq.s32.totalorder %s37, 1
      %p212 = scmp.ne.s32.totalorder %s207, %s209
      %p213 = scmp.eq.s32.totalorder %s37, 0
      %p214 = por %p212, %p213
      %p215 = scmp.ne.s32.totalorder %s207, %s209
      %p216 = scmp.eq.s32.totalorder %s42, 1
      %p217 = por %p215, %p216
      %p218 = scmp.ne.s32.totalorder %s209, %s210
      %p219 = scmp.eq.s32.totalorder %s42, 0
      %p220 = por %p218, %p219
      %p221 = scmp.ne.s32.totalorder %s209, %s210
      %p222 = scmp.eq.s32.totalorder %s43, 1
      %p223 = por %p221, %p222
      %p225 = scmp.ne.s32.totalorder %s210, %s224
      %p226 = scmp.eq.s32.totalorder %s43, 0
      %p227 = por %p225, %p226
      %s229 = sadd.s32 %s228, 1
      %p232 = scmp.eq.s32.totalorder %s37, 1
      %p233 = scmp.ne.s32.totalorder %s228, %s230
      %p234 = scmp.eq.s32.totalorder %s37, 0
      %p235 = por %p233, %p234
      %p236 = scmp.ne.s32.totalorder %s228, %s230
      %p237 = scmp.eq.s32.totalorder %s42, 1
      %p238 = por %p236, %p237
      %p239 = scmp.ne.s32.totalorder %s230, %s231
      %p240 = scmp.eq.s32.totalorder %s42, 0
      %p241 = por %p239, %p240
      %p242 = scmp.ne.s32.totalorder %s230, %s231
      %p243 = scmp.eq.s32.totalorder %s43, 1
      %p244 = por %p242, %p243
      %p246 = scmp.ne.s32.totalorder %s231, %s245
      %p247 = scmp.eq.s32.totalorder %s43, 0
      %p248 = por %p246, %p247
      %s250 = sadd.s32 %s249, 1
      %p253 = scmp.eq.s32.totalorder %s37, 1
      %p254 = scmp.ne.s32.totalorder %s249, %s251
      %p255 = scmp.eq.s32.totalorder %s37, 0
      %p256 = por %p254, %p255
      %p257 = scmp.ne.s32.totalorder %s249, %s251
      %p258 = scmp.eq.s32.totalorder %s42, 1
      %p259 = por %p257, %p258
      %p260 = scmp.ne.s32.totalorder %s251, %s252
      %p261 = scmp.eq.s32.totalorder %s42, 0
      %p262 = por %p260, %p261
      %p263 = scmp.ne.s32.totalorder %s251, %s252
      %p264 = scmp.eq.s32.totalorder %s43, 1
      %p265 = por %p263, %p264
      %p267 = scmp.ne.s32.totalorder %s252, %s266
      %p268 = scmp.eq.s32.totalorder %s43, 0
      %p269 = por %p267, %p268
      %s271 = sadd.s32 %s270, 1
      %p274 = scmp.eq.s32.totalorder %s37, 1
      %p275 = scmp.ne.s32.totalorder %s270, %s272
      %p276 = scmp.eq.s32.totalorder %s37, 0
      %p277 = por %p275, %p276
      %p278 = scmp.ne.s32.totalorder %s270, %s272
      %p279 = scmp.eq.s32.totalorder %s42, 1
      %p280 = por %p278, %p279
      %p281 = scmp.ne.s32.totalorder %s272, %s273
      %p282 = scmp.eq.s32.totalorder %s42, 0
      %p283 = por %p281, %p282
      %p284 = scmp.ne.s32.totalorder %s272, %s273
      %p285 = scmp.eq.s32.totalorder %s43, 1
      %p286 = por %p284, %p285
      %p288 = scmp.ne.s32.totalorder %s273, %s287
      %p289 = scmp.eq.s32.totalorder %s43, 0
      %p290 = por %p288, %p289
      %s292 = sadd.s32 %s291, 1
      %p295 = scmp.eq.s32.totalorder %s37, 1
      %p296 = scmp.ne.s32.totalorder %s291, %s293
      %p297 = scmp.eq.s32.totalorder %s37, 0
      %p298 = por %p296, %p297
      %p299 = scmp.ne.s32.totalorder %s291, %s293
      %p300 = scmp.eq.s32.totalorder %s42, 1
      %p301 = por %p299, %p300
      %p302 = scmp.ne.s32.totalorder %s293, %s294
      %p303 = scmp.eq.s32.totalorder %s42, 0
      %p304 = por %p302, %p303
      %p305 = scmp.ne.s32.totalorder %s293, %s294
      %p306 = scmp.eq.s32.totalorder %s43, 1
      %p307 = por %p305, %p306
      %p309 = scmp.ne.s32.totalorder %s294, %s308
      %p310 = scmp.eq.s32.totalorder %s43, 0
      %p311 = por %p309, %p310
      %s312 = ssub.s32 %s37, %s44
      %p313 = scmp.eq.s32.totalorder %s312, 0
      %s315 = sadd.s32 %s314, 1
      %s316 = scalar_select %p313, %s314, %s315
      %p319 = pneg %p313
      %p320 = scmp.eq.s32.totalorder %s37, 1
      %p321 = por %p319, %p320
      %p322 = scmp.ne.s32.totalorder %s314, %s317
      %p323 = scmp.eq.s32.totalorder %s37, 0
      %p324 = por %p322, %p323
      %p325 = scmp.ne.s32.totalorder %s314, %s317
      %p326 = scmp.eq.s32.totalorder %s42, 1
      %p327 = por %p325, %p326
      %p328 = scmp.ne.s32.totalorder %s317, %s318
      %p329 = scmp.eq.s32.totalorder %s42, 0
      %p330 = por %p328, %p329
      %p331 = scmp.ne.s32.totalorder %s317, %s318
      %p332 = scmp.eq.s32.totalorder %s43, 1
      %p333 = por %p331, %p332
      %p335 = scmp.ne.s32.totalorder %s318, %s334
      %p336 = scmp.eq.s32.totalorder %s43, 0
      %p337 = por %p335, %p336
      %p338 = scmp.le.s32.totalorder 1, %s37
      %p339 = scmp.lt.s32.totalorder %s37, 3
      %p340 = pnand %p338, %p339
      %p341 = pneg %p340
      // Predicated region
      $region9: #{tpu_custom_call.1} parent=5 // pred_check
        _
      $region10: #{tpu_custom_call.1} parent=5 // pred_check_branch
        %343 = sbr.rel (%p340) target = $region12
      $region11: #{tpu_custom_call.1} parent=5 // pred_region
        %s344 = ssub.s32 %s37, 1
        // Predicated region
        $region13: #{tpu_custom_call.1} parent=11 // pred_check
          %p345 = pneg %p136
        $region14: #{tpu_custom_call.1} parent=11 // pred_check_branch
          %347 = sbr.rel (%p345) target = $region16
        $region15: #{tpu_custom_call.1} parent=11 // pred_region
          %s349 = ssub.s32 256, 256
          %350 = vsyncadd [#allocation13], %s349
          %s351 = sshll.u32 [#allocation12], 4
          %s352 = int_to_ptr.vmem [resolvable:$true] %s351
          %357 = dma.hbm_to_vmem [thread:$0]  %s4, 256, %s352, [#allocation13], 64, 64, 4
        $region16: #{tpu_custom_call.1} parent=11 // pred_fallthru
          _
        // Predicated region
        $region17: #{tpu_custom_call.1} parent=11 // pred_check
          %p358 = pneg %p157
        $region18: #{tpu_custom_call.1} parent=11 // pred_check_branch
          %360 = sbr.rel (%p358) target = $region20
        $region19: #{tpu_custom_call.1} parent=11 // pred_region
          %s362 = ssub.s32 512, 512
          %363 = vsyncadd [#allocation13], %s362
          %s364 = sshll.u32 [#allocation14], 4
          %s365 = int_to_ptr.vmem [resolvable:$true] %s364
          %370 = dma.hbm_to_vmem [thread:$0]  %s5, 512, %s365, [#allocation13], 128, 128, 8
        $region20: #{tpu_custom_call.1} parent=11 // pred_fallthru
          _
        // Predicated region
        $region21: #{tpu_custom_call.1} parent=11 // pred_check
          %p371 = pneg %p178
        $region22: #{tpu_custom_call.1} parent=11 // pred_check_branch
          %373 = sbr.rel (%p371) target = $region24
        $region23: #{tpu_custom_call.1} parent=11 // pred_region
          %s375 = ssub.s32 2048, 2048
          %376 = vsyncadd [#allocation16], %s375
          %s377 = sshll.u32 [#allocation15], 4
          %s378 = int_to_ptr.vmem [resolvable:$true] %s377
          %383 = dma.hbm_to_vmem [thread:$0]  %s6, 2048, %s378, [#allocation16], 64, 64, 4
        $region24: #{tpu_custom_call.1} parent=11 // pred_fallthru
          _
        // Predicated region
        $region25: #{tpu_custom_call.1} parent=11 // pred_check
          %p384 = pneg %p199
        $region26: #{tpu_custom_call.1} parent=11 // pred_check_branch
          %386 = sbr.rel (%p384) target = $region28
        $region27: #{tpu_custom_call.1} parent=11 // pred_region
          %s388 = ssub.s32 4096, 4096
          %389 = vsyncadd [#allocation16], %s388
          %s390 = sshll.u32 [#allocation17], 4
          %s391 = int_to_ptr.vmem [resolvable:$true] %s390
          %396 = dma.hbm_to_vmem [thread:$0]  %s7, 4096, %s391, [#allocation16], 128, 128, 8
        $region28: #{tpu_custom_call.1} parent=11 // pred_fallthru
          _
        // Predicated region
        $region29: #{tpu_custom_call.1} parent=11 // pred_check
          %p397 = pneg %p220
        $region30: #{tpu_custom_call.1} parent=11 // pred_check_branch
          %399 = sbr.rel (%p397) target = $region32
        $region31: #{tpu_custom_call.1} parent=11 // pred_region
          %s401 = ssub.s32 4096, 4096
          %402 = vsyncadd [#allocation19], %s401
          %s403 = sshll.u32 [#allocation18], 4
          %s404 = int_to_ptr.vmem [resolvable:$true] %s403
          %409 = dma.hbm_to_vmem [thread:$0]  %s8, 4096, %s404, [#allocation19], 128, 128, 8
        $region32: #{tpu_custom_call.1} parent=11 // pred_fallthru
          _
        // Predicated region
        $region33: #{tpu_custom_call.1} parent=11 // pred_check
          %p410 = pneg %p241
        $region34: #{tpu_custom_call.1} parent=11 // pred_check_branch
          %412 = sbr.rel (%p410) target = $region36
        $region35: #{tpu_custom_call.1} parent=11 // pred_region
          %s414 = ssub.s32 2048, 2048
          %415 = vsyncadd [#allocation19], %s414
          %s416 = sshll.u32 [#allocation20], 4
          %s417 = int_to_ptr.vmem [resolvable:$true] %s416
          %422 = dma.hbm_to_vmem [thread:$0]  %s9, 2048, %s417, [#allocation19], 64, 64, 4
        $region36: #{tpu_custom_call.1} parent=11 // pred_fallthru
          _
        // Predicated region
        $region37: #{tpu_custom_call.1} parent=11 // pred_check
          %p423 = pneg %p262
        $region38: #{tpu_custom_call.1} parent=11 // pred_check_branch
          %425 = sbr.rel (%p423) target = $region40
        $region39: #{tpu_custom_call.1} parent=11 // pred_region
          %s427 = ssub.s32 4096, 4096
          %428 = vsyncadd [#allocation22], %s427
          %s429 = sshll.u32 [#allocation21], 4
          %s430 = int_to_ptr.vmem [resolvable:$true] %s429
          %435 = dma.hbm_to_vmem [thread:$0]  %s10, 4096, %s430, [#allocation22], 128, 128, 8
        $region40: #{tpu_custom_call.1} parent=11 // pred_fallthru
          _
        // Predicated region
        $region41: #{tpu_custom_call.1} parent=11 // pred_check
          %p436 = pneg %p283
        $region42: #{tpu_custom_call.1} parent=11 // pred_check_branch
          %438 = sbr.rel (%p436) target = $region44
        $region43: #{tpu_custom_call.1} parent=11 // pred_region
          %s440 = ssub.s32 128, 128
          %441 = vsyncadd [#allocation22], %s440
          %s442 = sshll.u32 [#allocation23], 4
          %s443 = int_to_ptr.vmem [resolvable:$true] %s442
          %448 = dma.hbm_to_vmem [thread:$0]  %s11, 128, %s443, [#allocation22], 64, 64, 4
        $region44: #{tpu_custom_call.1} parent=11 // pred_fallthru
          _
        // Predicated region
        $region45: #{tpu_custom_call.1} parent=11 // pred_check
          %p449 = pneg %p304
        $region46: #{tpu_custom_call.1} parent=11 // pred_check_branch
          %451 = sbr.rel (%p449) target = $region48
        $region47: #{tpu_custom_call.1} parent=11 // pred_region
          %s453 = ssub.s32 256, 256
          %454 = vsyncadd [#allocation25], %s453
          %s455 = sshll.u32 [#allocation24], 4
          %s456 = int_to_ptr.vmem [resolvable:$true] %s455
          %461 = dma.hbm_to_vmem [thread:$0]  %s12, 256, %s456, [#allocation25], 128, 128, 8
        $region48: #{tpu_custom_call.1} parent=11 // pred_fallthru
          _
      $region12: #{tpu_custom_call.1} parent=5 // pred_fallthru
        _
      %p462 = scmp.lt.s32.totalorder %s37, 2
      // Predicated region
      $region49: #{tpu_custom_call.1} parent=5 // pred_check
        %p463 = pneg %p462
      $region50: #{tpu_custom_call.1} parent=5 // pred_check_branch
        %465 = sbr.rel (%p463) target = $region52
      $region51: #{tpu_custom_call.1} parent=5 // pred_region
        // Predicated region
        $region53: #{tpu_custom_call.1} parent=51 // pred_check
          %p466 = pneg %p57
        $region54: #{tpu_custom_call.1} parent=51 // pred_check_branch
          %468 = sbr.rel (%p466) target = $region56
        $region55: #{tpu_custom_call.1} parent=51 // pred_region
          %s469 = sand.u32 %s47, 1
          %s470 = scalar_lea.sflag [#allocation7], %s469
          %s471 = sand.u32 %s47, 1
          %s472 = smul.addr %s471, 4
          %s473 = scalar_lea.vmem [#allocation6], %s472
          %s475 = ssub.s32 64, 64
          %476 = vsyncadd %s470, %s475
          %s477 = smul.addr %s37, 64
          %s478 = scalar_lea.hbm %s1, %s477
          %s480 = sshll.u32 %s473, 4
          %s481 = int_to_ptr.vmem [resolvable:$true] %s480
          %483 = dma.hbm_to_vmem [thread:$0]  %s478, 64, %s481, %s470
        $region56: #{tpu_custom_call.1} parent=51 // pred_fallthru
          _
        // Predicated region
        $region57: #{tpu_custom_call.1} parent=51 // pred_check
          %p484 = pneg %p83
        $region58: #{tpu_custom_call.1} parent=51 // pred_check_branch
          %486 = sbr.rel (%p484) target = $region60
        $region59: #{tpu_custom_call.1} parent=51 // pred_region
          %s487 = sand.u32 %s37, 1
          %s488 = scalar_lea.sflag [#allocation10], %s487
          %s489 = sand.u32 %s73, 1
          %s490 = smul.addr %s489, 8
          %s491 = scalar_lea.vmem [#allocation9], %s490
          %s493 = ssub.s32 128, 128
          %494 = vsyncadd %s488, %s493
          %s495 = smul.addr %s37, 2
          %s496 = smul.addr %s495, 64
          %s497 = scalar_lea.hbm %s2, %s496
          %s498 = sshll.u32 %s491, 4
          %s499 = int_to_ptr.vmem [resolvable:$true] %s498
          %504 = dma.hbm_to_vmem [thread:$0]  %s497, 128, %s499, %s488, 64, 64, 4
        $region60: #{tpu_custom_call.1} parent=51 // pred_fallthru
          _
        // Predicated region
        $region61: #{tpu_custom_call.1} parent=51 // pred_check
          %p505 = pneg %p109
        $region62: #{tpu_custom_call.1} parent=51 // pred_check_branch
          %507 = sbr.rel (%p505) target = $region64
        $region63: #{tpu_custom_call.1} parent=51 // pred_region
          %s508 = sand.u32 %s37, 1
          %s509 = scalar_lea.sflag [#allocation10], %s508
          %s510 = sand.u32 %s99, 1
          %s511 = smul.addr %s510, 8
          %s512 = scalar_lea.vmem [#allocation11], %s511
          %s514 = ssub.s32 128, 128
          %515 = vsyncadd %s509, %s514
          %s516 = smul.addr %s37, 128
          %s517 = scalar_lea.hbm %s3, %s516
          %s519 = sshll.u32 %s512, 4
          %s520 = int_to_ptr.vmem [resolvable:$true] %s519
          %522 = dma.hbm_to_vmem [thread:$0]  %s517, 128, %s520, %s509
        $region64: #{tpu_custom_call.1} parent=51 // pred_fallthru
          _
      $region52: #{tpu_custom_call.1} parent=5 // pred_fallthru
        _
      %p523 = scmp.le.s32.totalorder 1, %s37
      %p524 = scmp.lt.s32.totalorder %s37, 3
      %p525 = pnand %p523, %p524
      %p526 = pneg %p525
      // Predicated region
      $region65: #{tpu_custom_call.1} parent=5 // pred_check
        _
      $region66: #{tpu_custom_call.1} parent=5 // pred_check_branch
        %528 = sbr.rel (%p525) target = $region68
      $region67: #{tpu_custom_call.1} parent=5 // pred_region
        %s529 = ssub.s32 %s37, 1
        %s530 = sand.u32 %s50, 1
        %s531 = scalar_lea.sflag [#allocation7], %s530
        %s532 = sand.u32 %s50, 1
        %s533 = smul.addr %s532, 4
        %s534 = scalar_lea.vmem [#allocation6], %s533
        // Predicated region
        $region69: #{tpu_custom_call.1} parent=67 // pred_check
          %p535 = pneg %p63
        $region70: #{tpu_custom_call.1} parent=67 // pred_check_branch
          %537 = sbr.rel (%p535) target = $region72
        $region71: #{tpu_custom_call.1} parent=67 // pred_region
          %538 = dma.done %s531, 64
        $region72: #{tpu_custom_call.1} parent=67 // pred_fallthru
          _
        %s539 = sand.u32 %s42, 1
        %s540 = scalar_lea.sflag [#allocation10], %s539
        %s541 = sand.u32 %s76, 1
        %s542 = smul.addr %s541, 8
        %s543 = scalar_lea.vmem [#allocation9], %s542
        // Predicated region
        $region73: #{tpu_custom_call.1} parent=67 // pred_check
          %p544 = pneg %p89
        $region74: #{tpu_custom_call.1} parent=67 // pred_check_branch
          %546 = sbr.rel (%p544) target = $region76
        $region75: #{tpu_custom_call.1} parent=67 // pred_region
          %547 = dma.done %s540, 128
        $region76: #{tpu_custom_call.1} parent=67 // pred_fallthru
          _
        %s548 = sand.u32 %s42, 1
        %s549 = scalar_lea.sflag [#allocation10], %s548
        %s550 = sand.u32 %s102, 1
        %s551 = smul.addr %s550, 8
        %s552 = scalar_lea.vmem [#allocation11], %s551
        // Predicated region
        $region77: #{tpu_custom_call.1} parent=67 // pred_check
          %p553 = pneg %p115
        $region78: #{tpu_custom_call.1} parent=67 // pred_check_branch
          %555 = sbr.rel (%p553) target = $region80
        $region79: #{tpu_custom_call.1} parent=67 // pred_region
          %556 = dma.done %s549, 128
        $region80: #{tpu_custom_call.1} parent=67 // pred_fallthru
          _
        // Predicated region
        $region81: #{tpu_custom_call.1} parent=67 // pred_check
          %p557 = pneg %p136
        $region82: #{tpu_custom_call.1} parent=67 // pred_check_branch
          %559 = sbr.rel (%p557) target = $region84
        $region83: #{tpu_custom_call.1} parent=67 // pred_region
          %560 = dma.done [#allocation13], 256
        $region84: #{tpu_custom_call.1} parent=67 // pred_fallthru
          _
        // Predicated region
        $region85: #{tpu_custom_call.1} parent=67 // pred_check
          %p561 = pneg %p157
        $region86: #{tpu_custom_call.1} parent=67 // pred_check_branch
          %563 = sbr.rel (%p561) target = $region88
        $region87: #{tpu_custom_call.1} parent=67 // pred_region
          %564 = dma.done [#allocation13], 512
        $region88: #{tpu_custom_call.1} parent=67 // pred_fallthru
          _
        // Predicated region
        $region89: #{tpu_custom_call.1} parent=67 // pred_check
          %p565 = pneg %p178
        $region90: #{tpu_custom_call.1} parent=67 // pred_check_branch
          %567 = sbr.rel (%p565) target = $region92
        $region91: #{tpu_custom_call.1} parent=67 // pred_region
          %568 = dma.done [#allocation16], 2048
        $region92: #{tpu_custom_call.1} parent=67 // pred_fallthru
          _
        // Predicated region
        $region93: #{tpu_custom_call.1} parent=67 // pred_check
          %p569 = pneg %p199
        $region94: #{tpu_custom_call.1} parent=67 // pred_check_branch
          %571 = sbr.rel (%p569) target = $region96
        $region95: #{tpu_custom_call.1} parent=67 // pred_region
          %572 = dma.done [#allocation16], 4096
        $region96: #{tpu_custom_call.1} parent=67 // pred_fallthru
          _
        // Predicated region
        $region97: #{tpu_custom_call.1} parent=67 // pred_check
          %p573 = pneg %p220
        $region98: #{tpu_custom_call.1} parent=67 // pred_check_branch
          %575 = sbr.rel (%p573) target = $region100
        $region99: #{tpu_custom_call.1} parent=67 // pred_region
          %576 = dma.done [#allocation19], 4096
        $region100: #{tpu_custom_call.1} parent=67 // pred_fallthru
          _
        // Predicated region
        $region101: #{tpu_custom_call.1} parent=67 // pred_check
          %p577 = pneg %p241
        $region102: #{tpu_custom_call.1} parent=67 // pred_check_branch
          %579 = sbr.rel (%p577) target = $region104
        $region103: #{tpu_custom_call.1} parent=67 // pred_region
          %580 = dma.done [#allocation19], 2048
        $region104: #{tpu_custom_call.1} parent=67 // pred_fallthru
          _
        // Predicated region
        $region105: #{tpu_custom_call.1} parent=67 // pred_check
          %p581 = pneg %p262
        $region106: #{tpu_custom_call.1} parent=67 // pred_check_branch
          %583 = sbr.rel (%p581) target = $region108
        $region107: #{tpu_custom_call.1} parent=67 // pred_region
          %584 = dma.done [#allocation22], 4096
        $region108: #{tpu_custom_call.1} parent=67 // pred_fallthru
          _
        // Predicated region
        $region109: #{tpu_custom_call.1} parent=67 // pred_check
          %p585 = pneg %p283
        $region110: #{tpu_custom_call.1} parent=67 // pred_check_branch
          %587 = sbr.rel (%p585) target = $region112
        $region111: #{tpu_custom_call.1} parent=67 // pred_region
          %588 = dma.done [#allocation22], 128
        $region112: #{tpu_custom_call.1} parent=67 // pred_fallthru
          _
        // Predicated region
        $region113: #{tpu_custom_call.1} parent=67 // pred_check
          %p589 = pneg %p304
        $region114: #{tpu_custom_call.1} parent=67 // pred_check_branch
          %591 = sbr.rel (%p589) target = $region116
        $region115: #{tpu_custom_call.1} parent=67 // pred_region
          %592 = dma.done [#allocation25], 256
        $region116: #{tpu_custom_call.1} parent=67 // pred_fallthru
          _
        %s593 = sand.u32 %s50, 1
        %s594 = scalar_lea.sflag [#allocation7], %s593
        %s595 = sand.u32 %s50, 1
        %s596 = smul.addr %s595, 4
        %s597 = scalar_lea.vmem [#allocation6], %s596
        %p598 = pneg %p63
        %p599 = pneg %p60
        %s600 = sand.u32 %s42, 1
        %s601 = scalar_lea.sflag [#allocation10], %s600
        %s602 = sand.u32 %s76, 1
        %s603 = smul.addr %s602, 8
        %s604 = scalar_lea.vmem [#allocation9], %s603
        %p605 = pneg %p89
        %p606 = pneg %p86
        %s607 = sand.u32 %s42, 1
        %s608 = scalar_lea.sflag [#allocation10], %s607
        %s609 = sand.u32 %s102, 1
        %s610 = smul.addr %s609, 8
        %s611 = scalar_lea.vmem [#allocation11], %s610
        %p612 = pneg %p115
        %p613 = pneg %p112
        %p614 = pneg %p136
        %p615 = pneg %p133
        %p616 = pneg %p157
        %p617 = pneg %p154
        %p618 = pneg %p178
        %p619 = pneg %p175
        %p620 = pneg %p199
        %p621 = pneg %p196
        %p622 = pneg %p220
        %p623 = pneg %p217
        %p624 = pneg %p241
        %p625 = pneg %p238
        %p626 = pneg %p262
        %p627 = pneg %p259
        %p628 = pneg %p283
        %p629 = pneg %p280
        %p630 = pneg %p304
        %p631 = pneg %p301
        %p632 = pneg %p330
        %p633 = pneg %p327
        %s634 = sand.u32 %s317, 1
        %s635 = scalar_lea.sflag [#allocation8], %s634
        %s636 = sand.u32 %s317, 1
        %s637 = smul.addr %s636, 24
        %s638 = scalar_lea.vmem [#allocation26], %s637
        %s640 = sld [smem:[#allocation5 + %s42]]
        %v641 = vlaneseq
        %v642 = vand.u32 %v641, 127
        %v643 = vstv %s640
        %vm644 = vcmp.lt.s32.totalorder %v642, %v643
        %v645 = vsel %vm644, 1, 0
        %v646 = vcvt.s32.f32 %v645
        %vm647 = vcmask 1048448
        %648 = vst.msk [vmem:[#allocation2] sm:$0xff] %vm647, 0
        %649 = vst.msk [vmem:[#allocation2 + $0x18] sm:$0xff] %vm647, 0
        %vm650 = vcmask 130048
        %651 = vst.msk [vmem:[#allocation2 + $0x10] sm:$0xff] %vm650, 0
        %652 = vst.msk [vmem:[#allocation2 + $0x28] sm:$0xff] %vm650, 0
        %v653 = vld [vmem:[#allocation12] sm:$0xf]
        %v654 = vld [vmem:[#allocation12 + $0x4] sm:$0xf]
        %v655 = vld [vmem:[#allocation12 + $0x8] sm:$0xf]
        %v656 = vld [vmem:[#allocation12 + $0xc] sm:$0xf]
        %v657 = vld [vmem:[%s534] sm:$0xf]
        %v658 = vld [vmem:[#allocation14] sm:$0xff]
        %v659 = vld [vmem:[#allocation14 + $0x8] sm:$0xff]
        %v660 = vld [vmem:[#allocation14 + $0x10] sm:$0xff]
        %v661 = vld [vmem:[#allocation14 + $0x18] sm:$0xff]
        %663 = vset.pattern.permute.xlu0 0
        %664 = vperm.xlu0 %663, %v658
        %v665 = vpop.permute.xlu0 %664
        %668 = vset.pattern.permute.xlu0 0
        %669 = vperm.xlu0 %668, %v659
        %v670 = vpop.permute.xlu0 %669
        %673 = vset.pattern.permute.xlu0 0
        %674 = vperm.xlu0 %673, %v660
        %v675 = vpop.permute.xlu0 %674
        %678 = vset.pattern.permute.xlu0 0
        %679 = vperm.xlu0 %678, %v661
        %v680 = vpop.permute.xlu0 %679
        %v686 = vunpack.c.l.b16 %v653
        %v687 = vunpack.c.l.b16 %v654
        %v688 = vunpack.c.l.b16 %v655
        %v689 = vunpack.c.l.b16 %v656
        %v690 = vpack.c.b16 %v687, %v686
        %v691 = vpack.c.b16 %v689, %v688
        %vm692 = vcmask 64512
        %v694 = vsel %vm692, %v690, 0
        %v697 = vsel %vm692, %v691, 0
        %vm699 = vcmask 1043456
        %v701 = vsel %vm699, %v657, 0
        %703 = vmatprep.subr.bf16.mxu0 0
        %704 = vmatpush1.bf16.msra.mxu0 %v701
        %705 = vmatprep.subr.bf16.mxu0 0
        %706 = vmatpush1.bf16.msra.mxu0 0
        %707 = vmatprep.subr.bf16.mxu0 0
        %708 = vmatpush1.bf16.msra.mxu0 0
        %709 = vmatprep.subr.bf16.mxu0 0
        %710 = vmatpush1.bf16.msra.mxu0 0
        %711 = vmatprep.subr.bf16.mxu0 0
        %712 = vmatpush1.bf16.msra.mxu0 0
        %713 = vmatprep.subr.bf16.mxu0 0
        %714 = vmatpush1.bf16.msra.mxu0 0
        %715 = vmatprep.subr.bf16.mxu0 0
        %716 = vmatpush1.bf16.msra.mxu0 0
        %717 = vmatprep.subr.bf16.mxu0 0
        %718 = vmatpush1.bf16.msra.mxu0 0
        %719 = vmatprep.subr.bf16.mxu0 0
        %720 = vmatpush1.bf16.msra.mxu0 0
        %721 = vmatprep.subr.bf16.mxu0 0
        %722 = vmatpush1.bf16.msra.mxu0 0
        %723 = vmatprep.subr.bf16.mxu0 0
        %724 = vmatpush1.bf16.msra.mxu0 0
        %725 = vmatprep.subr.bf16.mxu0 0
        %726 = vmatpush1.bf16.msra.mxu0 0
        %727 = vmatprep.subr.bf16.mxu0 0
        %728 = vmatpush1.bf16.msra.mxu0 0
        %729 = vmatprep.subr.bf16.mxu0 0
        %730 = vmatpush1.bf16.msra.mxu0 0
        %731 = vmatprep.subr.bf16.mxu0 0
        %732 = vmatpush1.bf16.msra.mxu0 0
        %733 = vmatprep.subr.bf16.mxu0 0
        %734 = vmatpush1.bf16.msra.mxu0 0
        %735 = vmatprep.mubr.bf16.mxu0 0
        %736 = vmatmul.mubr.bf16.gmra.mrb[0].mxu0 %v694
        %v737 = vpop.f32.mrb[0].mxu0
        %v738 = vadd.f32 %v665, %v737
        %v739 = vpop.f32.mrb[0].mxu0
        %v740 = vpop.f32.mrb[0].mxu0
        %v741 = vadd.f32 %v670, %v740
        %v742 = vpop.f32.mrb[0].mxu0
        %743 = vmatprep.mubr.bf16.mxu0 0
        %744 = vmatmul.mubr.bf16.gmra.mrb[0].mxu0 %v697
        %v745 = vpop.f32.mrb[0].mxu0
        %v746 = vadd.f32 %v675, %v745
        %v747 = vpop.f32.mrb[0].mxu0
        %v748 = vpop.f32.mrb[0].mxu0
        %v749 = vadd.f32 %v680, %v748
        %v750 = vpop.f32.mrb[0].mxu0
        %751 = vdwg.mxu0
        %v752 = vmul.f32 %v738, %v646
        %v753 = vmul.f32 %v741, %v646
        %v754 = vmul.f32 %v746, %v646
        %v755 = vmul.f32 %v749, %v646
        %v756 = vld [vmem:[#allocation15] sm:$0xf]
        %v757 = vld [vmem:[#allocation15 + $0x4] sm:$0xf]
        %v758 = vld [vmem:[#allocation15 + $0x8] sm:$0xf]
        %v759 = vld [vmem:[#allocation15 + $0xc] sm:$0xf]
        %v760 = vld [vmem:[#allocation15 + $0x10] sm:$0xf]
        %v761 = vld [vmem:[#allocation15 + $0x14] sm:$0xf]
        %v762 = vld [vmem:[#allocation15 + $0x18] sm:$0xf]
        %v763 = vld [vmem:[#allocation15 + $0x1c] sm:$0xf]
        %v764 = vld [vmem:[#allocation15 + $0x20] sm:$0xf]
        %v765 = vld [vmem:[#allocation15 + $0x24] sm:$0xf]
        %v766 = vld [vmem:[#allocation15 + $0x28] sm:$0xf]
        %v767 = vld [vmem:[#allocation15 + $0x2c] sm:$0xf]
        %v768 = vld [vmem:[#allocation15 + $0x30] sm:$0xf]
        %v769 = vld [vmem:[#allocation15 + $0x34] sm:$0xf]
        %v770 = vld [vmem:[#allocation15 + $0x38] sm:$0xf]
        %v771 = vld [vmem:[#allocation15 + $0x3c] sm:$0xf]
        %v772 = vld [vmem:[#allocation15 + $0x40] sm:$0xf]
        %v773 = vld [vmem:[#allocation15 + $0x44] sm:$0xf]
        %v774 = vld [vmem:[#allocation15 + $0x48] sm:$0xf]
        %v775 = vld [vmem:[#allocation15 + $0x4c] sm:$0xf]
        %v776 = vld [vmem:[#allocation15 + $0x50] sm:$0xf]
        %v777 = vld [vmem:[#allocation15 + $0x54] sm:$0xf]
        %v778 = vld [vmem:[#allocation15 + $0x58] sm:$0xf]
        %v779 = vld [vmem:[#allocation15 + $0x5c] sm:$0xf]
        %v780 = vld [vmem:[#allocation15 + $0x60] sm:$0xf]
        %v781 = vld [vmem:[#allocation15 + $0x64] sm:$0xf]
        %v782 = vld [vmem:[#allocation15 + $0x68] sm:$0xf]
        %v783 = vld [vmem:[#allocation15 + $0x6c] sm:$0xf]
        %v784 = vld [vmem:[#allocation15 + $0x70] sm:$0xf]
        %v785 = vld [vmem:[#allocation15 + $0x74] sm:$0xf]
        %v786 = vld [vmem:[#allocation15 + $0x78] sm:$0xf]
        %v787 = vld [vmem:[#allocation15 + $0x7c] sm:$0xf]
        %v788 = vld [vmem:[%s543] sm:$0xf]
        %v789 = vld [vmem:[%s543 + $0x4] sm:$0xf]
        %v790 = vld [vmem:[#allocation17] sm:$0xff]
        %v791 = vld [vmem:[#allocation17 + $0x8] sm:$0xff]
        %v792 = vld [vmem:[#allocation17 + $0x10] sm:$0xff]
        %v793 = vld [vmem:[#allocation17 + $0x18] sm:$0xff]
        %v794 = vld [vmem:[#allocation17 + $0x20] sm:$0xff]
        %v795 = vld [vmem:[#allocation17 + $0x28] sm:$0xff]
        %v796 = vld [vmem:[#allocation17 + $0x30] sm:$0xff]
        %v797 = vld [vmem:[#allocation17 + $0x38] sm:$0xff]
        %v798 = vld [vmem:[#allocation17 + $0x40] sm:$0xff]
        %v799 = vld [vmem:[#allocation17 + $0x48] sm:$0xff]
        %v800 = vld [vmem:[#allocation17 + $0x50] sm:$0xff]
        %v801 = vld [vmem:[#allocation17 + $0x58] sm:$0xff]
        %v802 = vld [vmem:[#allocation17 + $0x60] sm:$0xff]
        %v803 = vld [vmem:[#allocation17 + $0x68] sm:$0xff]
        %v804 = vld [vmem:[#allocation17 + $0x70] sm:$0xff]
        %v805 = vld [vmem:[#allocation17 + $0x78] sm:$0xff]
        %v806 = vld [vmem:[#allocation17 + $0x80] sm:$0xff]
        %v807 = vld [vmem:[#allocation17 + $0x88] sm:$0xff]
        %v808 = vld [vmem:[#allocation17 + $0x90] sm:$0xff]
        %v809 = vld [vmem:[#allocation17 + $0x98] sm:$0xff]
        %v810 = vld [vmem:[#allocation17 + $0xa0] sm:$0xff]
        %v811 = vld [vmem:[#allocation17 + $0xa8] sm:$0xff]
        %v812 = vld [vmem:[#allocation17 + $0xb0] sm:$0xff]
        %v813 = vld [vmem:[#allocation17 + $0xb8] sm:$0xff]
        %v814 = vld [vmem:[#allocation17 + $0xc0] sm:$0xff]
        %v815 = vld [vmem:[#allocation17 + $0xc8] sm:$0xff]
        %v816 = vld [vmem:[#allocation17 + $0xd0] sm:$0xff]
        %v817 = vld [vmem:[#allocation17 + $0xd8] sm:$0xff]
        %v818 = vld [vmem:[#allocation17 + $0xe0] sm:$0xff]
        %v819 = vld [vmem:[#allocation17 + $0xe8] sm:$0xff]
        %v820 = vld [vmem:[#allocation17 + $0xf0] sm:$0xff]
        %v821 = vld [vmem:[#allocation17 + $0xf8] sm:$0xff]
        %823 = vset.pattern.permute.xlu0 0
        %824 = vperm.xlu0 %823, %v790
        %v825 = vpop.permute.xlu0 %824
        %828 = vset.pattern.permute.xlu0 0
        %829 = vperm.xlu0 %828, %v791
        %v830 = vpop.permute.xlu0 %829
        %833 = vset.pattern.permute.xlu0 0
        %834 = vperm.xlu0 %833, %v792
        %v835 = vpop.permute.xlu0 %834
        %838 = vset.pattern.permute.xlu0 0
        %839 = vperm.xlu0 %838, %v793
        %v840 = vpop.permute.xlu0 %839
        %843 = vset.pattern.permute.xlu0 0
        %844 = vperm.xlu0 %843, %v794
        %v845 = vpop.permute.xlu0 %844
        %848 = vset.pattern.permute.xlu0 0
        %849 = vperm.xlu0 %848, %v795
        %v850 = vpop.permute.xlu0 %849
        %853 = vset.pattern.permute.xlu0 0
        %854 = vperm.xlu0 %853, %v796
        %v855 = vpop.permute.xlu0 %854
        %858 = vset.pattern.permute.xlu0 0
        %859 = vperm.xlu0 %858, %v797
        %v860 = vpop.permute.xlu0 %859
        %863 = vset.pattern.permute.xlu0 0
        %864 = vperm.xlu0 %863, %v798
        %v865 = vpop.permute.xlu0 %864
        %868 = vset.pattern.permute.xlu0 0
        %869 = vperm.xlu0 %868, %v799
        %v870 = vpop.permute.xlu0 %869
        %873 = vset.pattern.permute.xlu0 0
        %874 = vperm.xlu0 %873, %v800
        %v875 = vpop.permute.xlu0 %874
        %878 = vset.pattern.permute.xlu0 0
        %879 = vperm.xlu0 %878, %v801
        %v880 = vpop.permute.xlu0 %879
        %883 = vset.pattern.permute.xlu0 0
        %884 = vperm.xlu0 %883, %v802
        %v885 = vpop.permute.xlu0 %884
        %888 = vset.pattern.permute.xlu0 0
        %889 = vperm.xlu0 %888, %v803
        %v890 = vpop.permute.xlu0 %889
        %893 = vset.pattern.permute.xlu0 0
        %894 = vperm.xlu0 %893, %v804
        %v895 = vpop.permute.xlu0 %894
        %898 = vset.pattern.permute.xlu0 0
        %899 = vperm.xlu0 %898, %v805
        %v900 = vpop.permute.xlu0 %899
        %903 = vset.pattern.permute.xlu0 0
        %904 = vperm.xlu0 %903, %v806
        %v905 = vpop.permute.xlu0 %904
        %908 = vset.pattern.permute.xlu0 0
        %909 = vperm.xlu0 %908, %v807
        %v910 = vpop.permute.xlu0 %909
        %913 = vset.pattern.permute.xlu0 0
        %914 = vperm.xlu0 %913, %v808
        %v915 = vpop.permute.xlu0 %914
        %918 = vset.pattern.permute.xlu0 0
        %919 = vperm.xlu0 %918, %v809
        %v920 = vpop.permute.xlu0 %919
        %923 = vset.pattern.permute.xlu0 0
        %924 = vperm.xlu0 %923, %v810
        %v925 = vpop.permute.xlu0 %924
        %928 = vset.pattern.permute.xlu0 0
        %929 = vperm.xlu0 %928, %v811
        %v930 = vpop.permute.xlu0 %929
        %933 = vset.pattern.permute.xlu0 0
        %934 = vperm.xlu0 %933, %v812
        %v935 = vpop.permute.xlu0 %934
        %938 = vset.pattern.permute.xlu0 0
        %939 = vperm.xlu0 %938, %v813
        %v940 = vpop.permute.xlu0 %939
        %943 = vset.pattern.permute.xlu0 0
        %944 = vperm.xlu0 %943, %v814
        %v945 = vpop.permute.xlu0 %944
        %948 = vset.pattern.permute.xlu0 0
        %949 = vperm.xlu0 %948, %v815
        %v950 = vpop.permute.xlu0 %949
        %953 = vset.pattern.permute.xlu0 0
        %954 = vperm.xlu0 %953, %v816
        %v955 = vpop.permute.xlu0 %954
        %958 = vset.pattern.permute.xlu0 0
        %959 = vperm.xlu0 %958, %v817
        %v960 = vpop.permute.xlu0 %959
        %963 = vset.pattern.permute.xlu0 0
        %964 = vperm.xlu0 %963, %v818
        %v965 = vpop.permute.xlu0 %964
        %968 = vset.pattern.permute.xlu0 0
        %969 = vperm.xlu0 %968, %v819
        %v970 = vpop.permute.xlu0 %969
        %973 = vset.pattern.permute.xlu0 0
        %974 = vperm.xlu0 %973, %v820
        %v975 = vpop.permute.xlu0 %974
        %978 = vset.pattern.permute.xlu0 0
        %979 = vperm.xlu0 %978, %v821
        %v980 = vpop.permute.xlu0 %979
        %v1014 = vunpack.c.l.b16 %v756
        %v1015 = vunpack.c.l.b16 %v757
        %v1016 = vunpack.c.l.b16 %v758
        %v1017 = vunpack.c.l.b16 %v759
        %v1018 = vunpack.c.l.b16 %v760
        %v1019 = vunpack.c.l.b16 %v761
        %v1020 = vunpack.c.l.b16 %v762
        %v1021 = vunpack.c.l.b16 %v763
        %v1022 = vunpack.c.l.b16 %v764
        %v1023 = vunpack.c.l.b16 %v765
        %v1024 = vunpack.c.l.b16 %v766
        %v1025 = vunpack.c.l.b16 %v767
        %v1026 = vunpack.c.l.b16 %v768
        %v1027 = vunpack.c.l.b16 %v769
        %v1028 = vunpack.c.l.b16 %v770
        %v1029 = vunpack.c.l.b16 %v771
        %v1030 = vunpack.c.l.b16 %v772
        %v1031 = vunpack.c.l.b16 %v773
        %v1032 = vunpack.c.l.b16 %v774
        %v1033 = vunpack.c.l.b16 %v775
        %v1034 = vunpack.c.l.b16 %v776
        %v1035 = vunpack.c.l.b16 %v777
        %v1036 = vunpack.c.l.b16 %v778
        %v1037 = vunpack.c.l.b16 %v779
        %v1038 = vunpack.c.l.b16 %v780
        %v1039 = vunpack.c.l.b16 %v781
        %v1040 = vunpack.c.l.b16 %v782
        %v1041 = vunpack.c.l.b16 %v783
        %v1042 = vunpack.c.l.b16 %v784
        %v1043 = vunpack.c.l.b16 %v785
        %v1044 = vunpack.c.l.b16 %v786
        %v1045 = vunpack.c.l.b16 %v787
        %v1046 = vpack.c.b16 %v1015, %v1014
        %v1047 = vpack.c.b16 %v1017, %v1016
        %v1048 = vpack.c.b16 %v1019, %v1018
        %v1049 = vpack.c.b16 %v1021, %v1020
        %v1050 = vpack.c.b16 %v1023, %v1022
        %v1051 = vpack.c.b16 %v1025, %v1024
        %v1052 = vpack.c.b16 %v1027, %v1026
        %v1053 = vpack.c.b16 %v1029, %v1028
        %v1054 = vpack.c.b16 %v1031, %v1030
        %v1055 = vpack.c.b16 %v1033, %v1032
        %v1056 = vpack.c.b16 %v1035, %v1034
        %v1057 = vpack.c.b16 %v1037, %v1036
        %v1058 = vpack.c.b16 %v1039, %v1038
        %v1059 = vpack.c.b16 %v1041, %v1040
        %v1060 = vpack.c.b16 %v1043, %v1042
        %v1061 = vpack.c.b16 %v1045, %v1044
        %v1064 = vunpack.c.l.b16 %v788
        %v1065 = vunpack.c.l.b16 %v789
        %v1066 = vpack.c.b16 %v1065, %v1064
        %v1069 = vsel %vm650, %v1046, 0
        %v1072 = vsel %vm650, %v1047, 0
        %v1075 = vsel %vm650, %v1048, 0
        %v1078 = vsel %vm650, %v1049, 0
        %v1081 = vsel %vm650, %v1050, 0
        %v1084 = vsel %vm650, %v1051, 0
        %v1087 = vsel %vm650, %v1052, 0
        %v1090 = vsel %vm650, %v1053, 0
        %v1093 = vsel %vm650, %v1054, 0
        %v1096 = vsel %vm650, %v1055, 0
        %v1099 = vsel %vm650, %v1056, 0
        %v1102 = vsel %vm650, %v1057, 0
        %v1105 = vsel %vm650, %v1058, 0
        %v1108 = vsel %vm650, %v1059, 0
        %v1111 = vsel %vm650, %v1060, 0
        %v1114 = vsel %vm650, %v1061, 0
        %1116 = vmatprep.subr.bf16.mxu0 0
        %1117 = vmatpush1.bf16.msra.mxu0 %v1066
        %1118 = vmatprep.subr.bf16.mxu0 0
        %1119 = vmatpush1.bf16.msra.mxu0 0
        %1120 = vmatprep.subr.bf16.mxu0 0
        %1121 = vmatpush1.bf16.msra.mxu0 0
        %1122 = vmatprep.subr.bf16.mxu0 0
        %1123 = vmatpush1.bf16.msra.mxu0 0
        %1124 = vmatprep.subr.bf16.mxu0 0
        %1125 = vmatpush1.bf16.msra.mxu0 0
        %1126 = vmatprep.subr.bf16.mxu0 0
        %1127 = vmatpush1.bf16.msra.mxu0 0
        %1128 = vmatprep.subr.bf16.mxu0 0
        %1129 = vmatpush1.bf16.msra.mxu0 0
        %1130 = vmatprep.subr.bf16.mxu0 0
        %1131 = vmatpush1.bf16.msra.mxu0 0
        %1132 = vmatprep.subr.bf16.mxu0 0
        %1133 = vmatpush1.bf16.msra.mxu0 0
        %1134 = vmatprep.subr.bf16.mxu0 0
        %1135 = vmatpush1.bf16.msra.mxu0 0
        %1136 = vmatprep.subr.bf16.mxu0 0
        %1137 = vmatpush1.bf16.msra.mxu0 0
        %1138 = vmatprep.subr.bf16.mxu0 0
        %1139 = vmatpush1.bf16.msra.mxu0 0
        %1140 = vmatprep.subr.bf16.mxu0 0
        %1141 = vmatpush1.bf16.msra.mxu0 0
        %1142 = vmatprep.subr.bf16.mxu0 0
        %1143 = vmatpush1.bf16.msra.mxu0 0
        %1144 = vmatprep.subr.bf16.mxu0 0
        %1145 = vmatpush1.bf16.msra.mxu0 0
        %1146 = vmatprep.subr.bf16.mxu0 0
        %1147 = vmatpush1.bf16.msra.mxu0 0
        %1148 = vmatprep.mubr.bf16.mxu0 0
        %1149 = vmatmul.mubr.bf16.gmra.mrb[0].mxu0 %v1069
        %v1150 = vpop.f32.mrb[0].mxu0
        %v1151 = vadd.f32 %v825, %v1150
        %v1152 = vpop.f32.mrb[0].mxu0
        %v1153 = vpop.f32.mrb[0].mxu0
        %v1154 = vadd.f32 %v830, %v1153
        %v1155 = vpop.f32.mrb[0].mxu0
        %1156 = vmatprep.mubr.bf16.mxu0 0
        %1157 = vmatmul.mubr.bf16.gmra.mrb[0].mxu0 %v1072
        %v1158 = vpop.f32.mrb[0].mxu0
        %v1159 = vadd.f32 %v835, %v1158
        %v1160 = vpop.f32.mrb[0].mxu0
        %v1161 = vpop.f32.mrb[0].mxu0
        %v1162 = vadd.f32 %v840, %v1161
        %v1163 = vpop.f32.mrb[0].mxu0
        %1164 = vmatprep.mubr.bf16.mxu0 0
        %1165 = vmatmul.mubr.bf16.gmra.mrb[0].mxu0 %v1075
        %v1166 = vpop.f32.mrb[0].mxu0
        %v1167 = vadd.f32 %v845, %v1166
        %v1168 = vpop.f32.mrb[0].mxu0
        %v1169 = vpop.f32.mrb[0].mxu0
        %v1170 = vadd.f32 %v850, %v1169
        %v1171 = vpop.f32.mrb[0].mxu0
        %1172 = vmatprep.mubr.bf16.mxu0 0
        %1173 = vmatmul.mubr.bf16.gmra.mrb[0].mxu0 %v1078
        %v1174 = vpop.f32.mrb[0].mxu0
        %v1175 = vadd.f32 %v855, %v1174
        %v1176 = vpop.f32.mrb[0].mxu0
        %v1177 = vpop.f32.mrb[0].mxu0
        %v1178 = vadd.f32 %v860, %v1177
        %v1179 = vpop.f32.mrb[0].mxu0
        %1180 = vmatprep.mubr.bf16.mxu0 0
        %1181 = vmatmul.mubr.bf16.gmra.mrb[0].mxu0 %v1081
        %v1182 = vpop.f32.mrb[0].mxu0
        %v1183 = vadd.f32 %v865, %v1182
        %v1184 = vpop.f32.mrb[0].mxu0
        %v1185 = vpop.f32.mrb[0].mxu0
        %v1186 = vadd.f32 %v870, %v1185
        %v1187 = vpop.f32.mrb[0].mxu0
        %1188 = vmatprep.mubr.bf16.mxu0 0
        %1189 = vmatmul.mubr.bf16.gmra.mrb[0].mxu0 %v1084
        %v1190 = vpop.f32.mrb[0].mxu0
        %v1191 = vadd.f32 %v875, %v1190
        %v1192 = vpop.f32.mrb[0].mxu0
        %v1193 = vpop.f32.mrb[0].mxu0
        %v1194 = vadd.f32 %v880, %v1193
        %v1195 = vpop.f32.mrb[0].mxu0
        %1196 = vmatprep.mubr.bf16.mxu0 0
        %1197 = vmatmul.mubr.bf16.gmra.mrb[0].mxu0 %v1087
        %v1198 = vpop.f32.mrb[0].mxu0
        %v1199 = vadd.f32 %v885, %v1198
        %v1200 = vpop.f32.mrb[0].mxu0
        %v1201 = vpop.f32.mrb[0].mxu0
        %v1202 = vadd.f32 %v890, %v1201
        %v1203 = vpop.f32.mrb[0].mxu0
        %1204 = vmatprep.mubr.bf16.mxu0 0
        %1205 = vmatmul.mubr.bf16.gmra.mrb[0].mxu0 %v1090
        %v1206 = vpop.f32.mrb[0].mxu0
        %v1207 = vadd.f32 %v895, %v1206
        %v1208 = vpop.f32.mrb[0].mxu0
        %v1209 = vpop.f32.mrb[0].mxu0
        %v1210 = vadd.f32 %v900, %v1209
        %v1211 = vpop.f32.mrb[0].mxu0
        %1212 = vmatprep.mubr.bf16.mxu0 0
        %1213 = vmatmul.mubr.bf16.gmra.mrb[0].mxu0 %v1093
        %v1214 = vpop.f32.mrb[0].mxu0
        %v1215 = vadd.f32 %v905, %v1214
        %v1216 = vpop.f32.mrb[0].mxu0
        %v1217 = vpop.f32.mrb[0].mxu0
        %v1218 = vadd.f32 %v910, %v1217
        %v1219 = vpop.f32.mrb[0].mxu0
        %1220 = vmatprep.mubr.bf16.mxu0 0
        %1221 = vmatmul.mubr.bf16.gmra.mrb[0].mxu0 %v1096
        %v1222 = vpop.f32.mrb[0].mxu0
        %v1223 = vadd.f32 %v915, %v1222
        %v1224 = vpop.f32.mrb[0].mxu0
        %v1225 = vpop.f32.mrb[0].mxu0
        %v1226 = vadd.f32 %v920, %v1225
        %v1227 = vpop.f32.mrb[0].mxu0
        %1228 = vmatprep.mubr.bf16.mxu0 0
        %1229 = vmatmul.mubr.bf16.gmra.mrb[0].mxu0 %v1099
        %v1230 = vpop.f32.mrb[0].mxu0
        %v1231 = vadd.f32 %v925, %v1230
        %v1232 = vpop.f32.mrb[0].mxu0
        %v1233 = vpop.f32.mrb[0].mxu0
        %v1234 = vadd.f32 %v930, %v1233
        %v1235 = vpop.f32.mrb[0].mxu0
        %1236 = vmatprep.mubr.bf16.mxu0 0
        %1237 = vmatmul.mubr.bf16.gmra.mrb[0].mxu0 %v1102
        %v1238 = vpop.f32.mrb[0].mxu0
        %v1239 = vadd.f32 %v935, %v1238
        %v1240 = vpop.f32.mrb[0].mxu0
        %v1241 = vpop.f32.mrb[0].mxu0
        %v1242 = vadd.f32 %v940, %v1241
        %v1243 = vpop.f32.mrb[0].mxu0
        %1244 = vmatprep.mubr.bf16.mxu0 0
        %1245 = vmatmul.mubr.bf16.gmra.mrb[0].mxu0 %v1105
        %v1246 = vpop.f32.mrb[0].mxu0
        %v1247 = vadd.f32 %v945, %v1246
        %v1248 = vpop.f32.mrb[0].mxu0
        %v1249 = vpop.f32.mrb[0].mxu0
        %v1250 = vadd.f32 %v950, %v1249
        %v1251 = vpop.f32.mrb[0].mxu0
        %1252 = vmatprep.mubr.bf16.mxu0 0
        %1253 = vmatmul.mubr.bf16.gmra.mrb[0].mxu0 %v1108
        %v1254 = vpop.f32.mrb[0].mxu0
        %v1255 = vadd.f32 %v955, %v1254
        %v1256 = vpop.f32.mrb[0].mxu0
        %v1257 = vpop.f32.mrb[0].mxu0
        %v1258 = vadd.f32 %v960, %v1257
        %v1259 = vpop.f32.mrb[0].mxu0
        %1260 = vmatprep.mubr.bf16.mxu0 0
        %1261 = vmatmul.mubr.bf16.gmra.mrb[0].mxu0 %v1111
        %v1262 = vpop.f32.mrb[0].mxu0
        %v1263 = vadd.f32 %v965, %v1262
        %v1264 = vpop.f32.mrb[0].mxu0
        %v1265 = vpop.f32.mrb[0].mxu0
        %v1266 = vadd.f32 %v970, %v1265
        %v1267 = vpop.f32.mrb[0].mxu0
        %1268 = vmatprep.mubr.bf16.mxu0 0
        %1269 = vmatmul.mubr.bf16.gmra.mrb[0].mxu0 %v1114
        %v1270 = vpop.f32.mrb[0].mxu0
        %v1271 = vadd.f32 %v975, %v1270
        %v1272 = vpop.f32.mrb[0].mxu0
        %v1273 = vpop.f32.mrb[0].mxu0
        %v1274 = vadd.f32 %v980, %v1273
        %v1275 = vpop.f32.mrb[0].mxu0
        %1276 = vdwg.mxu0
        %v1277 = vpack.c.bf16 %v753, %v752
        %v1278 = vpack.c.bf16 %v755, %v754
        %1279 = vst [vmem:[#allocation2 + $0x8] sm:$0xff] %v1277
        %1280 = vst [vmem:[#allocation2 + $0x20] sm:$0xff] %v1278
        %v1281 = vld [vmem:[#allocation2] sm:$0xff]
        %v1282 = vld [vmem:[#allocation2 + $0x8] sm:$0xff]
        %v1283 = vld [vmem:[#allocation2 + $0x18] sm:$0xff]
        %v1284 = vld [vmem:[#allocation2 + $0x20] sm:$0xff]
        %1289 = vrot.lane.b32.xlu0 %v1281, 2
        %v1290 = vpop.permute.xlu0 %1289
        %1291 = vrot.lane.b32.xlu0 %v1282, 2
        %v1292 = vpop.permute.xlu0 %1291
        %1293 = vrot.lane.b32.xlu0 %v1283, 2
        %v1294 = vpop.permute.xlu0 %1293
        %1295 = vrot.lane.b32.xlu0 %v1284, 2
        %v1296 = vpop.permute.xlu0 %1295
        %vm1297 = vcmask 15360
        %v1298 = vsel %vm1297, %v1290, %v1292
        %v1299 = vsel %vm1297, %v1294, %v1296
        %1302 = vst [vmem:[#allocation3] sm:$0xff] %v1298
        %1303 = vst [vmem:[#allocation3 + $0x8] sm:$0xff] %v1299
        %v1304 = vld [vmem:[#allocation2] sm:$0xff]
        %v1305 = vld [vmem:[#allocation2 + $0x8] sm:$0xff]
        %v1306 = vld [vmem:[#allocation2 + $0x18] sm:$0xff]
        %v1307 = vld [vmem:[#allocation2 + $0x20] sm:$0xff]
        %1312 = vrot.lane.b32.xlu0 %v1304, 1
        %v1313 = vpop.permute.xlu0 %1312
        %1314 = vrot.lane.b32.xlu0 %v1305, 1
        %v1315 = vpop.permute.xlu0 %1314
        %1316 = vrot.lane.b32.xlu0 %v1306, 1
        %v1317 = vpop.permute.xlu0 %1316
        %1318 = vrot.lane.b32.xlu0 %v1307, 1
        %v1319 = vpop.permute.xlu0 %1318
        %vm1320 = vcmask 7168
        %v1321 = vsel %vm1320, %v1313, %v1315
        %v1322 = vsel %vm1320, %v1317, %v1319
        %1325 = vst [vmem:[#allocation3 + $0x10] sm:$0xff] %v1321
        %1326 = vst [vmem:[#allocation3 + $0x18] sm:$0xff] %v1322
        %v1327 = vld [vmem:[#allocation2 + $0x8] sm:$0xff]
        %v1328 = vld [vmem:[#allocation2 + $0x20] sm:$0xff]
        %1329 = vst [vmem:[#allocation3 + $0x20] sm:$0xff] %v1327
        %1330 = vst [vmem:[#allocation3 + $0x28] sm:$0xff] %v1328
        %v1331 = vld [vmem:[#allocation2 + $0x8] sm:$0xff]
        %v1332 = vld [vmem:[#allocation2 + $0x10] sm:$0xff]
        %v1333 = vld [vmem:[#allocation2 + $0x20] sm:$0xff]
        %v1334 = vld [vmem:[#allocation2 + $0x28] sm:$0xff]
        %1339 = vrot.lane.b32.xlu0 %v1331, 127
        %v1340 = vpop.permute.xlu0 %1339
        %1341 = vrot.lane.b32.xlu0 %v1332, 127
        %v1342 = vpop.permute.xlu0 %1341
        %1343 = vrot.lane.b32.xlu0 %v1333, 127
        %v1344 = vpop.permute.xlu0 %1343
        %1345 = vrot.lane.b32.xlu0 %v1334, 127
        %v1346 = vpop.permute.xlu0 %1345
        %vm1347 = vcmask 1039360
        %v1348 = vsel %vm1347, %v1340, %v1342
        %v1349 = vsel %vm1347, %v1344, %v1346
        %1352 = vst [vmem:[#allocation3 + $0x30] sm:$0xff] %v1348
        %1353 = vst [vmem:[#allocation3 + $0x38] sm:$0xff] %v1349
        %v1354 = vld [vmem:[#allocation2 + $0x8] sm:$0xff]
        %v1355 = vld [vmem:[#allocation2 + $0x10] sm:$0xff]
        %v1356 = vld [vmem:[#allocation2 + $0x20] sm:$0xff]
        %v1357 = vld [vmem:[#allocation2 + $0x28] sm:$0xff]
        %1362 = vrot.lane.b32.xlu0 %v1354, 126
        %v1363 = vpop.permute.xlu0 %1362
        %1364 = vrot.lane.b32.xlu0 %v1355, 126
        %v1365 = vpop.permute.xlu0 %1364
        %1366 = vrot.lane.b32.xlu0 %v1356, 126
        %v1367 = vpop.permute.xlu0 %1366
        %1368 = vrot.lane.b32.xlu0 %v1357, 126
        %v1369 = vpop.permute.xlu0 %1368
        %vm1370 = vcmask 1031168
        %v1371 = vsel %vm1370, %v1363, %v1365
        %v1372 = vsel %vm1370, %v1367, %v1369
        %1375 = vst [vmem:[#allocation3 + $0x40] sm:$0xff] %v1371
        %1376 = vst [vmem:[#allocation3 + $0x48] sm:$0xff] %v1372
        %v1377 = vld [vmem:[#allocation18] sm:$0xff]
        %v1378 = vld [vmem:[#allocation18 + $0x8] sm:$0xff]
        %v1379 = vld [vmem:[#allocation18 + $0x10] sm:$0xff]
        %v1380 = vld [vmem:[#allocation18 + $0x18] sm:$0xff]
        %v1381 = vld [vmem:[#allocation18 + $0x20] sm:$0xff]
        %v1382 = vld [vmem:[#allocation18 + $0x28] sm:$0xff]
        %v1383 = vld [vmem:[#allocation18 + $0x30] sm:$0xff]
        %v1384 = vld [vmem:[#allocation18 + $0x38] sm:$0xff]
        %v1385 = vld [vmem:[#allocation3] sm:$0xff]
        %v1386 = vld [vmem:[#allocation3 + $0x8] sm:$0xff]
        %v1387 = vld [vmem:[#allocation3 + $0x10] sm:$0xff]
        %v1388 = vld [vmem:[#allocation3 + $0x18] sm:$0xff]
        %v1389 = vld [vmem:[#allocation3 + $0x20] sm:$0xff]
        %v1390 = vld [vmem:[#allocation3 + $0x28] sm:$0xff]
        %v1391 = vld [vmem:[#allocation3 + $0x30] sm:$0xff]
        %v1392 = vld [vmem:[#allocation3 + $0x38] sm:$0xff]
        %v1393 = vld [vmem:[#allocation3 + $0x40] sm:$0xff]
        %v1394 = vld [vmem:[#allocation3 + $0x48] sm:$0xff]
        %v1403 = vunpack.c.l.b16 %v1377
        %v1404 = vunpack.c.h.b16 %v1377
        %v1405 = vunpack.c.l.b16 %v1378
        %v1406 = vunpack.c.h.b16 %v1378
        %v1407 = vunpack.c.l.b16 %v1379
        %v1408 = vunpack.c.h.b16 %v1379
        %v1409 = vunpack.c.l.b16 %v1380
        %v1410 = vunpack.c.h.b16 %v1380
        %v1411 = vunpack.c.l.b16 %v1381
        %v1412 = vunpack.c.h.b16 %v1381
        %v1413 = vunpack.c.l.b16 %v1382
        %v1414 = vunpack.c.h.b16 %v1382
        %v1415 = vunpack.c.l.b16 %v1383
        %v1416 = vunpack.c.h.b16 %v1383
        %v1417 = vunpack.c.l.b16 %v1384
        %v1418 = vunpack.c.h.b16 %v1384
        %v1419 = vpack.c.b16 %v1405, %v1403
        %v1420 = vpack.c.b16 %v1406, %v1404
        %v1421 = vpack.c.b16 %v1409, %v1407
        %v1422 = vpack.c.b16 %v1410, %v1408
        %v1423 = vpack.c.b16 %v1413, %v1411
        %v1424 = vpack.c.b16 %v1414, %v1412
        %v1425 = vpack.c.b16 %v1417, %v1415
        %v1426 = vpack.c.b16 %v1418, %v1416
        %vm1431 = vcmask 261120
        %v1433 = vsel %vm1431, %v1420, 0
        %v1436 = vsel %vm1431, %v1422, 0
        %v1439 = vsel %vm1431, %v1424, 0
        %v1442 = vsel %vm1431, %v1426, 0
        %1444 = vmatprep.subr.bf16.mxu0 0
        %1445 = vmatpush1.bf16.msra.mxu0 %v1385
        %1446 = vmatprep.subr.bf16.mxu0 0
        %1447 = vmatpush1.bf16.msra.mxu0 %v1386
        %1448 = vmatprep.subr.bf16.mxu0 0
        %1449 = vmatpush1.bf16.msra.mxu0 %v1387
        %1450 = vmatprep.subr.bf16.mxu0 0
        %1451 = vmatpush1.bf16.msra.mxu0 %v1388
        %1452 = vmatprep.subr.bf16.mxu0 0
        %1453 = vmatpush1.bf16.msra.mxu0 %v1389
        %1454 = vmatprep.subr.bf16.mxu0 0
        %1455 = vmatpush1.bf16.msra.mxu0 %v1390
        %1456 = vmatprep.subr.bf16.mxu0 0
        %1457 = vmatpush1.bf16.msra.mxu0 %v1391
        %1458 = vmatprep.subr.bf16.mxu0 0
        %1459 = vmatpush1.bf16.msra.mxu0 %v1392
        %1460 = vmatprep.subr.bf16.mxu0 0
        %1461 = vmatpush1.bf16.msra.mxu0 %v1393
        %1462 = vmatprep.subr.bf16.mxu0 0
        %1463 = vmatpush1.bf16.msra.mxu0 %v1394
        %1464 = vmatprep.subr.bf16.mxu0 0
        %1465 = vmatpush1.bf16.msra.mxu0 0
        %1466 = vmatprep.subr.bf16.mxu0 0
        %1467 = vmatpush1.bf16.msra.mxu0 0
        %1468 = vmatprep.subr.bf16.mxu0 0
        %1469 = vmatpush1.bf16.msra.mxu0 0
        %1470 = vmatprep.subr.bf16.mxu0 0
        %1471 = vmatpush1.bf16.msra.mxu0 0
        %1472 = vmatprep.subr.bf16.mxu0 0
        %1473 = vmatpush1.bf16.msra.mxu0 0
        %1474 = vmatprep.subr.bf16.mxu0 0
        %1475 = vmatpush1.bf16.msra.mxu0 0
        %1476 = vmatprep.mubr.bf16.mxu0 %v1433
        %1477 = vmatmul.mubr.bf16.gmra.mrb[0].mxu0 %v1419
        %v1478 = vpop.f32.mrb[0].mxu0
        %v1479 = vadd.f32 %v1151, %v1478
        %v1480 = vpop.f32.mrb[0].mxu0
        %v1481 = vpop.f32.mrb[0].mxu0
        %v1482 = vadd.f32 %v1154, %v1481
        %v1483 = vpop.f32.mrb[0].mxu0
        %1484 = vmatprep.mubr.bf16.mxu0 %v1436
        %1485 = vmatmul.mubr.bf16.gmra.mrb[0].mxu0 %v1421
        %v1486 = vpop.f32.mrb[0].mxu0
        %v1487 = vadd.f32 %v1159, %v1486
        %v1488 = vpop.f32.mrb[0].mxu0
        %v1489 = vpop.f32.mrb[0].mxu0
        %v1490 = vadd.f32 %v1162, %v1489
        %v1491 = vpop.f32.mrb[0].mxu0
        %1492 = vmatprep.mubr.bf16.mxu0 %v1439
        %1493 = vmatmul.mubr.bf16.gmra.mrb[0].mxu0 %v1423
        %v1494 = vpop.f32.mrb[0].mxu0
        %v1495 = vadd.f32 %v1167, %v1494
        %v1496 = vpop.f32.mrb[0].mxu0
        %v1497 = vpop.f32.mrb[0].mxu0
        %v1498 = vadd.f32 %v1170, %v1497
        %v1499 = vpop.f32.mrb[0].mxu0
        %1500 = vmatprep.mubr.bf16.mxu0 %v1442
        %1501 = vmatmul.mubr.bf16.gmra.mrb[0].mxu0 %v1425
        %v1502 = vpop.f32.mrb[0].mxu0
        %v1503 = vadd.f32 %v1175, %v1502
        %v1504 = vpop.f32.mrb[0].mxu0
        %v1505 = vpop.f32.mrb[0].mxu0
        %v1506 = vadd.f32 %v1178, %v1505
        %v1507 = vpop.f32.mrb[0].mxu0
        %1508 = vdwg.mxu0
        %v1509 = vtanh.pop %v1479
        %v1510 = vtanh.pop %v1482
        %v1511 = vtanh.pop %v1487
        %v1512 = vtanh.pop %v1490
        %v1513 = vmul.f32 %v1495, 0.5
        %v1514 = vmul.f32 %v1498, 0.5
        %v1515 = vmul.f32 %v1503, 0.5
        %v1516 = vmul.f32 %v1506, 0.5
        %v1517 = vtanh.pop %v1513
        %v1518 = vtanh.pop %v1514
        %v1519 = vtanh.pop %v1515
        %v1520 = vtanh.pop %v1516
        %v1521 = vadd.f32 %v1517, 1.0
        %v1522 = vadd.f32 %v1518, 1.0
        %v1523 = vadd.f32 %v1519, 1.0
        %v1524 = vadd.f32 %v1520, 1.0
        %v1525 = vmul.f32 %v1521, 0.5
        %v1526 = vmul.f32 %v1522, 0.5
        %v1527 = vmul.f32 %v1523, 0.5
        %v1528 = vmul.f32 %v1524, 0.5
        %v1529 = vmul.f32 %v1509, %v1525
        %v1530 = vmul.f32 %v1510, %v1526
        %v1531 = vmul.f32 %v1511, %v1527
        %v1532 = vmul.f32 %v1512, %v1528
        %v1533 = vld [vmem:[#allocation20] sm:$0xf]
        %v1534 = vld [vmem:[#allocation20 + $0x4] sm:$0xf]
        %v1535 = vld [vmem:[#allocation20 + $0x8] sm:$0xf]
        %v1536 = vld [vmem:[#allocation20 + $0xc] sm:$0xf]
        %v1537 = vld [vmem:[#allocation20 + $0x10] sm:$0xf]
        %v1538 = vld [vmem:[#allocation20 + $0x14] sm:$0xf]
        %v1539 = vld [vmem:[#allocation20 + $0x18] sm:$0xf]
        %v1540 = vld [vmem:[#allocation20 + $0x1c] sm:$0xf]
        %v1541 = vpack.c.bf16 %v1530, %v1529
        %v1542 = vpack.c.bf16 %v1532, %v1531
        %v1543 = vld [vmem:[#allocation21] sm:$0xff]
        %v1544 = vld [vmem:[#allocation21 + $0x8] sm:$0xff]
        %v1545 = vld [vmem:[#allocation21 + $0x10] sm:$0xff]
        %v1546 = vld [vmem:[#allocation21 + $0x18] sm:$0xff]
        %v1547 = vld [vmem:[#allocation21 + $0x20] sm:$0xff]
        %v1548 = vld [vmem:[#allocation21 + $0x28] sm:$0xff]
        %v1549 = vld [vmem:[#allocation21 + $0x30] sm:$0xff]
        %v1550 = vld [vmem:[#allocation21 + $0x38] sm:$0xff]
        %1552 = vset.pattern.permute.xlu0 0
        %1553 = vperm.xlu0 %1552, %v1543
        %v1554 = vpop.permute.xlu0 %1553
        %1557 = vset.pattern.permute.xlu0 0
        %1558 = vperm.xlu0 %1557, %v1544
        %v1559 = vpop.permute.xlu0 %1558
        %1562 = vset.pattern.permute.xlu0 0
        %1563 = vperm.xlu0 %1562, %v1545
        %v1564 = vpop.permute.xlu0 %1563
        %1567 = vset.pattern.permute.xlu0 0
        %1568 = vperm.xlu0 %1567, %v1546
        %v1569 = vpop.permute.xlu0 %1568
        %1572 = vset.pattern.permute.xlu0 0
        %1573 = vperm.xlu0 %1572, %v1547
        %v1574 = vpop.permute.xlu0 %1573
        %1577 = vset.pattern.permute.xlu0 0
        %1578 = vperm.xlu0 %1577, %v1548
        %v1579 = vpop.permute.xlu0 %1578
        %1582 = vset.pattern.permute.xlu0 0
        %1583 = vperm.xlu0 %1582, %v1549
        %v1584 = vpop.permute.xlu0 %1583
        %1587 = vset.pattern.permute.xlu0 0
        %1588 = vperm.xlu0 %1587, %v1550
        %v1589 = vpop.permute.xlu0 %1588
        %v1599 = vunpack.c.l.b16 %v1533
        %v1600 = vunpack.c.l.b16 %v1534
        %v1601 = vunpack.c.l.b16 %v1535
        %v1602 = vunpack.c.l.b16 %v1536
        %v1603 = vunpack.c.l.b16 %v1537
        %v1604 = vunpack.c.l.b16 %v1538
        %v1605 = vunpack.c.l.b16 %v1539
        %v1606 = vunpack.c.l.b16 %v1540
        %v1607 = vpack.c.b16 %v1600, %v1599
        %v1608 = vpack.c.b16 %v1602, %v1601
        %v1609 = vpack.c.b16 %v1604, %v1603
        %v1610 = vpack.c.b16 %v1606, %v1605
        %v1612 = vsel %vm1431, %v1607, 0
        %v1615 = vsel %vm1431, %v1608, 0
        %v1618 = vsel %vm1431, %v1609, 0
        %v1621 = vsel %vm1431, %v1610, 0
        %1623 = vmatprep.subr.bf16.mxu0 0
        %1624 = vmatpush1.bf16.msra.mxu0 %v1541
        %1625 = vmatprep.subr.bf16.mxu0 0
        %1626 = vmatpush1.bf16.msra.mxu0 %v1542
        %1627 = vmatprep.subr.bf16.mxu0 0
        %1628 = vmatpush1.bf16.msra.mxu0 0
        %1629 = vmatprep.subr.bf16.mxu0 0
        %1630 = vmatpush1.bf16.msra.mxu0 0
        %1631 = vmatprep.subr.bf16.mxu0 0
        %1632 = vmatpush1.bf16.msra.mxu0 0
        %1633 = vmatprep.subr.bf16.mxu0 0
        %1634 = vmatpush1.bf16.msra.mxu0 0
        %1635 = vmatprep.subr.bf16.mxu0 0
        %1636 = vmatpush1.bf16.msra.mxu0 0
        %1637 = vmatprep.subr.bf16.mxu0 0
        %1638 = vmatpush1.bf16.msra.mxu0 0
        %1639 = vmatprep.subr.bf16.mxu0 0
        %1640 = vmatpush1.bf16.msra.mxu0 0
        %1641 = vmatprep.subr.bf16.mxu0 0
        %1642 = vmatpush1.bf16.msra.mxu0 0
        %1643 = vmatprep.subr.bf16.mxu0 0
        %1644 = vmatpush1.bf16.msra.mxu0 0
        %1645 = vmatprep.subr.bf16.mxu0 0
        %1646 = vmatpush1.bf16.msra.mxu0 0
        %1647 = vmatprep.subr.bf16.mxu0 0
        %1648 = vmatpush1.bf16.msra.mxu0 0
        %1649 = vmatprep.subr.bf16.mxu0 0
        %1650 = vmatpush1.bf16.msra.mxu0 0
        %1651 = vmatprep.subr.bf16.mxu0 0
        %1652 = vmatpush1.bf16.msra.mxu0 0
        %1653 = vmatprep.subr.bf16.mxu0 0
        %1654 = vmatpush1.bf16.msra.mxu0 0
        %1655 = vmatprep.mubr.bf16.mxu0 0
        %1656 = vmatmul.mubr.bf16.gmra.mrb[0].mxu0 %v1612
        %v1657 = vpop.f32.mrb[0].mxu0
        %v1658 = vadd.f32 %v1554, %v1657
        %v1659 = vpop.f32.mrb[0].mxu0
        %v1660 = vpop.f32.mrb[0].mxu0
        %v1661 = vadd.f32 %v1559, %v1660
        %v1662 = vpop.f32.mrb[0].mxu0
        %1663 = vmatprep.mubr.bf16.mxu0 0
        %1664 = vmatmul.mubr.bf16.gmra.mrb[0].mxu0 %v1615
        %v1665 = vpop.f32.mrb[0].mxu0
        %v1666 = vadd.f32 %v1564, %v1665
        %v1667 = vpop.f32.mrb[0].mxu0
        %v1668 = vpop.f32.mrb[0].mxu0
        %v1669 = vadd.f32 %v1569, %v1668
        %v1670 = vpop.f32.mrb[0].mxu0
        %1671 = vmatprep.mubr.bf16.mxu0 0
        %1672 = vmatmul.mubr.bf16.gmra.mrb[0].mxu0 %v1618
        %v1673 = vpop.f32.mrb[0].mxu0
        %v1674 = vadd.f32 %v1574, %v1673
        %v1675 = vpop.f32.mrb[0].mxu0
        %v1676 = vpop.f32.mrb[0].mxu0
        %v1677 = vadd.f32 %v1579, %v1676
        %v1678 = vpop.f32.mrb[0].mxu0
        %1679 = vmatprep.mubr.bf16.mxu0 0
        %1680 = vmatmul.mubr.bf16.gmra.mrb[0].mxu0 %v1621
        %v1681 = vpop.f32.mrb[0].mxu0
        %v1682 = vadd.f32 %v1584, %v1681
        %v1683 = vpop.f32.mrb[0].mxu0
        %v1684 = vpop.f32.mrb[0].mxu0
        %v1685 = vadd.f32 %v1589, %v1684
        %v1686 = vpop.f32.mrb[0].mxu0
        %1687 = vdwg.mxu0
        %v1688 = vadd.f32 %v752, %v1658
        %v1689 = vadd.f32 %v753, %v1661
        %v1690 = vadd.f32 %v754, %v1666
        %v1691 = vadd.f32 %v755, %v1669
        %v1692 = vmul.f32 %v1688, %v646
        %v1693 = vmul.f32 %v1689, %v646
        %v1694 = vmul.f32 %v1690, %v646
        %v1695 = vmul.f32 %v1691, %v646
        %v1696 = vadd.f32 %v1674, 0.0
        %v1697 = vadd.f32 %v1677, 0.0
        %v1698 = vadd.f32 %v1682, 0.0
        %v1699 = vadd.f32 %v1685, 0.0
        %v1700 = vpack.c.bf16 %v1693, %v1692
        %v1701 = vpack.c.bf16 %v1695, %v1694
        %1702 = vst [vmem:[#allocation2 + $0x8] sm:$0xff] %v1700
        %1703 = vst [vmem:[#allocation2 + $0x20] sm:$0xff] %v1701
        %v1704 = vld [vmem:[#allocation2] sm:$0xff]
        %v1705 = vld [vmem:[#allocation2 + $0x8] sm:$0xff]
        %v1706 = vld [vmem:[#allocation2 + $0x18] sm:$0xff]
        %v1707 = vld [vmem:[#allocation2 + $0x20] sm:$0xff]
        %1712 = vrot.lane.b32.xlu0 %v1704, 4
        %v1713 = vpop.permute.xlu0 %1712
        %1714 = vrot.lane.b32.xlu0 %v1705, 4
        %v1715 = vpop.permute.xlu0 %1714
        %1716 = vrot.lane.b32.xlu0 %v1706, 4
        %v1717 = vpop.permute.xlu0 %1716
        %1718 = vrot.lane.b32.xlu0 %v1707, 4
        %v1719 = vpop.permute.xlu0 %1718
        %vm1720 = vcmask 31744
        %v1721 = vsel %vm1720, %v1713, %v1715
        %v1722 = vsel %vm1720, %v1717, %v1719
        %1725 = vst [vmem:[#allocation3] sm:$0xff] %v1721
        %1726 = vst [vmem:[#allocation3 + $0x8] sm:$0xff] %v1722
        %v1727 = vld [vmem:[#allocation2] sm:$0xff]
        %v1728 = vld [vmem:[#allocation2 + $0x8] sm:$0xff]
        %v1729 = vld [vmem:[#allocation2 + $0x18] sm:$0xff]
        %v1730 = vld [vmem:[#allocation2 + $0x20] sm:$0xff]
        %1735 = vrot.lane.b32.xlu0 %v1727, 2
        %v1736 = vpop.permute.xlu0 %1735
        %1737 = vrot.lane.b32.xlu0 %v1728, 2
        %v1738 = vpop.permute.xlu0 %1737
        %1739 = vrot.lane.b32.xlu0 %v1729, 2
        %v1740 = vpop.permute.xlu0 %1739
        %1741 = vrot.lane.b32.xlu0 %v1730, 2
        %v1742 = vpop.permute.xlu0 %1741
        %v1743 = vsel %vm1297, %v1736, %v1738
        %v1744 = vsel %vm1297, %v1740, %v1742
        %1747 = vst [vmem:[#allocation3 + $0x10] sm:$0xff] %v1743
        %1748 = vst [vmem:[#allocation3 + $0x18] sm:$0xff] %v1744
        %v1749 = vld [vmem:[#allocation2 + $0x8] sm:$0xff]
        %v1750 = vld [vmem:[#allocation2 + $0x20] sm:$0xff]
        %1751 = vst [vmem:[#allocation3 + $0x20] sm:$0xff] %v1749
        %1752 = vst [vmem:[#allocation3 + $0x28] sm:$0xff] %v1750
        %v1753 = vld [vmem:[#allocation2 + $0x8] sm:$0xff]
        %v1754 = vld [vmem:[#allocation2 + $0x10] sm:$0xff]
        %v1755 = vld [vmem:[#allocation2 + $0x20] sm:$0xff]
        %v1756 = vld [vmem:[#allocation2 + $0x28] sm:$0xff]
        %1761 = vrot.lane.b32.xlu0 %v1753, 126
        %v1762 = vpop.permute.xlu0 %1761
        %1763 = vrot.lane.b32.xlu0 %v1754, 126
        %v1764 = vpop.permute.xlu0 %1763
        %1765 = vrot.lane.b32.xlu0 %v1755, 126
        %v1766 = vpop.permute.xlu0 %1765
        %1767 = vrot.lane.b32.xlu0 %v1756, 126
        %v1768 = vpop.permute.xlu0 %1767
        %v1769 = vsel %vm1370, %v1762, %v1764
        %v1770 = vsel %vm1370, %v1766, %v1768
        %1773 = vst [vmem:[#allocation3 + $0x30] sm:$0xff] %v1769
        %1774 = vst [vmem:[#allocation3 + $0x38] sm:$0xff] %v1770
        %v1775 = vld [vmem:[#allocation2 + $0x8] sm:$0xff]
        %v1776 = vld [vmem:[#allocation2 + $0x10] sm:$0xff]
        %v1777 = vld [vmem:[#allocation2 + $0x20] sm:$0xff]
        %v1778 = vld [vmem:[#allocation2 + $0x28] sm:$0xff]
        %1783 = vrot.lane.b32.xlu0 %v1775, 124
        %v1784 = vpop.permute.xlu0 %1783
        %1785 = vrot.lane.b32.xlu0 %v1776, 124
        %v1786 = vpop.permute.xlu0 %1785
        %1787 = vrot.lane.b32.xlu0 %v1777, 124
        %v1788 = vpop.permute.xlu0 %1787
        %1789 = vrot.lane.b32.xlu0 %v1778, 124
        %v1790 = vpop.permute.xlu0 %1789
        %vm1791 = vcmask 1014784
        %v1792 = vsel %vm1791, %v1784, %v1786
        %v1793 = vsel %vm1791, %v1788, %v1790
        %1796 = vst [vmem:[#allocation3 + $0x40] sm:$0xff] %v1792
        %1797 = vst [vmem:[#allocation3 + $0x48] sm:$0xff] %v1793
        %s1798 = scalar_lea.vmem [#allocation18], 64
        %v1799 = vld [vmem:[%s1798] sm:$0xff]
        %v1800 = vld [vmem:[%s1798 + $0x8] sm:$0xff]
        %v1801 = vld [vmem:[%s1798 + $0x10] sm:$0xff]
        %v1802 = vld [vmem:[%s1798 + $0x18] sm:$0xff]
        %v1803 = vld [vmem:[%s1798 + $0x20] sm:$0xff]
        %v1804 = vld [vmem:[%s1798 + $0x28] sm:$0xff]
        %v1805 = vld [vmem:[%s1798 + $0x30] sm:$0xff]
        %v1806 = vld [vmem:[%s1798 + $0x38] sm:$0xff]
        %v1807 = vld [vmem:[#allocation3] sm:$0xff]
        %v1808 = vld [vmem:[#allocation3 + $0x8] sm:$0xff]
        %v1809 = vld [vmem:[#allocation3 + $0x10] sm:$0xff]
        %v1810 = vld [vmem:[#allocation3 + $0x18] sm:$0xff]
        %v1811 = vld [vmem:[#allocation3 + $0x20] sm:$0xff]
        %v1812 = vld [vmem:[#allocation3 + $0x28] sm:$0xff]
        %v1813 = vld [vmem:[#allocation3 + $0x30] sm:$0xff]
        %v1814 = vld [vmem:[#allocation3 + $0x38] sm:$0xff]
        %v1815 = vld [vmem:[#allocation3 + $0x40] sm:$0xff]
        %v1816 = vld [vmem:[#allocation3 + $0x48] sm:$0xff]
        %v1825 = vunpack.c.l.b16 %v1799
        %v1826 = vunpack.c.h.b16 %v1799
        %v1827 = vunpack.c.l.b16 %v1800
        %v1828 = vunpack.c.h.b16 %v1800
        %v1829 = vunpack.c.l.b16 %v1801
        %v1830 = vunpack.c.h.b16 %v1801
        %v1831 = vunpack.c.l.b16 %v1802
        %v1832 = vunpack.c.h.b16 %v1802
        %v1833 = vunpack.c.l.b16 %v1803
        %v1834 = vunpack.c.h.b16 %v1803
        %v1835 = vunpack.c.l.b16 %v1804
        %v1836 = vunpack.c.h.b16 %v1804
        %v1837 = vunpack.c.l.b16 %v1805
        %v1838 = vunpack.c.h.b16 %v1805
        %v1839 = vunpack.c.l.b16 %v1806
        %v1840 = vunpack.c.h.b16 %v1806
        %v1841 = vpack.c.b16 %v1827, %v1825
        %v1842 = vpack.c.b16 %v1828, %v1826
        %v1843 = vpack.c.b16 %v1831, %v1829
        %v1844 = vpack.c.b16 %v1832, %v1830
        %v1845 = vpack.c.b16 %v1835, %v1833
        %v1846 = vpack.c.b16 %v1836, %v1834
        %v1847 = vpack.c.b16 %v1839, %v1837
        %v1848 = vpack.c.b16 %v1840, %v1838
        %v1854 = vsel %vm1431, %v1842, 0
        %v1857 = vsel %vm1431, %v1844, 0
        %v1860 = vsel %vm1431, %v1846, 0
        %v1863 = vsel %vm1431, %v1848, 0
        %1865 = vmatprep.subr.bf16.mxu0 0
        %1866 = vmatpush1.bf16.msra.mxu0 %v1807
        %1867 = vmatprep.subr.bf16.mxu0 0
        %1868 = vmatpush1.bf16.msra.mxu0 %v1808
        %1869 = vmatprep.subr.bf16.mxu0 0
        %1870 = vmatpush1.bf16.msra.mxu0 %v1809
        %1871 = vmatprep.subr.bf16.mxu0 0
        %1872 = vmatpush1.bf16.msra.mxu0 %v1810
        %1873 = vmatprep.subr.bf16.mxu0 0
        %1874 = vmatpush1.bf16.msra.mxu0 %v1811
        %1875 = vmatprep.subr.bf16.mxu0 0
        %1876 = vmatpush1.bf16.msra.mxu0 %v1812
        %1877 = vmatprep.subr.bf16.mxu0 0
        %1878 = vmatpush1.bf16.msra.mxu0 %v1813
        %1879 = vmatprep.subr.bf16.mxu0 0
        %1880 = vmatpush1.bf16.msra.mxu0 %v1814
        %1881 = vmatprep.subr.bf16.mxu0 0
        %1882 = vmatpush1.bf16.msra.mxu0 %v1815
        %1883 = vmatprep.subr.bf16.mxu0 0
        %1884 = vmatpush1.bf16.msra.mxu0 %v1816
        %1885 = vmatprep.subr.bf16.mxu0 0
        %1886 = vmatpush1.bf16.msra.mxu0 0
        %1887 = vmatprep.subr.bf16.mxu0 0
        %1888 = vmatpush1.bf16.msra.mxu0 0
        %1889 = vmatprep.subr.bf16.mxu0 0
        %1890 = vmatpush1.bf16.msra.mxu0 0
        %1891 = vmatprep.subr.bf16.mxu0 0
        %1892 = vmatpush1.bf16.msra.mxu0 0
        %1893 = vmatprep.subr.bf16.mxu0 0
        %1894 = vmatpush1.bf16.msra.mxu0 0
        %1895 = vmatprep.subr.bf16.mxu0 0
        %1896 = vmatpush1.bf16.msra.mxu0 0
        %1897 = vmatprep.mubr.bf16.mxu0 %v1854
        %1898 = vmatmul.mubr.bf16.gmra.mrb[0].mxu0 %v1841
        %v1899 = vpop.f32.mrb[0].mxu0
        %v1900 = vadd.f32 %v1183, %v1899
        %v1901 = vpop.f32.mrb[0].mxu0
        %v1902 = vpop.f32.mrb[0].mxu0
        %v1903 = vadd.f32 %v1186, %v1902
        %v1904 = vpop.f32.mrb[0].mxu0
        %1905 = vmatprep.mubr.bf16.mxu0 %v1857
        %1906 = vmatmul.mubr.bf16.gmra.mrb[0].mxu0 %v1843
        %v1907 = vpop.f32.mrb[0].mxu0
        %v1908 = vadd.f32 %v1191, %v1907
        %v1909 = vpop.f32.mrb[0].mxu0
        %v1910 = vpop.f32.mrb[0].mxu0
        %v1911 = vadd.f32 %v1194, %v1910
        %v1912 = vpop.f32.mrb[0].mxu0
        %1913 = vmatprep.mubr.bf16.mxu0 %v1860
        %1914 = vmatmul.mubr.bf16.gmra.mrb[0].mxu0 %v1845
        %v1915 = vpop.f32.mrb[0].mxu0
        %v1916 = vadd.f32 %v1199, %v1915
        %v1917 = vpop.f32.mrb[0].mxu0
        %v1918 = vpop.f32.mrb[0].mxu0
        %v1919 = vadd.f32 %v1202, %v1918
        %v1920 = vpop.f32.mrb[0].mxu0
        %1921 = vmatprep.mubr.bf16.mxu0 %v1863
        %1922 = vmatmul.mubr.bf16.gmra.mrb[0].mxu0 %v1847
        %v1923 = vpop.f32.mrb[0].mxu0
        %v1924 = vadd.f32 %v1207, %v1923
        %v1925 = vpop.f32.mrb[0].mxu0
        %v1926 = vpop.f32.mrb[0].mxu0
        %v1927 = vadd.f32 %v1210, %v1926
        %v1928 = vpop.f32.mrb[0].mxu0
        %1929 = vdwg.mxu0
        %v1930 = vtanh.pop %v1900
        %v1931 = vtanh.pop %v1903
        %v1932 = vtanh.pop %v1908
        %v1933 = vtanh.pop %v1911
        %v1934 = vmul.f32 %v1916, 0.5
        %v1935 = vmul.f32 %v1919, 0.5
        %v1936 = vmul.f32 %v1924, 0.5
        %v1937 = vmul.f32 %v1927, 0.5
        %v1938 = vtanh.pop %v1934
        %v1939 = vtanh.pop %v1935
        %v1940 = vtanh.pop %v1936
        %v1941 = vtanh.pop %v1937
        %v1942 = vadd.f32 %v1938, 1.0
        %v1943 = vadd.f32 %v1939, 1.0
        %v1944 = vadd.f32 %v1940, 1.0
        %v1945 = vadd.f32 %v1941, 1.0
        %v1946 = vmul.f32 %v1942, 0.5
        %v1947 = vmul.f32 %v1943, 0.5
        %v1948 = vmul.f32 %v1944, 0.5
        %v1949 = vmul.f32 %v1945, 0.5
        %v1950 = vmul.f32 %v1930, %v1946
        %v1951 = vmul.f32 %v1931, %v1947
        %v1952 = vmul.f32 %v1932, %v1948
        %v1953 = vmul.f32 %v1933, %v1949
        %s1954 = scalar_lea.vmem [#allocation20], 32
        %v1955 = vld [vmem:[%s1954] sm:$0xf]
        %v1956 = vld [vmem:[%s1954 + $0x4] sm:$0xf]
        %v1957 = vld [vmem:[%s1954 + $0x8] sm:$0xf]
        %v1958 = vld [vmem:[%s1954 + $0xc] sm:$0xf]
        %v1959 = vld [vmem:[%s1954 + $0x10] sm:$0xf]
        %v1960 = vld [vmem:[%s1954 + $0x14] sm:$0xf]
        %v1961 = vld [vmem:[%s1954 + $0x18] sm:$0xf]
        %v1962 = vld [vmem:[%s1954 + $0x1c] sm:$0xf]
        %v1963 = vpack.c.bf16 %v1951, %v1950
        %v1964 = vpack.c.bf16 %v1953, %v1952
        %s1965 = scalar_lea.vmem [#allocation21], 64
        %v1966 = vld [vmem:[%s1965] sm:$0xff]
        %v1967 = vld [vmem:[%s1965 + $0x8] sm:$0xff]
        %v1968 = vld [vmem:[%s1965 + $0x10] sm:$0xff]
        %v1969 = vld [vmem:[%s1965 + $0x18] sm:$0xff]
        %v1970 = vld [vmem:[%s1965 + $0x20] sm:$0xff]
        %v1971 = vld [vmem:[%s1965 + $0x28] sm:$0xff]
        %v1972 = vld [vmem:[%s1965 + $0x30] sm:$0xff]
        %v1973 = vld [vmem:[%s1965 + $0x38] sm:$0xff]
        %1975 = vset.pattern.permute.xlu0 0
        %1976 = vperm.xlu0 %1975, %v1966
        %v1977 = vpop.permute.xlu0 %1976
        %1980 = vset.pattern.permute.xlu0 0
        %1981 = vperm.xlu0 %1980, %v1967
        %v1982 = vpop.permute.xlu0 %1981
        %1985 = vset.pattern.permute.xlu0 0
        %1986 = vperm.xlu0 %1985, %v1968
        %v1987 = vpop.permute.xlu0 %1986
        %1990 = vset.pattern.permute.xlu0 0
        %1991 = vperm.xlu0 %1990, %v1969
        %v1992 = vpop.permute.xlu0 %1991
        %1995 = vset.pattern.permute.xlu0 0
        %1996 = vperm.xlu0 %1995, %v1970
        %v1997 = vpop.permute.xlu0 %1996
        %2000 = vset.pattern.permute.xlu0 0
        %2001 = vperm.xlu0 %2000, %v1971
        %v2002 = vpop.permute.xlu0 %2001
        %2005 = vset.pattern.permute.xlu0 0
        %2006 = vperm.xlu0 %2005, %v1972
        %v2007 = vpop.permute.xlu0 %2006
        %2010 = vset.pattern.permute.xlu0 0
        %2011 = vperm.xlu0 %2010, %v1973
        %v2012 = vpop.permute.xlu0 %2011
        %v2022 = vunpack.c.l.b16 %v1955
        %v2023 = vunpack.c.l.b16 %v1956
        %v2024 = vunpack.c.l.b16 %v1957
        %v2025 = vunpack.c.l.b16 %v1958
        %v2026 = vunpack.c.l.b16 %v1959
        %v2027 = vunpack.c.l.b16 %v1960
        %v2028 = vunpack.c.l.b16 %v1961
        %v2029 = vunpack.c.l.b16 %v1962
        %v2030 = vpack.c.b16 %v2023, %v2022
        %v2031 = vpack.c.b16 %v2025, %v2024
        %v2032 = vpack.c.b16 %v2027, %v2026
        %v2033 = vpack.c.b16 %v2029, %v2028
        %v2035 = vsel %vm1431, %v2030, 0
        %v2038 = vsel %vm1431, %v2031, 0
        %v2041 = vsel %vm1431, %v2032, 0
        %v2044 = vsel %vm1431, %v2033, 0
        %2046 = vmatprep.subr.bf16.mxu0 0
        %2047 = vmatpush1.bf16.msra.mxu0 %v1963
        %2048 = vmatprep.subr.bf16.mxu0 0
        %2049 = vmatpush1.bf16.msra.mxu0 %v1964
        %2050 = vmatprep.subr.bf16.mxu0 0
        %2051 = vmatpush1.bf16.msra.mxu0 0
        %2052 = vmatprep.subr.bf16.mxu0 0
        %2053 = vmatpush1.bf16.msra.mxu0 0
        %2054 = vmatprep.subr.bf16.mxu0 0
        %2055 = vmatpush1.bf16.msra.mxu0 0
        %2056 = vmatprep.subr.bf16.mxu0 0
        %2057 = vmatpush1.bf16.msra.mxu0 0
        %2058 = vmatprep.subr.bf16.mxu0 0
        %2059 = vmatpush1.bf16.msra.mxu0 0
        %2060 = vmatprep.subr.bf16.mxu0 0
        %2061 = vmatpush1.bf16.msra.mxu0 0
        %2062 = vmatprep.subr.bf16.mxu0 0
        %2063 = vmatpush1.bf16.msra.mxu0 0
        %2064 = vmatprep.subr.bf16.mxu0 0
        %2065 = vmatpush1.bf16.msra.mxu0 0
        %2066 = vmatprep.subr.bf16.mxu0 0
        %2067 = vmatpush1.bf16.msra.mxu0 0
        %2068 = vmatprep.subr.bf16.mxu0 0
        %2069 = vmatpush1.bf16.msra.mxu0 0
        %2070 = vmatprep.subr.bf16.mxu0 0
        %2071 = vmatpush1.bf16.msra.mxu0 0
        %2072 = vmatprep.subr.bf16.mxu0 0
        %2073 = vmatpush1.bf16.msra.mxu0 0
        %2074 = vmatprep.subr.bf16.mxu0 0
        %2075 = vmatpush1.bf16.msra.mxu0 0
        %2076 = vmatprep.subr.bf16.mxu0 0
        %2077 = vmatpush1.bf16.msra.mxu0 0
        %2078 = vmatprep.mubr.bf16.mxu0 0
        %2079 = vmatmul.mubr.bf16.gmra.mrb[0].mxu0 %v2035
        %v2080 = vpop.f32.mrb[0].mxu0
        %v2081 = vadd.f32 %v1977, %v2080
        %v2082 = vpop.f32.mrb[0].mxu0
        %v2083 = vpop.f32.mrb[0].mxu0
        %v2084 = vadd.f32 %v1982, %v2083
        %v2085 = vpop.f32.mrb[0].mxu0
        %2086 = vmatprep.mubr.bf16.mxu0 0
        %2087 = vmatmul.mubr.bf16.gmra.mrb[0].mxu0 %v2038
        %v2088 = vpop.f32.mrb[0].mxu0
        %v2089 = vadd.f32 %v1987, %v2088
        %v2090 = vpop.f32.mrb[0].mxu0
        %v2091 = vpop.f32.mrb[0].mxu0
        %v2092 = vadd.f32 %v1992, %v2091
        %v2093 = vpop.f32.mrb[0].mxu0
        %2094 = vmatprep.mubr.bf16.mxu0 0
        %2095 = vmatmul.mubr.bf16.gmra.mrb[0].mxu0 %v2041
        %v2096 = vpop.f32.mrb[0].mxu0
        %v2097 = vadd.f32 %v1997, %v2096
        %v2098 = vpop.f32.mrb[0].mxu0
        %v2099 = vpop.f32.mrb[0].mxu0
        %v2100 = vadd.f32 %v2002, %v2099
        %v2101 = vpop.f32.mrb[0].mxu0
        %2102 = vmatprep.mubr.bf16.mxu0 0
        %2103 = vmatmul.mubr.bf16.gmra.mrb[0].mxu0 %v2044
        %v2104 = vpop.f32.mrb[0].mxu0
        %v2105 = vadd.f32 %v2007, %v2104
        %v2106 = vpop.f32.mrb[0].mxu0
        %v2107 = vpop.f32.mrb[0].mxu0
        %v2108 = vadd.f32 %v2012, %v2107
        %v2109 = vpop.f32.mrb[0].mxu0
        %2110 = vdwg.mxu0
        %v2111 = vadd.f32 %v1692, %v2081
        %v2112 = vadd.f32 %v1693, %v2084
        %v2113 = vadd.f32 %v1694, %v2089
        %v2114 = vadd.f32 %v1695, %v2092
        %v2115 = vmul.f32 %v2111, %v646
        %v2116 = vmul.f32 %v2112, %v646
        %v2117 = vmul.f32 %v2113, %v646
        %v2118 = vmul.f32 %v2114, %v646
        %v2119 = vadd.f32 %v1696, %v2097
        %v2120 = vadd.f32 %v1697, %v2100
        %v2121 = vadd.f32 %v1698, %v2105
        %v2122 = vadd.f32 %v1699, %v2108
        %v2123 = vpack.c.bf16 %v2116, %v2115
        %v2124 = vpack.c.bf16 %v2118, %v2117
        %2125 = vst [vmem:[#allocation2 + $0x8] sm:$0xff] %v2123
        %2126 = vst [vmem:[#allocation2 + $0x20] sm:$0xff] %v2124
        %v2127 = vld [vmem:[#allocation2] sm:$0xff]
        %v2128 = vld [vmem:[#allocation2 + $0x8] sm:$0xff]
        %v2129 = vld [vmem:[#allocation2 + $0x18] sm:$0xff]
        %v2130 = vld [vmem:[#allocation2 + $0x20] sm:$0xff]
        %2135 = vrot.lane.b32.xlu0 %v2127, 8
        %v2136 = vpop.permute.xlu0 %2135
        %2137 = vrot.lane.b32.xlu0 %v2128, 8
        %v2138 = vpop.permute.xlu0 %2137
        %2139 = vrot.lane.b32.xlu0 %v2129, 8
        %v2140 = vpop.permute.xlu0 %2139
        %2141 = vrot.lane.b32.xlu0 %v2130, 8
        %v2142 = vpop.permute.xlu0 %2141
        %vm2143 = vcmask 64512
        %v2144 = vsel %vm2143, %v2136, %v2138
        %v2145 = vsel %vm2143, %v2140, %v2142
        %2148 = vst [vmem:[#allocation3] sm:$0xff] %v2144
        %2149 = vst [vmem:[#allocation3 + $0x8] sm:$0xff] %v2145
        %v2150 = vld [vmem:[#allocation2] sm:$0xff]
        %v2151 = vld [vmem:[#allocation2 + $0x8] sm:$0xff]
        %v2152 = vld [vmem:[#allocation2 + $0x18] sm:$0xff]
        %v2153 = vld [vmem:[#allocation2 + $0x20] sm:$0xff]
        %2158 = vrot.lane.b32.xlu0 %v2150, 4
        %v2159 = vpop.permute.xlu0 %2158
        %2160 = vrot.lane.b32.xlu0 %v2151, 4
        %v2161 = vpop.permute.xlu0 %2160
        %2162 = vrot.lane.b32.xlu0 %v2152, 4
        %v2163 = vpop.permute.xlu0 %2162
        %2164 = vrot.lane.b32.xlu0 %v2153, 4
        %v2165 = vpop.permute.xlu0 %2164
        %v2166 = vsel %vm1720, %v2159, %v2161
        %v2167 = vsel %vm1720, %v2163, %v2165
        %2170 = vst [vmem:[#allocation3 + $0x10] sm:$0xff] %v2166
        %2171 = vst [vmem:[#allocation3 + $0x18] sm:$0xff] %v2167
        %v2172 = vld [vmem:[#allocation2 + $0x8] sm:$0xff]
        %v2173 = vld [vmem:[#allocation2 + $0x20] sm:$0xff]
        %2174 = vst [vmem:[#allocation3 + $0x20] sm:$0xff] %v2172
        %2175 = vst [vmem:[#allocation3 + $0x28] sm:$0xff] %v2173
        %v2176 = vld [vmem:[#allocation2 + $0x8] sm:$0xff]
        %v2177 = vld [vmem:[#allocation2 + $0x10] sm:$0xff]
        %v2178 = vld [vmem:[#allocation2 + $0x20] sm:$0xff]
        %v2179 = vld [vmem:[#allocation2 + $0x28] sm:$0xff]
        %2184 = vrot.lane.b32.xlu0 %v2176, 124
        %v2185 = vpop.permute.xlu0 %2184
        %2186 = vrot.lane.b32.xlu0 %v2177, 124
        %v2187 = vpop.permute.xlu0 %2186
        %2188 = vrot.lane.b32.xlu0 %v2178, 124
        %v2189 = vpop.permute.xlu0 %2188
        %2190 = vrot.lane.b32.xlu0 %v2179, 124
        %v2191 = vpop.permute.xlu0 %2190
        %v2192 = vsel %vm1791, %v2185, %v2187
        %v2193 = vsel %vm1791, %v2189, %v2191
        %2196 = vst [vmem:[#allocation3 + $0x30] sm:$0xff] %v2192
        %2197 = vst [vmem:[#allocation3 + $0x38] sm:$0xff] %v2193
        %v2198 = vld [vmem:[#allocation2 + $0x8] sm:$0xff]
        %v2199 = vld [vmem:[#allocation2 + $0x10] sm:$0xff]
        %v2200 = vld [vmem:[#allocation2 + $0x20] sm:$0xff]
        %v2201 = vld [vmem:[#allocation2 + $0x28] sm:$0xff]
        %2206 = vrot.lane.b32.xlu0 %v2198, 120
        %v2207 = vpop.permute.xlu0 %2206
        %2208 = vrot.lane.b32.xlu0 %v2199, 120
        %v2209 = vpop.permute.xlu0 %2208
        %2210 = vrot.lane.b32.xlu0 %v2200, 120
        %v2211 = vpop.permute.xlu0 %2210
        %2212 = vrot.lane.b32.xlu0 %v2201, 120
        %v2213 = vpop.permute.xlu0 %2212
        %vm2214 = vcmask 982016
        %v2215 = vsel %vm2214, %v2207, %v2209
        %v2216 = vsel %vm2214, %v2211, %v2213
        %2219 = vst [vmem:[#allocation3 + $0x40] sm:$0xff] %v2215
        %2220 = vst [vmem:[#allocation3 + $0x48] sm:$0xff] %v2216
        %s2221 = scalar_lea.vmem [#allocation18], 128
        %v2222 = vld [vmem:[%s2221] sm:$0xff]
        %v2223 = vld [vmem:[%s2221 + $0x8] sm:$0xff]
        %v2224 = vld [vmem:[%s2221 + $0x10] sm:$0xff]
        %v2225 = vld [vmem:[%s2221 + $0x18] sm:$0xff]
        %v2226 = vld [vmem:[%s2221 + $0x20] sm:$0xff]
        %v2227 = vld [vmem:[%s2221 + $0x28] sm:$0xff]
        %v2228 = vld [vmem:[%s2221 + $0x30] sm:$0xff]
        %v2229 = vld [vmem:[%s2221 + $0x38] sm:$0xff]
        %v2230 = vld [vmem:[#allocation3] sm:$0xff]
        %v2231 = vld [vmem:[#allocation3 + $0x8] sm:$0xff]
        %v2232 = vld [vmem:[#allocation3 + $0x10] sm:$0xff]
        %v2233 = vld [vmem:[#allocation3 + $0x18] sm:$0xff]
        %v2234 = vld [vmem:[#allocation3 + $0x20] sm:$0xff]
        %v2235 = vld [vmem:[#allocation3 + $0x28] sm:$0xff]
        %v2236 = vld [vmem:[#allocation3 + $0x30] sm:$0xff]
        %v2237 = vld [vmem:[#allocation3 + $0x38] sm:$0xff]
        %v2238 = vld [vmem:[#allocation3 + $0x40] sm:$0xff]
        %v2239 = vld [vmem:[#allocation3 + $0x48] sm:$0xff]
        %v2248 = vunpack.c.l.b16 %v2222
        %v2249 = vunpack.c.h.b16 %v2222
        %v2250 = vunpack.c.l.b16 %v2223
        %v2251 = vunpack.c.h.b16 %v2223
        %v2252 = vunpack.c.l.b16 %v2224
        %v2253 = vunpack.c.h.b16 %v2224
        %v2254 = vunpack.c.l.b16 %v2225
        %v2255 = vunpack.c.h.b16 %v2225
        %v2256 = vunpack.c.l.b16 %v2226
        %v2257 = vunpack.c.h.b16 %v2226
        %v2258 = vunpack.c.l.b16 %v2227
        %v2259 = vunpack.c.h.b16 %v2227
        %v2260 = vunpack.c.l.b16 %v2228
        %v2261 = vunpack.c.h.b16 %v2228
        %v2262 = vunpack.c.l.b16 %v2229
        %v2263 = vunpack.c.h.b16 %v2229
        %v2264 = vpack.c.b16 %v2250, %v2248
        %v2265 = vpack.c.b16 %v2251, %v2249
        %v2266 = vpack.c.b16 %v2254, %v2252
        %v2267 = vpack.c.b16 %v2255, %v2253
        %v2268 = vpack.c.b16 %v2258, %v2256
        %v2269 = vpack.c.b16 %v2259, %v2257
        %v2270 = vpack.c.b16 %v2262, %v2260
        %v2271 = vpack.c.b16 %v2263, %v2261
        %v2277 = vsel %vm1431, %v2265, 0
        %v2280 = vsel %vm1431, %v2267, 0
        %v2283 = vsel %vm1431, %v2269, 0
        %v2286 = vsel %vm1431, %v2271, 0
        %2288 = vmatprep.subr.bf16.mxu0 0
        %2289 = vmatpush1.bf16.msra.mxu0 %v2230
        %2290 = vmatprep.subr.bf16.mxu0 0
        %2291 = vmatpush1.bf16.msra.mxu0 %v2231
        %2292 = vmatprep.subr.bf16.mxu0 0
        %2293 = vmatpush1.bf16.msra.mxu0 %v2232
        %2294 = vmatprep.subr.bf16.mxu0 0
        %2295 = vmatpush1.bf16.msra.mxu0 %v2233
        %2296 = vmatprep.subr.bf16.mxu0 0
        %2297 = vmatpush1.bf16.msra.mxu0 %v2234
        %2298 = vmatprep.subr.bf16.mxu0 0
        %2299 = vmatpush1.bf16.msra.mxu0 %v2235
        %2300 = vmatprep.subr.bf16.mxu0 0
        %2301 = vmatpush1.bf16.msra.mxu0 %v2236
        %2302 = vmatprep.subr.bf16.mxu0 0
        %2303 = vmatpush1.bf16.msra.mxu0 %v2237
        %2304 = vmatprep.subr.bf16.mxu0 0
        %2305 = vmatpush1.bf16.msra.mxu0 %v2238
        %2306 = vmatprep.subr.bf16.mxu0 0
        %2307 = vmatpush1.bf16.msra.mxu0 %v2239
        %2308 = vmatprep.subr.bf16.mxu0 0
        %2309 = vmatpush1.bf16.msra.mxu0 0
        %2310 = vmatprep.subr.bf16.mxu0 0
        %2311 = vmatpush1.bf16.msra.mxu0 0
        %2312 = vmatprep.subr.bf16.mxu0 0
        %2313 = vmatpush1.bf16.msra.mxu0 0
        %2314 = vmatprep.subr.bf16.mxu0 0
        %2315 = vmatpush1.bf16.msra.mxu0 0
        %2316 = vmatprep.subr.bf16.mxu0 0
        %2317 = vmatpush1.bf16.msra.mxu0 0
        %2318 = vmatprep.subr.bf16.mxu0 0
        %2319 = vmatpush1.bf16.msra.mxu0 0
        %2320 = vmatprep.mubr.bf16.mxu0 %v2277
        %2321 = vmatmul.mubr.bf16.gmra.mrb[0].mxu0 %v2264
        %v2322 = vpop.f32.mrb[0].mxu0
        %v2323 = vadd.f32 %v1215, %v2322
        %v2324 = vpop.f32.mrb[0].mxu0
        %v2325 = vpop.f32.mrb[0].mxu0
        %v2326 = vadd.f32 %v1218, %v2325
        %v2327 = vpop.f32.mrb[0].mxu0
        %2328 = vmatprep.mubr.bf16.mxu0 %v2280
        %2329 = vmatmul.mubr.bf16.gmra.mrb[0].mxu0 %v2266
        %v2330 = vpop.f32.mrb[0].mxu0
        %v2331 = vadd.f32 %v1223, %v2330
        %v2332 = vpop.f32.mrb[0].mxu0
        %v2333 = vpop.f32.mrb[0].mxu0
        %v2334 = vadd.f32 %v1226, %v2333
        %v2335 = vpop.f32.mrb[0].mxu0
        %2336 = vmatprep.mubr.bf16.mxu0 %v2283
        %2337 = vmatmul.mubr.bf16.gmra.mrb[0].mxu0 %v2268
        %v2338 = vpop.f32.mrb[0].mxu0
        %v2339 = vadd.f32 %v1231, %v2338
        %v2340 = vpop.f32.mrb[0].mxu0
        %v2341 = vpop.f32.mrb[0].mxu0
        %v2342 = vadd.f32 %v1234, %v2341
        %v2343 = vpop.f32.mrb[0].mxu0
        %2344 = vmatprep.mubr.bf16.mxu0 %v2286
        %2345 = vmatmul.mubr.bf16.gmra.mrb[0].mxu0 %v2270
        %v2346 = vpop.f32.mrb[0].mxu0
        %v2347 = vadd.f32 %v1239, %v2346
        %v2348 = vpop.f32.mrb[0].mxu0
        %v2349 = vpop.f32.mrb[0].mxu0
        %v2350 = vadd.f32 %v1242, %v2349
        %v2351 = vpop.f32.mrb[0].mxu0
        %2352 = vdwg.mxu0
        %v2353 = vtanh.pop %v2323
        %v2354 = vtanh.pop %v2326
        %v2355 = vtanh.pop %v2331
        %v2356 = vtanh.pop %v2334
        %v2357 = vmul.f32 %v2339, 0.5
        %v2358 = vmul.f32 %v2342, 0.5
        %v2359 = vmul.f32 %v2347, 0.5
        %v2360 = vmul.f32 %v2350, 0.5
        %v2361 = vtanh.pop %v2357
        %v2362 = vtanh.pop %v2358
        %v2363 = vtanh.pop %v2359
        %v2364 = vtanh.pop %v2360
        %v2365 = vadd.f32 %v2361, 1.0
        %v2366 = vadd.f32 %v2362, 1.0
        %v2367 = vadd.f32 %v2363, 1.0
        %v2368 = vadd.f32 %v2364, 1.0
        %v2369 = vmul.f32 %v2365, 0.5
        %v2370 = vmul.f32 %v2366, 0.5
        %v2371 = vmul.f32 %v2367, 0.5
        %v2372 = vmul.f32 %v2368, 0.5
        %v2373 = vmul.f32 %v2353, %v2369
        %v2374 = vmul.f32 %v2354, %v2370
        %v2375 = vmul.f32 %v2355, %v2371
        %v2376 = vmul.f32 %v2356, %v2372
        %s2377 = scalar_lea.vmem [#allocation20], 64
        %v2378 = vld [vmem:[%s2377] sm:$0xf]
        %v2379 = vld [vmem:[%s2377 + $0x4] sm:$0xf]
        %v2380 = vld [vmem:[%s2377 + $0x8] sm:$0xf]
        %v2381 = vld [vmem:[%s2377 + $0xc] sm:$0xf]
        %v2382 = vld [vmem:[%s2377 + $0x10] sm:$0xf]
        %v2383 = vld [vmem:[%s2377 + $0x14] sm:$0xf]
        %v2384 = vld [vmem:[%s2377 + $0x18] sm:$0xf]
        %v2385 = vld [vmem:[%s2377 + $0x1c] sm:$0xf]
        %v2386 = vpack.c.bf16 %v2374, %v2373
        %v2387 = vpack.c.bf16 %v2376, %v2375
        %s2388 = scalar_lea.vmem [#allocation21], 128
        %v2389 = vld [vmem:[%s2388] sm:$0xff]
        %v2390 = vld [vmem:[%s2388 + $0x8] sm:$0xff]
        %v2391 = vld [vmem:[%s2388 + $0x10] sm:$0xff]
        %v2392 = vld [vmem:[%s2388 + $0x18] sm:$0xff]
        %v2393 = vld [vmem:[%s2388 + $0x20] sm:$0xff]
        %v2394 = vld [vmem:[%s2388 + $0x28] sm:$0xff]
        %v2395 = vld [vmem:[%s2388 + $0x30] sm:$0xff]
        %v2396 = vld [vmem:[%s2388 + $0x38] sm:$0xff]
        %2398 = vset.pattern.permute.xlu0 0
        %2399 = vperm.xlu0 %2398, %v2389
        %v2400 = vpop.permute.xlu0 %2399
        %2403 = vset.pattern.permute.xlu0 0
        %2404 = vperm.xlu0 %2403, %v2390
        %v2405 = vpop.permute.xlu0 %2404
        %2408 = vset.pattern.permute.xlu0 0
        %2409 = vperm.xlu0 %2408, %v2391
        %v2410 = vpop.permute.xlu0 %2409
        %2413 = vset.pattern.permute.xlu0 0
        %2414 = vperm.xlu0 %2413, %v2392
        %v2415 = vpop.permute.xlu0 %2414
        %2418 = vset.pattern.permute.xlu0 0
        %2419 = vperm.xlu0 %2418, %v2393
        %v2420 = vpop.permute.xlu0 %2419
        %2423 = vset.pattern.permute.xlu0 0
        %2424 = vperm.xlu0 %2423, %v2394
        %v2425 = vpop.permute.xlu0 %2424
        %2428 = vset.pattern.permute.xlu0 0
        %2429 = vperm.xlu0 %2428, %v2395
        %v2430 = vpop.permute.xlu0 %2429
        %2433 = vset.pattern.permute.xlu0 0
        %2434 = vperm.xlu0 %2433, %v2396
        %v2435 = vpop.permute.xlu0 %2434
        %v2445 = vunpack.c.l.b16 %v2378
        %v2446 = vunpack.c.l.b16 %v2379
        %v2447 = vunpack.c.l.b16 %v2380
        %v2448 = vunpack.c.l.b16 %v2381
        %v2449 = vunpack.c.l.b16 %v2382
        %v2450 = vunpack.c.l.b16 %v2383
        %v2451 = vunpack.c.l.b16 %v2384
        %v2452 = vunpack.c.l.b16 %v2385
        %v2453 = vpack.c.b16 %v2446, %v2445
        %v2454 = vpack.c.b16 %v2448, %v2447
        %v2455 = vpack.c.b16 %v2450, %v2449
        %v2456 = vpack.c.b16 %v2452, %v2451
        %v2458 = vsel %vm1431, %v2453, 0
        %v2461 = vsel %vm1431, %v2454, 0
        %v2464 = vsel %vm1431, %v2455, 0
        %v2467 = vsel %vm1431, %v2456, 0
        %2469 = vmatprep.subr.bf16.mxu0 0
        %2470 = vmatpush1.bf16.msra.mxu0 %v2386
        %2471 = vmatprep.subr.bf16.mxu0 0
        %2472 = vmatpush1.bf16.msra.mxu0 %v2387
        %2473 = vmatprep.subr.bf16.mxu0 0
        %2474 = vmatpush1.bf16.msra.mxu0 0
        %2475 = vmatprep.subr.bf16.mxu0 0
        %2476 = vmatpush1.bf16.msra.mxu0 0
        %2477 = vmatprep.subr.bf16.mxu0 0
        %2478 = vmatpush1.bf16.msra.mxu0 0
        %2479 = vmatprep.subr.bf16.mxu0 0
        %2480 = vmatpush1.bf16.msra.mxu0 0
        %2481 = vmatprep.subr.bf16.mxu0 0
        %2482 = vmatpush1.bf16.msra.mxu0 0
        %2483 = vmatprep.subr.bf16.mxu0 0
        %2484 = vmatpush1.bf16.msra.mxu0 0
        %2485 = vmatprep.subr.bf16.mxu0 0
        %2486 = vmatpush1.bf16.msra.mxu0 0
        %2487 = vmatprep.subr.bf16.mxu0 0
        %2488 = vmatpush1.bf16.msra.mxu0 0
        %2489 = vmatprep.subr.bf16.mxu0 0
        %2490 = vmatpush1.bf16.msra.mxu0 0
        %2491 = vmatprep.subr.bf16.mxu0 0
        %2492 = vmatpush1.bf16.msra.mxu0 0
        %2493 = vmatprep.subr.bf16.mxu0 0
        %2494 = vmatpush1.bf16.msra.mxu0 0
        %2495 = vmatprep.subr.bf16.mxu0 0
        %2496 = vmatpush1.bf16.msra.mxu0 0
        %2497 = vmatprep.subr.bf16.mxu0 0
        %2498 = vmatpush1.bf16.msra.mxu0 0
        %2499 = vmatprep.subr.bf16.mxu0 0
        %2500 = vmatpush1.bf16.msra.mxu0 0
        %2501 = vmatprep.mubr.bf16.mxu0 0
        %2502 = vmatmul.mubr.bf16.gmra.mrb[0].mxu0 %v2458
        %v2503 = vpop.f32.mrb[0].mxu0
        %v2504 = vadd.f32 %v2400, %v2503
        %v2505 = vpop.f32.mrb[0].mxu0
        %v2506 = vpop.f32.mrb[0].mxu0
        %v2507 = vadd.f32 %v2405, %v2506
        %v2508 = vpop.f32.mrb[0].mxu0
        %2509 = vmatprep.mubr.bf16.mxu0 0
        %2510 = vmatmul.mubr.bf16.gmra.mrb[0].mxu0 %v2461
        %v2511 = vpop.f32.mrb[0].mxu0
        %v2512 = vadd.f32 %v2410, %v2511
        %v2513 = vpop.f32.mrb[0].mxu0
        %v2514 = vpop.f32.mrb[0].mxu0
        %v2515 = vadd.f32 %v2415, %v2514
        %v2516 = vpop.f32.mrb[0].mxu0
        %2517 = vmatprep.mubr.bf16.mxu0 0
        %2518 = vmatmul.mubr.bf16.gmra.mrb[0].mxu0 %v2464
        %v2519 = vpop.f32.mrb[0].mxu0
        %v2520 = vadd.f32 %v2420, %v2519
        %v2521 = vpop.f32.mrb[0].mxu0
        %v2522 = vpop.f32.mrb[0].mxu0
        %v2523 = vadd.f32 %v2425, %v2522
        %v2524 = vpop.f32.mrb[0].mxu0
        %2525 = vmatprep.mubr.bf16.mxu0 0
        %2526 = vmatmul.mubr.bf16.gmra.mrb[0].mxu0 %v2467
        %v2527 = vpop.f32.mrb[0].mxu0
        %v2528 = vadd.f32 %v2430, %v2527
        %v2529 = vpop.f32.mrb[0].mxu0
        %v2530 = vpop.f32.mrb[0].mxu0
        %v2531 = vadd.f32 %v2435, %v2530
        %v2532 = vpop.f32.mrb[0].mxu0
        %2533 = vdwg.mxu0
        %v2534 = vadd.f32 %v2115, %v2504
        %v2535 = vadd.f32 %v2116, %v2507
        %v2536 = vadd.f32 %v2117, %v2512
        %v2537 = vadd.f32 %v2118, %v2515
        %v2538 = vmul.f32 %v2534, %v646
        %v2539 = vmul.f32 %v2535, %v646
        %v2540 = vmul.f32 %v2536, %v646
        %v2541 = vmul.f32 %v2537, %v646
        %v2542 = vadd.f32 %v2119, %v2520
        %v2543 = vadd.f32 %v2120, %v2523
        %v2544 = vadd.f32 %v2121, %v2528
        %v2545 = vadd.f32 %v2122, %v2531
        %v2546 = vpack.c.bf16 %v2539, %v2538
        %v2547 = vpack.c.bf16 %v2541, %v2540
        %2548 = vst [vmem:[#allocation2 + $0x8] sm:$0xff] %v2546
        %2549 = vst [vmem:[#allocation2 + $0x20] sm:$0xff] %v2547
        %v2550 = vld [vmem:[#allocation2] sm:$0xff]
        %v2551 = vld [vmem:[#allocation2 + $0x8] sm:$0xff]
        %v2552 = vld [vmem:[#allocation2 + $0x18] sm:$0xff]
        %v2553 = vld [vmem:[#allocation2 + $0x20] sm:$0xff]
        %2558 = vrot.lane.b32.xlu0 %v2550, 16
        %v2559 = vpop.permute.xlu0 %2558
        %2560 = vrot.lane.b32.xlu0 %v2551, 16
        %v2561 = vpop.permute.xlu0 %2560
        %2562 = vrot.lane.b32.xlu0 %v2552, 16
        %v2563 = vpop.permute.xlu0 %2562
        %2564 = vrot.lane.b32.xlu0 %v2553, 16
        %v2565 = vpop.permute.xlu0 %2564
        %vm2566 = vcmask 130048
        %v2567 = vsel %vm2566, %v2559, %v2561
        %v2568 = vsel %vm2566, %v2563, %v2565
        %2571 = vst [vmem:[#allocation3] sm:$0xff] %v2567
        %2572 = vst [vmem:[#allocation3 + $0x8] sm:$0xff] %v2568
        %v2573 = vld [vmem:[#allocation2] sm:$0xff]
        %v2574 = vld [vmem:[#allocation2 + $0x8] sm:$0xff]
        %v2575 = vld [vmem:[#allocation2 + $0x18] sm:$0xff]
        %v2576 = vld [vmem:[#allocation2 + $0x20] sm:$0xff]
        %2581 = vrot.lane.b32.xlu0 %v2573, 8
        %v2582 = vpop.permute.xlu0 %2581
        %2583 = vrot.lane.b32.xlu0 %v2574, 8
        %v2584 = vpop.permute.xlu0 %2583
        %2585 = vrot.lane.b32.xlu0 %v2575, 8
        %v2586 = vpop.permute.xlu0 %2585
        %2587 = vrot.lane.b32.xlu0 %v2576, 8
        %v2588 = vpop.permute.xlu0 %2587
        %v2589 = vsel %vm2143, %v2582, %v2584
        %v2590 = vsel %vm2143, %v2586, %v2588
        %2593 = vst [vmem:[#allocation3 + $0x10] sm:$0xff] %v2589
        %2594 = vst [vmem:[#allocation3 + $0x18] sm:$0xff] %v2590
        %v2595 = vld [vmem:[#allocation2 + $0x8] sm:$0xff]
        %v2596 = vld [vmem:[#allocation2 + $0x20] sm:$0xff]
        %2597 = vst [vmem:[#allocation3 + $0x20] sm:$0xff] %v2595
        %2598 = vst [vmem:[#allocation3 + $0x28] sm:$0xff] %v2596
        %v2599 = vld [vmem:[#allocation2 + $0x8] sm:$0xff]
        %v2600 = vld [vmem:[#allocation2 + $0x10] sm:$0xff]
        %v2601 = vld [vmem:[#allocation2 + $0x20] sm:$0xff]
        %v2602 = vld [vmem:[#allocation2 + $0x28] sm:$0xff]
        %2607 = vrot.lane.b32.xlu0 %v2599, 120
        %v2608 = vpop.permute.xlu0 %2607
        %2609 = vrot.lane.b32.xlu0 %v2600, 120
        %v2610 = vpop.permute.xlu0 %2609
        %2611 = vrot.lane.b32.xlu0 %v2601, 120
        %v2612 = vpop.permute.xlu0 %2611
        %2613 = vrot.lane.b32.xlu0 %v2602, 120
        %v2614 = vpop.permute.xlu0 %2613
        %v2615 = vsel %vm2214, %v2608, %v2610
        %v2616 = vsel %vm2214, %v2612, %v2614
        %2619 = vst [vmem:[#allocation3 + $0x30] sm:$0xff] %v2615
        %2620 = vst [vmem:[#allocation3 + $0x38] sm:$0xff] %v2616
        %v2621 = vld [vmem:[#allocation2 + $0x8] sm:$0xff]
        %v2622 = vld [vmem:[#allocation2 + $0x10] sm:$0xff]
        %v2623 = vld [vmem:[#allocation2 + $0x20] sm:$0xff]
        %v2624 = vld [vmem:[#allocation2 + $0x28] sm:$0xff]
        %2629 = vrot.lane.b32.xlu0 %v2621, 112
        %v2630 = vpop.permute.xlu0 %2629
        %2631 = vrot.lane.b32.xlu0 %v2622, 112
        %v2632 = vpop.permute.xlu0 %2631
        %2633 = vrot.lane.b32.xlu0 %v2623, 112
        %v2634 = vpop.permute.xlu0 %2633
        %2635 = vrot.lane.b32.xlu0 %v2624, 112
        %v2636 = vpop.permute.xlu0 %2635
        %vm2637 = vcmask 916480
        %v2638 = vsel %vm2637, %v2630, %v2632
        %v2639 = vsel %vm2637, %v2634, %v2636
        %2642 = vst [vmem:[#allocation3 + $0x40] sm:$0xff] %v2638
        %2643 = vst [vmem:[#allocation3 + $0x48] sm:$0xff] %v2639
        %s2644 = scalar_lea.vmem [#allocation18], 192
        %v2645 = vld [vmem:[%s2644] sm:$0xff]
        %v2646 = vld [vmem:[%s2644 + $0x8] sm:$0xff]
        %v2647 = vld [vmem:[%s2644 + $0x10] sm:$0xff]
        %v2648 = vld [vmem:[%s2644 + $0x18] sm:$0xff]
        %v2649 = vld [vmem:[%s2644 + $0x20] sm:$0xff]
        %v2650 = vld [vmem:[%s2644 + $0x28] sm:$0xff]
        %v2651 = vld [vmem:[%s2644 + $0x30] sm:$0xff]
        %v2652 = vld [vmem:[%s2644 + $0x38] sm:$0xff]
        %v2653 = vld [vmem:[#allocation3] sm:$0xff]
        %v2654 = vld [vmem:[#allocation3 + $0x8] sm:$0xff]
        %v2655 = vld [vmem:[#allocation3 + $0x10] sm:$0xff]
        %v2656 = vld [vmem:[#allocation3 + $0x18] sm:$0xff]
        %v2657 = vld [vmem:[#allocation3 + $0x20] sm:$0xff]
        %v2658 = vld [vmem:[#allocation3 + $0x28] sm:$0xff]
        %v2659 = vld [vmem:[#allocation3 + $0x30] sm:$0xff]
        %v2660 = vld [vmem:[#allocation3 + $0x38] sm:$0xff]
        %v2661 = vld [vmem:[#allocation3 + $0x40] sm:$0xff]
        %v2662 = vld [vmem:[#allocation3 + $0x48] sm:$0xff]
        %v2671 = vunpack.c.l.b16 %v2645
        %v2672 = vunpack.c.h.b16 %v2645
        %v2673 = vunpack.c.l.b16 %v2646
        %v2674 = vunpack.c.h.b16 %v2646
        %v2675 = vunpack.c.l.b16 %v2647
        %v2676 = vunpack.c.h.b16 %v2647
        %v2677 = vunpack.c.l.b16 %v2648
        %v2678 = vunpack.c.h.b16 %v2648
        %v2679 = vunpack.c.l.b16 %v2649
        %v2680 = vunpack.c.h.b16 %v2649
        %v2681 = vunpack.c.l.b16 %v2650
        %v2682 = vunpack.c.h.b16 %v2650
        %v2683 = vunpack.c.l.b16 %v2651
        %v2684 = vunpack.c.h.b16 %v2651
        %v2685 = vunpack.c.l.b16 %v2652
        %v2686 = vunpack.c.h.b16 %v2652
        %v2687 = vpack.c.b16 %v2673, %v2671
        %v2688 = vpack.c.b16 %v2674, %v2672
        %v2689 = vpack.c.b16 %v2677, %v2675
        %v2690 = vpack.c.b16 %v2678, %v2676
        %v2691 = vpack.c.b16 %v2681, %v2679
        %v2692 = vpack.c.b16 %v2682, %v2680
        %v2693 = vpack.c.b16 %v2685, %v2683
        %v2694 = vpack.c.b16 %v2686, %v2684
        %v2700 = vsel %vm1431, %v2688, 0
        %v2703 = vsel %vm1431, %v2690, 0
        %v2706 = vsel %vm1431, %v2692, 0
        %v2709 = vsel %vm1431, %v2694, 0
        %2711 = vmatprep.subr.bf16.mxu0 0
        %2712 = vmatpush1.bf16.msra.mxu0 %v2653
        %2713 = vmatprep.subr.bf16.mxu0 0
        %2714 = vmatpush1.bf16.msra.mxu0 %v2654
        %2715 = vmatprep.subr.bf16.mxu0 0
        %2716 = vmatpush1.bf16.msra.mxu0 %v2655
        %2717 = vmatprep.subr.bf16.mxu0 0
        %2718 = vmatpush1.bf16.msra.mxu0 %v2656
        %2719 = vmatprep.subr.bf16.mxu0 0
        %2720 = vmatpush1.bf16.msra.mxu0 %v2657
        %2721 = vmatprep.subr.bf16.mxu0 0
        %2722 = vmatpush1.bf16.msra.mxu0 %v2658
        %2723 = vmatprep.subr.bf16.mxu0 0
        %2724 = vmatpush1.bf16.msra.mxu0 %v2659
        %2725 = vmatprep.subr.bf16.mxu0 0
        %2726 = vmatpush1.bf16.msra.mxu0 %v2660
        %2727 = vmatprep.subr.bf16.mxu0 0
        %2728 = vmatpush1.bf16.msra.mxu0 %v2661
        %2729 = vmatprep.subr.bf16.mxu0 0
        %2730 = vmatpush1.bf16.msra.mxu0 %v2662
        %2731 = vmatprep.subr.bf16.mxu0 0
        %2732 = vmatpush1.bf16.msra.mxu0 0
        %2733 = vmatprep.subr.bf16.mxu0 0
        %2734 = vmatpush1.bf16.msra.mxu0 0
        %2735 = vmatprep.subr.bf16.mxu0 0
        %2736 = vmatpush1.bf16.msra.mxu0 0
        %2737 = vmatprep.subr.bf16.mxu0 0
        %2738 = vmatpush1.bf16.msra.mxu0 0
        %2739 = vmatprep.subr.bf16.mxu0 0
        %2740 = vmatpush1.bf16.msra.mxu0 0
        %2741 = vmatprep.subr.bf16.mxu0 0
        %2742 = vmatpush1.bf16.msra.mxu0 0
        %2743 = vmatprep.mubr.bf16.mxu0 %v2700
        %2744 = vmatmul.mubr.bf16.gmra.mrb[0].mxu0 %v2687
        %v2745 = vpop.f32.mrb[0].mxu0
        %v2746 = vadd.f32 %v1247, %v2745
        %v2747 = vpop.f32.mrb[0].mxu0
        %v2748 = vpop.f32.mrb[0].mxu0
        %v2749 = vadd.f32 %v1250, %v2748
        %v2750 = vpop.f32.mrb[0].mxu0
        %2751 = vmatprep.mubr.bf16.mxu0 %v2703
        %2752 = vmatmul.mubr.bf16.gmra.mrb[0].mxu0 %v2689
        %v2753 = vpop.f32.mrb[0].mxu0
        %v2754 = vadd.f32 %v1255, %v2753
        %v2755 = vpop.f32.mrb[0].mxu0
        %v2756 = vpop.f32.mrb[0].mxu0
        %v2757 = vadd.f32 %v1258, %v2756
        %v2758 = vpop.f32.mrb[0].mxu0
        %2759 = vmatprep.mubr.bf16.mxu0 %v2706
        %2760 = vmatmul.mubr.bf16.gmra.mrb[0].mxu0 %v2691
        %v2761 = vpop.f32.mrb[0].mxu0
        %v2762 = vadd.f32 %v1263, %v2761
        %v2763 = vpop.f32.mrb[0].mxu0
        %v2764 = vpop.f32.mrb[0].mxu0
        %v2765 = vadd.f32 %v1266, %v2764
        %v2766 = vpop.f32.mrb[0].mxu0
        %2767 = vmatprep.mubr.bf16.mxu0 %v2709
        %2768 = vmatmul.mubr.bf16.gmra.mrb[0].mxu0 %v2693
        %v2769 = vpop.f32.mrb[0].mxu0
        %v2770 = vadd.f32 %v1271, %v2769
        %v2771 = vpop.f32.mrb[0].mxu0
        %v2772 = vpop.f32.mrb[0].mxu0
        %v2773 = vadd.f32 %v1274, %v2772
        %v2774 = vpop.f32.mrb[0].mxu0
        %2775 = vdwg.mxu0
        %v2776 = vtanh.pop %v2746
        %v2777 = vtanh.pop %v2749
        %v2778 = vtanh.pop %v2754
        %v2779 = vtanh.pop %v2757
        %v2780 = vmul.f32 %v2762, 0.5
        %v2781 = vmul.f32 %v2765, 0.5
        %v2782 = vmul.f32 %v2770, 0.5
        %v2783 = vmul.f32 %v2773, 0.5
        %v2784 = vtanh.pop %v2780
        %v2785 = vtanh.pop %v2781
        %v2786 = vtanh.pop %v2782
        %v2787 = vtanh.pop %v2783
        %v2788 = vadd.f32 %v2784, 1.0
        %v2789 = vadd.f32 %v2785, 1.0
        %v2790 = vadd.f32 %v2786, 1.0
        %v2791 = vadd.f32 %v2787, 1.0
        %v2792 = vmul.f32 %v2788, 0.5
        %v2793 = vmul.f32 %v2789, 0.5
        %v2794 = vmul.f32 %v2790, 0.5
        %v2795 = vmul.f32 %v2791, 0.5
        %v2796 = vmul.f32 %v2776, %v2792
        %v2797 = vmul.f32 %v2777, %v2793
        %v2798 = vmul.f32 %v2778, %v2794
        %v2799 = vmul.f32 %v2779, %v2795
        %s2800 = scalar_lea.vmem [#allocation20], 96
        %v2801 = vld [vmem:[%s2800] sm:$0xf]
        %v2802 = vld [vmem:[%s2800 + $0x4] sm:$0xf]
        %v2803 = vld [vmem:[%s2800 + $0x8] sm:$0xf]
        %v2804 = vld [vmem:[%s2800 + $0xc] sm:$0xf]
        %v2805 = vld [vmem:[%s2800 + $0x10] sm:$0xf]
        %v2806 = vld [vmem:[%s2800 + $0x14] sm:$0xf]
        %v2807 = vld [vmem:[%s2800 + $0x18] sm:$0xf]
        %v2808 = vld [vmem:[%s2800 + $0x1c] sm:$0xf]
        %v2809 = vpack.c.bf16 %v2797, %v2796
        %v2810 = vpack.c.bf16 %v2799, %v2798
        %s2811 = scalar_lea.vmem [#allocation21], 192
        %v2812 = vld [vmem:[%s2811] sm:$0xff]
        %v2813 = vld [vmem:[%s2811 + $0x8] sm:$0xff]
        %v2814 = vld [vmem:[%s2811 + $0x10] sm:$0xff]
        %v2815 = vld [vmem:[%s2811 + $0x18] sm:$0xff]
        %v2816 = vld [vmem:[%s2811 + $0x20] sm:$0xff]
        %v2817 = vld [vmem:[%s2811 + $0x28] sm:$0xff]
        %v2818 = vld [vmem:[%s2811 + $0x30] sm:$0xff]
        %v2819 = vld [vmem:[%s2811 + $0x38] sm:$0xff]
        %2821 = vset.pattern.permute.xlu0 0
        %2822 = vperm.xlu0 %2821, %v2812
        %v2823 = vpop.permute.xlu0 %2822
        %2825 = vset.pattern.permute.xlu0 0
        %2826 = vperm.xlu0 %2825, %v2813
        %v2827 = vpop.permute.xlu0 %2826
        %2829 = vset.pattern.permute.xlu0 0
        %2830 = vperm.xlu0 %2829, %v2814
        %v2831 = vpop.permute.xlu0 %2830
        %2833 = vset.pattern.permute.xlu0 0
        %2834 = vperm.xlu0 %2833, %v2815
        %v2835 = vpop.permute.xlu0 %2834
        %2837 = vset.pattern.permute.xlu0 0
        %2838 = vperm.xlu0 %2837, %v2816
        %v2839 = vpop.permute.xlu0 %2838
        %2842 = vset.pattern.permute.xlu0 0
        %2843 = vperm.xlu0 %2842, %v2817
        %v2844 = vpop.permute.xlu0 %2843
        %2847 = vset.pattern.permute.xlu0 0
        %2848 = vperm.xlu0 %2847, %v2818
        %v2849 = vpop.permute.xlu0 %2848
        %2852 = vset.pattern.permute.xlu0 0
        %2853 = vperm.xlu0 %2852, %v2819
        %v2854 = vpop.permute.xlu0 %2853
        %v2864 = vunpack.c.l.b16 %v2801
        %v2865 = vunpack.c.l.b16 %v2802
        %v2866 = vunpack.c.l.b16 %v2803
        %v2867 = vunpack.c.l.b16 %v2804
        %v2868 = vunpack.c.l.b16 %v2805
        %v2869 = vunpack.c.l.b16 %v2806
        %v2870 = vunpack.c.l.b16 %v2807
        %v2871 = vunpack.c.l.b16 %v2808
        %v2872 = vpack.c.b16 %v2865, %v2864
        %v2873 = vpack.c.b16 %v2867, %v2866
        %v2874 = vpack.c.b16 %v2869, %v2868
        %v2875 = vpack.c.b16 %v2871, %v2870
        %v2877 = vsel %vm1431, %v2872, 0
        %v2880 = vsel %vm1431, %v2873, 0
        %v2883 = vsel %vm1431, %v2874, 0
        %v2886 = vsel %vm1431, %v2875, 0
        %2888 = vmatprep.subr.bf16.mxu0 0
        %2889 = vmatpush1.bf16.msra.mxu0 %v2809
        %2890 = vmatprep.subr.bf16.mxu0 0
        %2891 = vmatpush1.bf16.msra.mxu0 %v2810
        %2892 = vmatprep.subr.bf16.mxu0 0
        %2893 = vmatpush1.bf16.msra.mxu0 0
        %2894 = vmatprep.subr.bf16.mxu0 0
        %2895 = vmatpush1.bf16.msra.mxu0 0
        %2896 = vmatprep.subr.bf16.mxu0 0
        %2897 = vmatpush1.bf16.msra.mxu0 0
        %2898 = vmatprep.subr.bf16.mxu0 0
        %2899 = vmatpush1.bf16.msra.mxu0 0
        %2900 = vmatprep.subr.bf16.mxu0 0
        %2901 = vmatpush1.bf16.msra.mxu0 0
        %2902 = vmatprep.subr.bf16.mxu0 0
        %2903 = vmatpush1.bf16.msra.mxu0 0
        %2904 = vmatprep.subr.bf16.mxu0 0
        %2905 = vmatpush1.bf16.msra.mxu0 0
        %2906 = vmatprep.subr.bf16.mxu0 0
        %2907 = vmatpush1.bf16.msra.mxu0 0
        %2908 = vmatprep.subr.bf16.mxu0 0
        %2909 = vmatpush1.bf16.msra.mxu0 0
        %2910 = vmatprep.subr.bf16.mxu0 0
        %2911 = vmatpush1.bf16.msra.mxu0 0
        %2912 = vmatprep.subr.bf16.mxu0 0
        %2913 = vmatpush1.bf16.msra.mxu0 0
        %2914 = vmatprep.subr.bf16.mxu0 0
        %2915 = vmatpush1.bf16.msra.mxu0 0
        %2916 = vmatprep.subr.bf16.mxu0 0
        %2917 = vmatpush1.bf16.msra.mxu0 0
        %2918 = vmatprep.subr.bf16.mxu0 0
        %2919 = vmatpush1.bf16.msra.mxu0 0
        %2920 = vmatprep.mubr.bf16.mxu0 0
        %2921 = vmatmul.mubr.bf16.gmra.mrb[0].mxu0 %v2877
        %v2922 = vpop.f32.mrb[0].mxu0
        %v2923 = vpop.f32.mrb[0].mxu0
        %v2924 = vpop.f32.mrb[0].mxu0
        %v2925 = vpop.f32.mrb[0].mxu0
        %2926 = vmatprep.mubr.bf16.mxu0 0
        %2927 = vmatmul.mubr.bf16.gmra.mrb[0].mxu0 %v2880
        %v2928 = vpop.f32.mrb[0].mxu0
        %v2929 = vpop.f32.mrb[0].mxu0
        %v2930 = vpop.f32.mrb[0].mxu0
        %v2931 = vpop.f32.mrb[0].mxu0
        %2932 = vmatprep.mubr.bf16.mxu0 0
        %2933 = vmatmul.mubr.bf16.gmra.mrb[0].mxu0 %v2883
        %v2934 = vpop.f32.mrb[0].mxu0
        %v2935 = vadd.f32 %v2839, %v2934
        %v2936 = vpop.f32.mrb[0].mxu0
        %v2937 = vpop.f32.mrb[0].mxu0
        %v2938 = vadd.f32 %v2844, %v2937
        %v2939 = vpop.f32.mrb[0].mxu0
        %2940 = vmatprep.mubr.bf16.mxu0 0
        %2941 = vmatmul.mubr.bf16.gmra.mrb[0].mxu0 %v2886
        %v2942 = vpop.f32.mrb[0].mxu0
        %v2943 = vadd.f32 %v2849, %v2942
        %v2944 = vpop.f32.mrb[0].mxu0
        %v2945 = vpop.f32.mrb[0].mxu0
        %v2946 = vadd.f32 %v2854, %v2945
        %v2947 = vpop.f32.mrb[0].mxu0
        %2948 = vdwg.mxu0
        %v2949 = vadd.f32 %v2542, %v2935
        %v2950 = vadd.f32 %v2543, %v2938
        %v2951 = vadd.f32 %v2544, %v2943
        %v2952 = vadd.f32 %v2545, %v2946
        %v2953 = vmul.f32 %v2949, %v646
        %v2954 = vmul.f32 %v2950, %v646
        %v2955 = vmul.f32 %v2951, %v646
        %v2956 = vmul.f32 %v2952, %v646
        %v2957 = vld [vmem:[#allocation23] sm:$0xf]
        %v2958 = vld [vmem:[#allocation23 + $0x4] sm:$0xf]
        %v2959 = vpack.c.bf16 %v2954, %v2953
        %v2960 = vpack.c.bf16 %v2956, %v2955
        %v2961 = vld [vmem:[#allocation24] sm:$0xff]
        %v2962 = vld [vmem:[#allocation24 + $0x8] sm:$0xff]
        %2964 = vset.pattern.permute.xlu0 0
        %2965 = vperm.xlu0 %2964, %v2961
        %v2966 = vpop.permute.xlu0 %2965
        %2969 = vset.pattern.permute.xlu0 0
        %2970 = vperm.xlu0 %2969, %v2962
        %v2971 = vpop.permute.xlu0 %2970
        %v2975 = vunpack.c.l.b16 %v2957
        %v2976 = vunpack.c.l.b16 %v2958
        %v2977 = vpack.c.b16 %v2976, %v2975
        %v2979 = vsel %vm1431, %v2977, 0
        %2981 = vmatprep.subr.bf16.mxu0 0
        %2982 = vmatpush1.bf16.msra.mxu0 %v2959
        %2983 = vmatprep.subr.bf16.mxu0 0
        %2984 = vmatpush1.bf16.msra.mxu0 %v2960
        %2985 = vmatprep.subr.bf16.mxu0 0
        %2986 = vmatpush1.bf16.msra.mxu0 0
        %2987 = vmatprep.subr.bf16.mxu0 0
        %2988 = vmatpush1.bf16.msra.mxu0 0
        %2989 = vmatprep.subr.bf16.mxu0 0
        %2990 = vmatpush1.bf16.msra.mxu0 0
        %2991 = vmatprep.subr.bf16.mxu0 0
        %2992 = vmatpush1.bf16.msra.mxu0 0
        %2993 = vmatprep.subr.bf16.mxu0 0
        %2994 = vmatpush1.bf16.msra.mxu0 0
        %2995 = vmatprep.subr.bf16.mxu0 0
        %2996 = vmatpush1.bf16.msra.mxu0 0
        %2997 = vmatprep.subr.bf16.mxu0 0
        %2998 = vmatpush1.bf16.msra.mxu0 0
        %2999 = vmatprep.subr.bf16.mxu0 0
        %3000 = vmatpush1.bf16.msra.mxu0 0
        %3001 = vmatprep.subr.bf16.mxu0 0
        %3002 = vmatpush1.bf16.msra.mxu0 0
        %3003 = vmatprep.subr.bf16.mxu0 0
        %3004 = vmatpush1.bf16.msra.mxu0 0
        %3005 = vmatprep.subr.bf16.mxu0 0
        %3006 = vmatpush1.bf16.msra.mxu0 0
        %3007 = vmatprep.subr.bf16.mxu0 0
        %3008 = vmatpush1.bf16.msra.mxu0 0
        %3009 = vmatprep.subr.bf16.mxu0 0
        %3010 = vmatpush1.bf16.msra.mxu0 0
        %3011 = vmatprep.subr.bf16.mxu0 0
        %3012 = vmatpush1.bf16.msra.mxu0 0
        %3013 = vmatprep.mubr.bf16.mxu0 0
        %3014 = vmatmul.mubr.bf16.gmra.mrb[0].mxu0 %v2979
        %v3015 = vpop.f32.mrb[0].mxu0
        %v3016 = vadd.f32 %v2966, %v3015
        %v3017 = vpop.f32.mrb[0].mxu0
        %v3018 = vpop.f32.mrb[0].mxu0
        %v3019 = vadd.f32 %v2971, %v3018
        %v3020 = vpop.f32.mrb[0].mxu0
        %3021 = vdwg.mxu0
        %v3022 = vmul.f32 %v3016, %v646
        %v3023 = vmul.f32 %v3019, %v646
        %v3024 = vld [vmem:[%s552] sm:$0xff]
        %v3025 = vmul.f32 %v3023, 1.442695
        %v3026 = vpow.pop %v3025
        %v3027 = vmul.f32 %v3024, %v3026
        %v3028 = vadd.f32 %v3022, %v3027
        %v3029 = vmul.f32 %v3028, %v646
        %3030 = vst [vmem:[%s638] sm:$0xff] %v3029
        %3031 = vst [vmem:[%s638 + $0x8] sm:$0xff] %v3022
        %3032 = vst [vmem:[%s638 + $0x10] sm:$0xff] %v3023
        %s3033 = sand.u32 %s317, 1
        %s3034 = scalar_lea.sflag [#allocation8], %s3033
        %s3035 = sand.u32 %s317, 1
        %s3036 = smul.addr %s3035, 24
        %s3037 = scalar_lea.vmem [#allocation26], %s3036
        // Predicated region
        $region117: #{tpu_custom_call.1} parent=67 // pred_check
          %p3038 = pneg %p327
        $region118: #{tpu_custom_call.1} parent=67 // pred_check_branch
          %3040 = sbr.rel (%p3038) target = $region120
        $region119: #{tpu_custom_call.1} parent=67 // pred_region
          %s3042 = ssub.s32 384, 384
          %3043 = vsyncadd %s3034, %s3042
          %s3044 = smul.addr %s42, 3
          %s3045 = smul.addr %s3044, 128
          %s3046 = scalar_lea.hbm %s13, %s3045
          %s3047 = sshll.u32 %s3037, 4
          %s3048 = int_to_ptr.vmem [resolvable:$true] %s3047
          %3053 = dma.vmem_to_hbm [thread:$0]  %s3048, 384, %s3046, %s3034, 128, 128, 8
        $region120: #{tpu_custom_call.1} parent=67 // pred_fallthru
          _
      $region68: #{tpu_custom_call.1} parent=5 // pred_fallthru
        _
      %p3054 = scmp.le.s32.totalorder 2, %s37
      // Predicated region
      $region121: #{tpu_custom_call.1} parent=5 // pred_check
        %p3055 = pneg %p3054
      $region122: #{tpu_custom_call.1} parent=5 // pred_check_branch
        %3057 = sbr.rel (%p3055) target = $region124
      $region123: #{tpu_custom_call.1} parent=5 // pred_region
        %s3058 = ssub.s32 %s37, 2
        // Predicated region
        $region125: #{tpu_custom_call.1} parent=123 // pred_check
          %p3059 = pneg %p333
        $region126: #{tpu_custom_call.1} parent=123 // pred_check_branch
          %3061 = sbr.rel (%p3059) target = $region128
        $region127: #{tpu_custom_call.1} parent=123 // pred_region
          %s3062 = sand.u32 %s318, 1
          %s3063 = scalar_lea.sflag [#allocation8], %s3062
          %s3064 = sand.u32 %s318, 1
          %s3065 = smul.addr %s3064, 24
          %s3066 = scalar_lea.vmem [#allocation26], %s3065
          %3067 = dma.done %s3063, 384
        $region128: #{tpu_custom_call.1} parent=123 // pred_fallthru
          _
      $region124: #{tpu_custom_call.1} parent=5 // pred_fallthru
        _
    $region6: #{tpu_custom_call.1} parent=1 // loop_footer
      %s41 = sadd.s32 1, %s37
    $region7: #{tpu_custom_call.1} parent=1 // loop_footer_branch
      %36 = sbr.rel target = $region3
    $region8: #{tpu_custom_call.1} parent=1 // loop_exit
      _
    %3068 = vsyncpa [#allocation7], 1
    %s3069 = scalar_lea.sflag [#allocation7], 1
    %3070 = vsyncpa %s3069, 1
    %3071 = vsyncpa [#allocation10], 1
    %s3072 = scalar_lea.sflag [#allocation10], 1
    %3073 = vsyncpa %s3072, 1
    %3074 = vsyncpa [#allocation13], 1
    %3075 = vsyncpa [#allocation16], 1
    %3076 = vsyncpa [#allocation19], 1
    %3077 = vsyncpa [#allocation22], 1
    %3078 = vsyncpa [#allocation25], 1
    %3079 = vsyncpa [#allocation8], 1
    %s3080 = scalar_lea.sflag [#allocation8], 1
    %3081 = vsyncpa %s3080, 1

</llo_original>
